<compile_context>
chip_gen: v6e
topology: v6e:2x2x1
jax: 0.10.0
libtpu: 0.0.40
codegen_flags: <defaults>
</compile_context>

<pallas_src>
import jax
import jax.numpy as jnp
from jax.experimental import pallas as pl
from jax.experimental.pallas import tpu as pltpu

HIDDEN = 32                      # hidden_channels
MAX_TILE_N = 1024                # max fine-node rows per grid step (mult. of 8)
ONEHOT_BUDGET_BYTES = 2 << 20    # cap on the in-kernel one-hot intermediate


def _round_up(a, b):
    return (a + b - 1) // b * b


def _interp_kernel(xs_ref, idx_ref, d_ref, x_ref,
                   w1a_ref, w1b_ref, w1c_ref, b1_ref, w2_ref, b2_ref,
                   out_ref):
    xs = xs_ref[...].astype(jnp.float32)        # fine-scale feats   [T, H]
    idx = idx_ref[...]                          # fine->coarse idx   [T, 1] int32
    d = d_ref[...].astype(jnp.float32)          # distances          [T, 1]
    x_full = x_ref[...].astype(jnp.float32)     # coarse table       [Nc, H] (resident)

    t = xs.shape[0]
    n_c = x_full.shape[0]

    # Fused gather: one-hot(idx) @ coarse_table on the MXU.
    # Padded fine rows carry index 0 (a valid row) and padded coarse rows are
    # never selected (all indices < n_coarse), so no masking is needed.
    coarse_ids = jax.lax.broadcasted_iota(jnp.int32, (t, n_c), 1)
    onehot = (idx == coarse_ids).astype(jnp.float32)                    # [T, Nc]
    xg = jnp.dot(onehot, x_full, preferred_element_type=jnp.float32)    # [T, H]

    # up_node_model MLP (concat expressed as split matmuls)
    h = (jnp.dot(xg, w1a_ref[...], preferred_element_type=jnp.float32)
         + jnp.dot(xs, w1b_ref[...], preferred_element_type=jnp.float32)
         + d * w1c_ref[...]                      # (T,1) * (1,H) broadcast
         + b1_ref[...])
    h = jnp.maximum(h, 0.0)
    up = jnp.dot(h, w2_ref[...], preferred_element_type=jnp.float32) + b2_ref[...]

    # residual connection (residual_connection == 1)
    out_ref[...] = (xs + up).astype(out_ref.dtype)


def interpolate_layer(x, x_scale, fine2coarse_index, distances, params,
                      pool_indices=None):
    """Pallas implementation of Interpolate_layer.forward."""
    # ---- glue: index selection / truncation, exactly as in the PyTorch code ----
    if pool_indices is not None:
        fine2coarse_index = fine2coarse_index[pool_indices]
        distances = distances[pool_indices]
    n_fine = x_scale.shape[0]
    if distances.shape[0] != n_fine:
        distances = distances[:n_fine, :]
        fine2coarse_index = fine2coarse_index[:n_fine]

    w1a, w1b, w1c, b1, w2, b2 = params
    hidden = x_scale.shape[1]
    n_coarse = x.shape[0]

    # Pad coarse-table rows to a multiple of 8 sublanes; padded rows are never
    # selected since all indices < n_coarse.
    n_c_pad = max(8, _round_up(n_coarse, 8))
    x_p = jnp.pad(x, ((0, n_c_pad - n_coarse), (0, 0))) if n_c_pad != n_coarse else x

    # ---- tile sizing: as large as possible, bounded by the one-hot footprint ----
    max_t_onehot = max(8, (ONEHOT_BUDGET_BYTES // (n_c_pad * 4)) // 8 * 8)
    tile_n = min(MAX_TILE_N, _round_up(n_fine, 8), max_t_onehot)

    # ---- remainder padding (no rows dropped) ----
    n_pad = _round_up(n_fine, tile_n)
    pad = n_pad - n_fine

    idx2d = fine2coarse_index.astype(jnp.int32).reshape(n_fine, 1)
    if pad:
        x_scale_p = jnp.pad(x_scale, ((0, pad), (0, 0)))
        idx2d = jnp.pad(idx2d, ((0, pad), (0, 0)))          # pads with 0 (valid row)
        dist_p = jnp.pad(distances, ((0, pad), (0, 0)))
    else:
        x_scale_p, dist_p = x_scale, distances

    grid = (n_pad // tile_n,)

    out = pl.pallas_call(
        _interp_kernel,
        out_shape=jax.ShapeDtypeStruct((n_pad, hidden), x_scale.dtype),
        grid=grid,
        in_specs=[
            pl.BlockSpec((tile_n, hidden),   lambda i: (i, 0)),   # x_scale tile
            pl.BlockSpec((tile_n, 1),        lambda i: (i, 0)),   # fine2coarse idx tile
            pl.BlockSpec((tile_n, 1),        lambda i: (i, 0)),   # distances tile
            pl.BlockSpec((n_c_pad, hidden),  lambda i: (0, 0)),   # coarse table (resident)
            pl.BlockSpec((hidden, hidden),   lambda i: (0, 0)),   # W1a
            pl.BlockSpec((hidden, hidden),   lambda i: (0, 0)),   # W1b
            pl.BlockSpec((1, hidden),        lambda i: (0, 0)),   # W1c
            pl.BlockSpec((1, hidden),        lambda i: (0, 0)),   # b1
            pl.BlockSpec((hidden, hidden),   lambda i: (0, 0)),   # W2
            pl.BlockSpec((1, hidden),        lambda i: (0, 0)),   # b2
        ],
        out_specs=pl.BlockSpec((tile_n, hidden), lambda i: (i, 0)),
        compiler_params=pltpu.CompilerParams(
            dimension_semantics=("parallel",)),                   # megacore shard
    )(x_scale_p, idx2d, dist_p, x_p, w1a, w1b, w1c, b1, w2, b2)

    return out[:n_fine] if pad else out


def _reference(x, x_scale, fine2coarse_index, distances, params):
    """Pure-JAX reference of the same forward pass."""
    w1a, w1b, w1c, b1, w2, b2 = params
    xg = x[fine2coarse_index]
    h = xg @ w1a + x_scale @ w1b + distances * w1c + b1
    h = jnp.maximum(h, 0.0)
    up = h @ w2 + b2
    return x_scale + up


def _make_params(key, scale=0.1):
    k5, k6, k7, k8, k9, k10 = jax.random.split(key, 6)
    return (
        scale * jax.random.normal(k5, (HIDDEN, HIDDEN), dtype=jnp.float32),  # W1a
        scale * jax.random.normal(k6, (HIDDEN, HIDDEN), dtype=jnp.float32),  # W1b
        scale * jax.random.normal(k7, (1, HIDDEN), dtype=jnp.float32),       # W1c
        scale * jax.random.normal(k8, (1, HIDDEN), dtype=jnp.float32),       # b1
        scale * jax.random.normal(k9, (HIDDEN, HIDDEN), dtype=jnp.float32),  # W2
        scale * jax.random.normal(k10, (1, HIDDEN), dtype=jnp.float32),      # b2
    )


def _run_case(key, n_coarse, n_fine, params):
    k1, k2, k3, k4 = jax.random.split(key, 4)
    x = jax.random.normal(k1, (n_coarse, HIDDEN), dtype=jnp.float32)
    x_scale = jax.random.normal(k2, (n_fine, HIDDEN), dtype=jnp.float32)
    fine2coarse_index = jax.random.randint(k3, (n_fine,), 0, n_coarse,
                                           dtype=jnp.int32)
    distances = jax.random.uniform(k4, (n_fine, 1), dtype=jnp.float32)

    out = interpolate_layer(x, x_scale, fine2coarse_index, distances, params)
    out = jax.block_until_ready(out)

    ref = _reference(x, x_scale, fine2coarse_index, distances, params)
    assert out.shape == (n_fine, HIDDEN)
    assert jnp.allclose(out, ref, atol=1e-4, rtol=1e-4)


if __name__ == "__main__":
    key = jax.random.PRNGKey(0)
    kp, ka, kb = jax.random.split(key, 3)
    params = _make_params(kp)

    # Case 1: sizes that are NOT multiples of the tile — exercises remainder
    # padding and the multi-tile grid.
    _run_case(ka, n_coarse=37, n_fine=2500, params=params)

    # Case 2: tiny sizes — exercises the single-tile path.
    _run_case(kb, n_coarse=8, n_fine=16, params=params)

    print("KERNEL_OK")
</pallas_src>

<mosaic_0001>
module attributes {stable_mosaic.version = 11 : i64} {
  func.func @_interp_kernel(%arg0: i32, %arg1: memref<1024x32xf32, #tpu.memory_space<vmem>>, %arg2: memref<1024x1xi32, #tpu.memory_space<vmem>>, %arg3: memref<1024x1xf32, #tpu.memory_space<vmem>>, %arg4: memref<40x32xf32, #tpu.memory_space<vmem>>, %arg5: memref<32x32xf32, #tpu.memory_space<vmem>>, %arg6: memref<32x32xf32, #tpu.memory_space<vmem>>, %arg7: memref<1x32xf32, #tpu.memory_space<vmem>>, %arg8: memref<1x32xf32, #tpu.memory_space<vmem>>, %arg9: memref<32x32xf32, #tpu.memory_space<vmem>>, %arg10: memref<1x32xf32, #tpu.memory_space<vmem>>, %arg11: memref<1024x32xf32, #tpu.memory_space<vmem>>) attributes {dimension_semantics = [#tpu.dimension_semantics<parallel>], iteration_bounds = array<i64: 3>, scalar_prefetch = 0 : i64, scratch_operands = 0 : i64, tpu.core_type = #tpu.core_type<tc>, window_params = [{transform_indices = @transform_0, window_bounds = array<i64: 1024, 32>}, {transform_indices = @transform_1, window_bounds = array<i64: 1024, 1>}, {transform_indices = @transform_2, window_bounds = array<i64: 1024, 1>}, {pipeline_mode = #tpu.pipeline_mode<synchronous>, transform_indices = @transform_3, window_bounds = array<i64: 40, 32>}, {pipeline_mode = #tpu.pipeline_mode<synchronous>, transform_indices = @transform_4, window_bounds = array<i64: 32, 32>}, {pipeline_mode = #tpu.pipeline_mode<synchronous>, transform_indices = @transform_5, window_bounds = array<i64: 32, 32>}, {pipeline_mode = #tpu.pipeline_mode<synchronous>, transform_indices = @transform_6, window_bounds = array<i64: 1, 32>}, {pipeline_mode = #tpu.pipeline_mode<synchronous>, transform_indices = @transform_7, window_bounds = array<i64: 1, 32>}, {pipeline_mode = #tpu.pipeline_mode<synchronous>, transform_indices = @transform_8, window_bounds = array<i64: 32, 32>}, {pipeline_mode = #tpu.pipeline_mode<synchronous>, transform_indices = @transform_9, window_bounds = array<i64: 1, 32>}, {transform_indices = @transform_10, window_bounds = array<i64: 1024, 32>}]} {
    %c0 = arith.constant 0 : index
    %c0_0 = arith.constant 0 : index
    %0 = vector.load %arg1[%c0, %c0_0] : memref<1024x32xf32, #tpu.memory_space<vmem>>, vector<1024x32xf32>
    %c0_1 = arith.constant 0 : index
    %c0_2 = arith.constant 0 : index
    %1 = vector.load %arg2[%c0_1, %c0_2] : memref<1024x1xi32, #tpu.memory_space<vmem>>, vector<1024x1xi32>
    %c0_3 = arith.constant 0 : index
    %c0_4 = arith.constant 0 : index
    %2 = vector.load %arg3[%c0_3, %c0_4] : memref<1024x1xf32, #tpu.memory_space<vmem>>, vector<1024x1xf32>
    %c0_5 = arith.constant 0 : index
    %c0_6 = arith.constant 0 : index
    %3 = vector.load %arg4[%c0_5, %c0_6] : memref<40x32xf32, #tpu.memory_space<vmem>>, vector<40x32xf32>
    %4 = tpu.iota {dimensions = array<i32: 1>} : vector<1024x40xi32>
    %5 = vector.broadcast %1 : vector<1024x1xi32> to vector<1024x40xi32>
    %6 = arith.cmpi eq, %5, %4 : vector<1024x40xi32>
    %7 = arith.extui %6 : vector<1024x40xi1> to vector<1024x40xi32>
    %8 = arith.sitofp %7 : vector<1024x40xi32> to vector<1024x40xf32>
    %cst = arith.constant dense<0.000000e+00> : vector<1024x32xf32>
    %9 = tpu.matmul %8, %3, %cst {dimension_numbers = #tpu.dot_dimension_numbers<[1], [0], [0], [1], [0, 0, 1, 1], [], []>} : vector<1024x40xf32>, vector<40x32xf32>, vector<1024x32xf32> -> vector<1024x32xf32>
    %c0_7 = arith.constant 0 : index
    %c0_8 = arith.constant 0 : index
    %10 = vector.load %arg5[%c0_7, %c0_8] : memref<32x32xf32, #tpu.memory_space<vmem>>, vector<32x32xf32>
    %cst_9 = arith.constant dense<0.000000e+00> : vector<1024x32xf32>
    %11 = tpu.matmul %9, %10, %cst_9 {dimension_numbers = #tpu.dot_dimension_numbers<[1], [0], [0], [1], [0, 0, 1, 1], [], []>} : vector<1024x32xf32>, vector<32x32xf32>, vector<1024x32xf32> -> vector<1024x32xf32>
    %c0_10 = arith.constant 0 : index
    %c0_11 = arith.constant 0 : index
    %12 = vector.load %arg6[%c0_10, %c0_11] : memref<32x32xf32, #tpu.memory_space<vmem>>, vector<32x32xf32>
    %cst_12 = arith.constant dense<0.000000e+00> : vector<1024x32xf32>
    %13 = tpu.matmul %0, %12, %cst_12 {dimension_numbers = #tpu.dot_dimension_numbers<[1], [0], [0], [1], [0, 0, 1, 1], [], []>} : vector<1024x32xf32>, vector<32x32xf32>, vector<1024x32xf32> -> vector<1024x32xf32>
    %14 = arith.addf %11, %13 : vector<1024x32xf32>
    %c0_13 = arith.constant 0 : index
    %c0_14 = arith.constant 0 : index
    %15 = vector.load %arg7[%c0_13, %c0_14] : memref<1x32xf32, #tpu.memory_space<vmem>>, vector<1x32xf32>
    %16 = vector.broadcast %2 : vector<1024x1xf32> to vector<1024x32xf32>
    %17 = vector.broadcast %15 : vector<1x32xf32> to vector<1024x32xf32>
    %18 = arith.mulf %16, %17 : vector<1024x32xf32>
    %19 = arith.addf %14, %18 : vector<1024x32xf32>
    %c0_15 = arith.constant 0 : index
    %c0_16 = arith.constant 0 : index
    %20 = vector.load %arg8[%c0_15, %c0_16] : memref<1x32xf32, #tpu.memory_space<vmem>>, vector<1x32xf32>
    %21 = vector.broadcast %20 : vector<1x32xf32> to vector<1024x32xf32>
    %22 = arith.addf %19, %21 : vector<1024x32xf32>
    %cst_17 = arith.constant 0.000000e+00 : f32
    %23 = vector.broadcast %cst_17 : f32 to vector<1024x32xf32>
    %24 = arith.maximumf %22, %23 : vector<1024x32xf32>
    %c0_18 = arith.constant 0 : index
    %c0_19 = arith.constant 0 : index
    %25 = vector.load %arg9[%c0_18, %c0_19] : memref<32x32xf32, #tpu.memory_space<vmem>>, vector<32x32xf32>
    %cst_20 = arith.constant dense<0.000000e+00> : vector<1024x32xf32>
    %26 = tpu.matmul %24, %25, %cst_20 {dimension_numbers = #tpu.dot_dimension_numbers<[1], [0], [0], [1], [0, 0, 1, 1], [], []>} : vector<1024x32xf32>, vector<32x32xf32>, vector<1024x32xf32> -> vector<1024x32xf32>
    %c0_21 = arith.constant 0 : index
    %c0_22 = arith.constant 0 : index
    %27 = vector.load %arg10[%c0_21, %c0_22] : memref<1x32xf32, #tpu.memory_space<vmem>>, vector<1x32xf32>
    %28 = vector.broadcast %27 : vector<1x32xf32> to vector<1024x32xf32>
    %29 = arith.addf %26, %28 : vector<1024x32xf32>
    %30 = arith.addf %0, %29 : vector<1024x32xf32>
    %c0_23 = arith.constant 0 : index
    %c0_24 = arith.constant 0 : index
    %31 = vector.load %arg11[%c0_23, %c0_24] : memref<1024x32xf32, #tpu.memory_space<vmem>>, vector<1024x32xf32>
    tpu.vector_store %arg11[%c0_23, %c0_24], %30 {strides = array<i32>} : memref<1024x32xf32, #tpu.memory_space<vmem>>, vector<1024x32xf32>,
    return
  }
  func.func @transform_0(%arg0: i32) -> (i32, i32) {
    %c0_i32 = arith.constant 0 : i32
    %c0_i32_0 = arith.constant 0 : i32
    return %arg0, %c0_i32 : i32, i32
  }
  func.func @transform_1(%arg0: i32) -> (i32, i32) {
    %c0_i32 = arith.constant 0 : i32
    %c0_i32_0 = arith.constant 0 : i32
    return %arg0, %c0_i32 : i32, i32
  }
  func.func @transform_2(%arg0: i32) -> (i32, i32) {
    %c0_i32 = arith.constant 0 : i32
    %c0_i32_0 = arith.constant 0 : i32
    return %arg0, %c0_i32 : i32, i32
  }
  func.func @transform_3(%arg0: i32) -> (i32, i32) {
    %c0_i32 = arith.constant 0 : i32
    %c0_i32_0 = arith.constant 0 : i32
    %c0_i32_1 = arith.constant 0 : i32
    return %c0_i32, %c0_i32_0 : i32, i32
  }
  func.func @transform_4(%arg0: i32) -> (i32, i32) {
    %c0_i32 = arith.constant 0 : i32
    %c0_i32_0 = arith.constant 0 : i32
    %c0_i32_1 = arith.constant 0 : i32
    return %c0_i32, %c0_i32_0 : i32, i32
  }
  func.func @transform_5(%arg0: i32) -> (i32, i32) {
    %c0_i32 = arith.constant 0 : i32
    %c0_i32_0 = arith.constant 0 : i32
    %c0_i32_1 = arith.constant 0 : i32
    return %c0_i32, %c0_i32_0 : i32, i32
  }
  func.func @transform_6(%arg0: i32) -> (i32, i32) {
    %c0_i32 = arith.constant 0 : i32
    %c0_i32_0 = arith.constant 0 : i32
    %c0_i32_1 = arith.constant 0 : i32
    return %c0_i32, %c0_i32_0 : i32, i32
  }
  func.func @transform_7(%arg0: i32) -> (i32, i32) {
    %c0_i32 = arith.constant 0 : i32
    %c0_i32_0 = arith.constant 0 : i32
    %c0_i32_1 = arith.constant 0 : i32
    return %c0_i32, %c0_i32_0 : i32, i32
  }
  func.func @transform_8(%arg0: i32) -> (i32, i32) {
    %c0_i32 = arith.constant 0 : i32
    %c0_i32_0 = arith.constant 0 : i32
    %c0_i32_1 = arith.constant 0 : i32
    return %c0_i32, %c0_i32_0 : i32, i32
  }
  func.func @transform_9(%arg0: i32) -> (i32, i32) {
    %c0_i32 = arith.constant 0 : i32
    %c0_i32_0 = arith.constant 0 : i32
    %c0_i32_1 = arith.constant 0 : i32
    return %c0_i32, %c0_i32_0 : i32, i32
  }
  func.func @transform_10(%arg0: i32) -> (i32, i32) {
    %c0_i32 = arith.constant 0 : i32
    %c0_i32_0 = arith.constant 0 : i32
    return %arg0, %c0_i32 : i32, i32
  }
}

</mosaic_0001>

<llo_original>
// kernel: tpu_custom_call.1
$region0: #{tpu_custom_call.1}
  #allocation0 [shape = 'u32[]', space=smem, size = 0x4, offset = 0x4, fixed_abs, tag = 'smem constant byte address 0x4 - core index']
  #allocation1 [shape = 'u32[144,128]{1,0:T(1,128)}', space=vmem, size = 0x12000, scoped, tag = 'internal scratch']
  %s0 = inlined_call_operand.vmem [shape: f32[3072,32], index: 0, kind: input, shape index: {}]
  %s1 = inlined_call_operand.vmem [shape: s32[3072,1], index: 1, kind: input, shape index: {}]
  %s2 = inlined_call_operand.vmem [shape: f32[3072,1], index: 2, kind: input, shape index: {}]
  %s3 = inlined_call_operand.vmem [shape: f32[40,32], index: 3, kind: input, shape index: {}]
  %s4 = inlined_call_operand.vmem [shape: f32[32,32], index: 4, kind: input, shape index: {}]
  %s5 = inlined_call_operand.vmem [shape: f32[32,32], index: 5, kind: input, shape index: {}]
  %s6 = inlined_call_operand.vmem [shape: f32[1,32], index: 6, kind: input, shape index: {}]
  %s7 = inlined_call_operand.vmem [shape: f32[1,32], index: 7, kind: input, shape index: {}]
  %s8 = inlined_call_operand.vmem [shape: f32[32,32], index: 8, kind: input, shape index: {}]
  %s9 = inlined_call_operand.vmem [shape: f32[1,32], index: 9, kind: input, shape index: {}]
  %s10 = inlined_call_operand.vmem [shape: f32[3072,32], index: 10, kind: output, shape index: {}]
  %s11 = sld [smem:[#allocation0]]
  $region73: #{tpu_custom_call.1} parent=0
    _
  %s13 = ssub.s32 1, %s11
  %s14 = scalar_select 0, %s13, %s11
  loop: start=0, step=1, limit=5
  $region2: #{tpu_custom_call.1} parent=0 // loop_pre_header
    _
  $region3: #{tpu_custom_call.1} parent=0 // loop_header
    %s16 = sphi 0, %s20
    %p17 = scmp.ge.s32.totalorder %s16, 5
    %s26 = sphi 0, %s28
    %s29 = sphi 0, %s26
    %s30 = sphi 0, %s29
    %s46 = sphi 0, %s30
    %s52 = sphi 0, %s54
    %s55 = sphi 0, %s52
    %s56 = sphi 0, %s55
    %s72 = sphi 0, %s56
    %s78 = sphi 0, %s80
    %s81 = sphi 0, %s78
    %s82 = sphi 0, %s81
    %s98 = sphi 0, %s82
    %s102 = sphi 0, %s102
    %s104 = sphi 0, %s102
    %s105 = sphi 0, %s104
    %s119 = sphi 0, %s105
    %s123 = sphi 0, %s123
    %s125 = sphi 0, %s123
    %s126 = sphi 0, %s125
    %s140 = sphi 0, %s126
    %s144 = sphi 0, %s144
    %s146 = sphi 0, %s144
    %s147 = sphi 0, %s146
    %s161 = sphi 0, %s147
    %s165 = sphi 0, %s165
    %s167 = sphi 0, %s165
    %s168 = sphi 0, %s167
    %s182 = sphi 0, %s168
    %s186 = sphi 0, %s186
    %s188 = sphi 0, %s186
    %s189 = sphi 0, %s188
    %s203 = sphi 0, %s189
    %s207 = sphi 0, %s207
    %s209 = sphi 0, %s207
    %s210 = sphi 0, %s209
    %s224 = sphi 0, %s210
    %s228 = sphi 0, %s228
    %s230 = sphi 0, %s228
    %s231 = sphi 0, %s230
    %s245 = sphi 0, %s231
    %s251 = sphi 0, %s253
    %s254 = sphi 0, %s251
    %s255 = sphi 0, %s254
    %s271 = sphi 0, %s255
  $region4: #{tpu_custom_call.1} parent=0 // loop_header_branch
    %19 = sbr.rel (%p17) target = $region8
  $region5: #{tpu_custom_call.1} parent=0 // loop_body
    %s21 = ssub.s32 %s16, 1
    %s22 = ssub.s32 %s16, 2
    %s23 = sadd.s32 %s16, 1
    %s24 = ssub.s32 %s16, %s23
    %p25 = scmp.eq.s32.totalorder %s24, 0
    %s27 = sadd.s32 %s26, 1
    %s28 = scalar_select %p25, %s26, %s27
    %p31 = pneg %p25
    %p32 = scmp.eq.s32.totalorder %s16, 2
    %p33 = por %p31, %p32
    %p34 = scmp.ne.s32.totalorder %s26, %s29
    %p35 = scmp.eq.s32.totalorder %s16, 0
    %p36 = por %p34, %p35
    %p37 = scmp.ne.s32.totalorder %s26, %s29
    %p38 = scmp.eq.s32.totalorder %s21, 2
    %p39 = por %p37, %p38
    %p40 = scmp.ne.s32.totalorder %s29, %s30
    %p41 = scmp.eq.s32.totalorder %s21, 0
    %p42 = por %p40, %p41
    %p43 = scmp.ne.s32.totalorder %s29, %s30
    %p44 = scmp.eq.s32.totalorder %s22, 2
    %p45 = por %p43, %p44
    %p47 = scmp.ne.s32.totalorder %s30, %s46
    %p48 = scmp.eq.s32.totalorder %s22, 0
    %p49 = por %p47, %p48
    %s50 = ssub.s32 %s16, %s23
    %p51 = scmp.eq.s32.totalorder %s50, 0
    %s53 = sadd.s32 %s52, 1
    %s54 = scalar_select %p51, %s52, %s53
    %p57 = pneg %p51
    %p58 = scmp.eq.s32.totalorder %s16, 2
    %p59 = por %p57, %p58
    %p60 = scmp.ne.s32.totalorder %s52, %s55
    %p61 = scmp.eq.s32.totalorder %s16, 0
    %p62 = por %p60, %p61
    %p63 = scmp.ne.s32.totalorder %s52, %s55
    %p64 = scmp.eq.s32.totalorder %s21, 2
    %p65 = por %p63, %p64
    %p66 = scmp.ne.s32.totalorder %s55, %s56
    %p67 = scmp.eq.s32.totalorder %s21, 0
    %p68 = por %p66, %p67
    %p69 = scmp.ne.s32.totalorder %s55, %s56
    %p70 = scmp.eq.s32.totalorder %s22, 2
    %p71 = por %p69, %p70
    %p73 = scmp.ne.s32.totalorder %s56, %s72
    %p74 = scmp.eq.s32.totalorder %s22, 0
    %p75 = por %p73, %p74
    %s76 = ssub.s32 %s16, %s23
    %p77 = scmp.eq.s32.totalorder %s76, 0
    %s79 = sadd.s32 %s78, 1
    %s80 = scalar_select %p77, %s78, %s79
    %p83 = pneg %p77
    %p84 = scmp.eq.s32.totalorder %s16, 2
    %p85 = por %p83, %p84
    %p86 = scmp.ne.s32.totalorder %s78, %s81
    %p87 = scmp.eq.s32.totalorder %s16, 0
    %p88 = por %p86, %p87
    %p89 = scmp.ne.s32.totalorder %s78, %s81
    %p90 = scmp.eq.s32.totalorder %s21, 2
    %p91 = por %p89, %p90
    %p92 = scmp.ne.s32.totalorder %s81, %s82
    %p93 = scmp.eq.s32.totalorder %s21, 0
    %p94 = por %p92, %p93
    %p95 = scmp.ne.s32.totalorder %s81, %s82
    %p96 = scmp.eq.s32.totalorder %s22, 2
    %p97 = por %p95, %p96
    %p99 = scmp.ne.s32.totalorder %s82, %s98
    %p100 = scmp.eq.s32.totalorder %s22, 0
    %p101 = por %p99, %p100
    %s103 = sadd.s32 %s102, 1
    %p106 = scmp.eq.s32.totalorder %s16, 2
    %p107 = scmp.ne.s32.totalorder %s102, %s104
    %p108 = scmp.eq.s32.totalorder %s16, 0
    %p109 = por %p107, %p108
    %p110 = scmp.ne.s32.totalorder %s102, %s104
    %p111 = scmp.eq.s32.totalorder %s21, 2
    %p112 = por %p110, %p111
    %p113 = scmp.ne.s32.totalorder %s104, %s105
    %p114 = scmp.eq.s32.totalorder %s21, 0
    %p115 = por %p113, %p114
    %p116 = scmp.ne.s32.totalorder %s104, %s105
    %p117 = scmp.eq.s32.totalorder %s22, 2
    %p118 = por %p116, %p117
    %p120 = scmp.ne.s32.totalorder %s105, %s119
    %p121 = scmp.eq.s32.totalorder %s22, 0
    %p122 = por %p120, %p121
    %s124 = sadd.s32 %s123, 1
    %p127 = scmp.eq.s32.totalorder %s16, 2
    %p128 = scmp.ne.s32.totalorder %s123, %s125
    %p129 = scmp.eq.s32.totalorder %s16, 0
    %p130 = por %p128, %p129
    %p131 = scmp.ne.s32.totalorder %s123, %s125
    %p132 = scmp.eq.s32.totalorder %s21, 2
    %p133 = por %p131, %p132
    %p134 = scmp.ne.s32.totalorder %s125, %s126
    %p135 = scmp.eq.s32.totalorder %s21, 0
    %p136 = por %p134, %p135
    %p137 = scmp.ne.s32.totalorder %s125, %s126
    %p138 = scmp.eq.s32.totalorder %s22, 2
    %p139 = por %p137, %p138
    %p141 = scmp.ne.s32.totalorder %s126, %s140
    %p142 = scmp.eq.s32.totalorder %s22, 0
    %p143 = por %p141, %p142
    %s145 = sadd.s32 %s144, 1
    %p148 = scmp.eq.s32.totalorder %s16, 2
    %p149 = scmp.ne.s32.totalorder %s144, %s146
    %p150 = scmp.eq.s32.totalorder %s16, 0
    %p151 = por %p149, %p150
    %p152 = scmp.ne.s32.totalorder %s144, %s146
    %p153 = scmp.eq.s32.totalorder %s21, 2
    %p154 = por %p152, %p153
    %p155 = scmp.ne.s32.totalorder %s146, %s147
    %p156 = scmp.eq.s32.totalorder %s21, 0
    %p157 = por %p155, %p156
    %p158 = scmp.ne.s32.totalorder %s146, %s147
    %p159 = scmp.eq.s32.totalorder %s22, 2
    %p160 = por %p158, %p159
    %p162 = scmp.ne.s32.totalorder %s147, %s161
    %p163 = scmp.eq.s32.totalorder %s22, 0
    %p164 = por %p162, %p163
    %s166 = sadd.s32 %s165, 1
    %p169 = scmp.eq.s32.totalorder %s16, 2
    %p170 = scmp.ne.s32.totalorder %s165, %s167
    %p171 = scmp.eq.s32.totalorder %s16, 0
    %p172 = por %p170, %p171
    %p173 = scmp.ne.s32.totalorder %s165, %s167
    %p174 = scmp.eq.s32.totalorder %s21, 2
    %p175 = por %p173, %p174
    %p176 = scmp.ne.s32.totalorder %s167, %s168
    %p177 = scmp.eq.s32.totalorder %s21, 0
    %p178 = por %p176, %p177
    %p179 = scmp.ne.s32.totalorder %s167, %s168
    %p180 = scmp.eq.s32.totalorder %s22, 2
    %p181 = por %p179, %p180
    %p183 = scmp.ne.s32.totalorder %s168, %s182
    %p184 = scmp.eq.s32.totalorder %s22, 0
    %p185 = por %p183, %p184
    %s187 = sadd.s32 %s186, 1
    %p190 = scmp.eq.s32.totalorder %s16, 2
    %p191 = scmp.ne.s32.totalorder %s186, %s188
    %p192 = scmp.eq.s32.totalorder %s16, 0
    %p193 = por %p191, %p192
    %p194 = scmp.ne.s32.totalorder %s186, %s188
    %p195 = scmp.eq.s32.totalorder %s21, 2
    %p196 = por %p194, %p195
    %p197 = scmp.ne.s32.totalorder %s188, %s189
    %p198 = scmp.eq.s32.totalorder %s21, 0
    %p199 = por %p197, %p198
    %p200 = scmp.ne.s32.totalorder %s188, %s189
    %p201 = scmp.eq.s32.totalorder %s22, 2
    %p202 = por %p200, %p201
    %p204 = scmp.ne.s32.totalorder %s189, %s203
    %p205 = scmp.eq.s32.totalorder %s22, 0
    %p206 = por %p204, %p205
    %s208 = sadd.s32 %s207, 1
    %p211 = scmp.eq.s32.totalorder %s16, 2
    %p212 = scmp.ne.s32.totalorder %s207, %s209
    %p213 = scmp.eq.s32.totalorder %s16, 0
    %p214 = por %p212, %p213
    %p215 = scmp.ne.s32.totalorder %s207, %s209
    %p216 = scmp.eq.s32.totalorder %s21, 2
    %p217 = por %p215, %p216
    %p218 = scmp.ne.s32.totalorder %s209, %s210
    %p219 = scmp.eq.s32.totalorder %s21, 0
    %p220 = por %p218, %p219
    %p221 = scmp.ne.s32.totalorder %s209, %s210
    %p222 = scmp.eq.s32.totalorder %s22, 2
    %p223 = por %p221, %p222
    %p225 = scmp.ne.s32.totalorder %s210, %s224
    %p226 = scmp.eq.s32.totalorder %s22, 0
    %p227 = por %p225, %p226
    %s229 = sadd.s32 %s228, 1
    %p232 = scmp.eq.s32.totalorder %s16, 2
    %p233 = scmp.ne.s32.totalorder %s228, %s230
    %p234 = scmp.eq.s32.totalorder %s16, 0
    %p235 = por %p233, %p234
    %p236 = scmp.ne.s32.totalorder %s228, %s230
    %p237 = scmp.eq.s32.totalorder %s21, 2
    %p238 = por %p236, %p237
    %p239 = scmp.ne.s32.totalorder %s230, %s231
    %p240 = scmp.eq.s32.totalorder %s21, 0
    %p241 = por %p239, %p240
    %p242 = scmp.ne.s32.totalorder %s230, %s231
    %p243 = scmp.eq.s32.totalorder %s22, 2
    %p244 = por %p242, %p243
    %p246 = scmp.ne.s32.totalorder %s231, %s245
    %p247 = scmp.eq.s32.totalorder %s22, 0
    %p248 = por %p246, %p247
    %s249 = ssub.s32 %s16, %s23
    %p250 = scmp.eq.s32.totalorder %s249, 0
    %s252 = sadd.s32 %s251, 1
    %s253 = scalar_select %p250, %s251, %s252
    %p256 = pneg %p250
    %p257 = scmp.eq.s32.totalorder %s16, 2
    %p258 = por %p256, %p257
    %p259 = scmp.ne.s32.totalorder %s251, %s254
    %p260 = scmp.eq.s32.totalorder %s16, 0
    %p261 = por %p259, %p260
    %p262 = scmp.ne.s32.totalorder %s251, %s254
    %p263 = scmp.eq.s32.totalorder %s21, 2
    %p264 = por %p262, %p263
    %p265 = scmp.ne.s32.totalorder %s254, %s255
    %p266 = scmp.eq.s32.totalorder %s21, 0
    %p267 = por %p265, %p266
    %p268 = scmp.ne.s32.totalorder %s254, %s255
    %p269 = scmp.eq.s32.totalorder %s22, 2
    %p270 = por %p268, %p269
    %p272 = scmp.ne.s32.totalorder %s255, %s271
    %p273 = scmp.eq.s32.totalorder %s22, 0
    %p274 = por %p272, %p273
    %p275 = scmp.le.s32.totalorder 1, %s16
    %p276 = scmp.lt.s32.totalorder %s16, 4
    %p277 = pnand %p275, %p276
    %p278 = pneg %p277
    // Predicated region
    $region9: #{tpu_custom_call.1} parent=5 // pred_check
      _
    $region10: #{tpu_custom_call.1} parent=5 // pred_check_branch
      %280 = sbr.rel (%p277) target = $region12
    $region11: #{tpu_custom_call.1} parent=5 // pred_region
      %s281 = ssub.s32 %s16, 1
      // Predicated region
      $region13: #{tpu_custom_call.1} parent=11 // pred_check
        %p282 = pneg %p115
      $region14: #{tpu_custom_call.1} parent=11 // pred_check_branch
        %284 = sbr.rel (%p282) target = $region16
      $region15: #{tpu_custom_call.1} parent=11 // pred_region
        _
      $region16: #{tpu_custom_call.1} parent=11 // pred_fallthru
        _
      // Predicated region
      $region17: #{tpu_custom_call.1} parent=11 // pred_check
        %p285 = pneg %p136
      $region18: #{tpu_custom_call.1} parent=11 // pred_check_branch
        %287 = sbr.rel (%p285) target = $region20
      $region19: #{tpu_custom_call.1} parent=11 // pred_region
        _
      $region20: #{tpu_custom_call.1} parent=11 // pred_fallthru
        _
      // Predicated region
      $region21: #{tpu_custom_call.1} parent=11 // pred_check
        %p288 = pneg %p157
      $region22: #{tpu_custom_call.1} parent=11 // pred_check_branch
        %290 = sbr.rel (%p288) target = $region24
      $region23: #{tpu_custom_call.1} parent=11 // pred_region
        _
      $region24: #{tpu_custom_call.1} parent=11 // pred_fallthru
        _
      // Predicated region
      $region25: #{tpu_custom_call.1} parent=11 // pred_check
        %p291 = pneg %p178
      $region26: #{tpu_custom_call.1} parent=11 // pred_check_branch
        %293 = sbr.rel (%p291) target = $region28
      $region27: #{tpu_custom_call.1} parent=11 // pred_region
        _
      $region28: #{tpu_custom_call.1} parent=11 // pred_fallthru
        _
      // Predicated region
      $region29: #{tpu_custom_call.1} parent=11 // pred_check
        %p294 = pneg %p199
      $region30: #{tpu_custom_call.1} parent=11 // pred_check_branch
        %296 = sbr.rel (%p294) target = $region32
      $region31: #{tpu_custom_call.1} parent=11 // pred_region
        _
      $region32: #{tpu_custom_call.1} parent=11 // pred_fallthru
        _
      // Predicated region
      $region33: #{tpu_custom_call.1} parent=11 // pred_check
        %p297 = pneg %p220
      $region34: #{tpu_custom_call.1} parent=11 // pred_check_branch
        %299 = sbr.rel (%p297) target = $region36
      $region35: #{tpu_custom_call.1} parent=11 // pred_region
        _
      $region36: #{tpu_custom_call.1} parent=11 // pred_fallthru
        _
      // Predicated region
      $region37: #{tpu_custom_call.1} parent=11 // pred_check
        %p300 = pneg %p241
      $region38: #{tpu_custom_call.1} parent=11 // pred_check_branch
        %302 = sbr.rel (%p300) target = $region40
      $region39: #{tpu_custom_call.1} parent=11 // pred_region
        _
      $region40: #{tpu_custom_call.1} parent=11 // pred_fallthru
        _
    $region12: #{tpu_custom_call.1} parent=5 // pred_fallthru
      _
    %p303 = scmp.lt.s32.totalorder %s16, 3
    // Predicated region
    $region41: #{tpu_custom_call.1} parent=5 // pred_check
      %p304 = pneg %p303
    $region42: #{tpu_custom_call.1} parent=5 // pred_check_branch
      %306 = sbr.rel (%p304) target = $region44
    $region43: #{tpu_custom_call.1} parent=5 // pred_region
      // Predicated region
      $region45: #{tpu_custom_call.1} parent=43 // pred_check
        %p307 = pneg %p36
      $region46: #{tpu_custom_call.1} parent=43 // pred_check_branch
        %309 = sbr.rel (%p307) target = $region48
      $region47: #{tpu_custom_call.1} parent=43 // pred_region
        %s310 = smul.u32 128, %s16
        %p311 = scmp.lt.s32.totalorder %s310, 383
        %s312 = scalar_select %p311, %s310, 383
        %s313 = smul.addr %s312, 8
        %s314 = scalar_lea.vmem %s0, %s313
        %s315 = smul.u32 128, %s16
      $region48: #{tpu_custom_call.1} parent=43 // pred_fallthru
        _
      // Predicated region
      $region49: #{tpu_custom_call.1} parent=43 // pred_check
        %p316 = pneg %p62
      $region50: #{tpu_custom_call.1} parent=43 // pred_check_branch
        %318 = sbr.rel (%p316) target = $region52
      $region51: #{tpu_custom_call.1} parent=43 // pred_region
        %s319 = smul.u32 128, %s16
        %p320 = scmp.lt.s32.totalorder %s319, 383
        %s321 = scalar_select %p320, %s319, 383
        %s322 = smul.addr %s321, 8
        %s323 = scalar_lea.vmem %s1, %s322
        %s324 = smul.u32 128, %s16
      $region52: #{tpu_custom_call.1} parent=43 // pred_fallthru
        _
      // Predicated region
      $region53: #{tpu_custom_call.1} parent=43 // pred_check
        %p325 = pneg %p88
      $region54: #{tpu_custom_call.1} parent=43 // pred_check_branch
        %327 = sbr.rel (%p325) target = $region56
      $region55: #{tpu_custom_call.1} parent=43 // pred_region
        %s328 = smul.u32 128, %s16
        %p329 = scmp.lt.s32.totalorder %s328, 383
        %s330 = scalar_select %p329, %s328, 383
        %s331 = smul.addr %s330, 8
        %s332 = scalar_lea.vmem %s2, %s331
        %s333 = smul.u32 128, %s16
      $region56: #{tpu_custom_call.1} parent=43 // pred_fallthru
        _
    $region44: #{tpu_custom_call.1} parent=5 // pred_fallthru
      _
    %p334 = scmp.le.s32.totalorder 1, %s16
    %p335 = scmp.lt.s32.totalorder %s16, 4
    %p336 = pnand %p334, %p335
    %p337 = pneg %p336
    // Predicated region
    $region57: #{tpu_custom_call.1} parent=5 // pred_check
      _
    $region58: #{tpu_custom_call.1} parent=5 // pred_check_branch
      %339 = sbr.rel (%p336) target = $region60
    $region59: #{tpu_custom_call.1} parent=5 // pred_region
      %s340 = ssub.s32 %s16, 1
      %s341 = smul.u32 128, %s21
      %p342 = scmp.lt.s32.totalorder %s341, 383
      %s343 = scalar_select %p342, %s341, 383
      %s344 = smul.addr %s343, 8
      %s345 = scalar_lea.vmem %s0, %s344
      %p346 = pneg %p42
      %p347 = pneg %p39
      %s348 = smul.u32 128, %s21
      %p349 = scmp.lt.s32.totalorder %s348, 383
      %s350 = scalar_select %p349, %s348, 383
      %s351 = smul.addr %s350, 8
      %s352 = scalar_lea.vmem %s1, %s351
      %p353 = pneg %p68
      %p354 = pneg %p65
      %s355 = smul.u32 128, %s21
      %p356 = scmp.lt.s32.totalorder %s355, 383
      %s357 = scalar_select %p356, %s355, 383
      %s358 = smul.addr %s357, 8
      %s359 = scalar_lea.vmem %s2, %s358
      %p360 = pneg %p94
      %p361 = pneg %p91
      %p362 = pneg %p115
      %p363 = pneg %p112
      %p364 = pneg %p136
      %p365 = pneg %p133
      %p366 = pneg %p157
      %p367 = pneg %p154
      %p368 = pneg %p178
      %p369 = pneg %p175
      %p370 = pneg %p199
      %p371 = pneg %p196
      %p372 = pneg %p220
      %p373 = pneg %p217
      %p374 = pneg %p241
      %p375 = pneg %p238
      %p376 = pneg %p267
      %p377 = pneg %p264
      %s378 = smul.u32 128, %s21
      %p379 = scmp.lt.s32.totalorder %s378, 383
      %s380 = scalar_select %p379, %s378, 383
      %s381 = smul.addr %s380, 8
      %s382 = scalar_lea.vmem %s10, %s381
      %s383 = smul.u32 128, %s21
      %p384 = scmp.lt.s32.totalorder %s383, 383
      %s385 = scalar_select %p384, %s383, 383
      %s386 = smul.addr %s385, 8
      %s387 = scalar_lea.vmem %s0, %s386
      %s388 = smul.u32 128, %s21
      %s389 = smul.u32 128, %s21
      %p390 = scmp.lt.s32.totalorder %s389, 383
      %s391 = scalar_select %p390, %s389, 383
      %s392 = smul.addr %s391, 8
      %s393 = scalar_lea.vmem %s1, %s392
      %s394 = smul.u32 128, %s21
      %s395 = smul.u32 128, %s21
      %p396 = scmp.lt.s32.totalorder %s395, 383
      %s397 = scalar_select %p396, %s395, 383
      %s398 = smul.addr %s397, 8
      %s399 = scalar_lea.vmem %s2, %s398
      %s400 = smul.u32 128, %s21
      %s401 = smul.u32 128, %s21
      %p402 = scmp.lt.s32.totalorder %s401, 383
      %s403 = scalar_select %p402, %s401, 383
      %s404 = smul.addr %s403, 8
      %s405 = scalar_lea.vmem %s10, %s404
      %s406 = smul.u32 128, %s21
      %v407 = vld [vmem:[%s387] sm:$0xff]
      %v408 = vld [vmem:[%s387 + $0x8] sm:$0xff]
      %v409 = vld [vmem:[%s387 + $0x10] sm:$0xff]
      %v410 = vld [vmem:[%s387 + $0x18] sm:$0xff]
      %v411 = vld [vmem:[%s387 + $0x20] sm:$0xff]
      %v412 = vld [vmem:[%s387 + $0x28] sm:$0xff]
      %v413 = vld [vmem:[%s387 + $0x30] sm:$0xff]
      %v414 = vld [vmem:[%s387 + $0x38] sm:$0xff]
      %v415 = vld [vmem:[%s387 + $0x40] sm:$0xff]
      %v416 = vld [vmem:[%s387 + $0x48] sm:$0xff]
      %v417 = vld [vmem:[%s387 + $0x50] sm:$0xff]
      %v418 = vld [vmem:[%s387 + $0x58] sm:$0xff]
      %v419 = vld [vmem:[%s387 + $0x60] sm:$0xff]
      %v420 = vld [vmem:[%s387 + $0x68] sm:$0xff]
      %v421 = vld [vmem:[%s387 + $0x70] sm:$0xff]
      %v422 = vld [vmem:[%s387 + $0x78] sm:$0xff]
      %v423 = vld [vmem:[%s387 + $0x80] sm:$0xff]
      %v424 = vld [vmem:[%s387 + $0x88] sm:$0xff]
      %v425 = vld [vmem:[%s387 + $0x90] sm:$0xff]
      %v426 = vld [vmem:[%s387 + $0x98] sm:$0xff]
      %v427 = vld [vmem:[%s387 + $0xa0] sm:$0xff]
      %v428 = vld [vmem:[%s387 + $0xa8] sm:$0xff]
      %v429 = vld [vmem:[%s387 + $0xb0] sm:$0xff]
      %v430 = vld [vmem:[%s387 + $0xb8] sm:$0xff]
      %v431 = vld [vmem:[%s387 + $0xc0] sm:$0xff]
      %v432 = vld [vmem:[%s387 + $0xc8] sm:$0xff]
      %v433 = vld [vmem:[%s387 + $0xd0] sm:$0xff]
      %v434 = vld [vmem:[%s387 + $0xd8] sm:$0xff]
      %v435 = vld [vmem:[%s387 + $0xe0] sm:$0xff]
      %v436 = vld [vmem:[%s387 + $0xe8] sm:$0xff]
      %v437 = vld [vmem:[%s387 + $0xf0] sm:$0xff]
      %v438 = vld [vmem:[%s387 + $0xf8] sm:$0xff]
      %v439 = vld [vmem:[%s387 + $0x100] sm:$0xff]
      %v440 = vld [vmem:[%s387 + $0x108] sm:$0xff]
      %v441 = vld [vmem:[%s387 + $0x110] sm:$0xff]
      %v442 = vld [vmem:[%s387 + $0x118] sm:$0xff]
      %v443 = vld [vmem:[%s387 + $0x120] sm:$0xff]
      %v444 = vld [vmem:[%s387 + $0x128] sm:$0xff]
      %v445 = vld [vmem:[%s387 + $0x130] sm:$0xff]
      %v446 = vld [vmem:[%s387 + $0x138] sm:$0xff]
      %v447 = vld [vmem:[%s387 + $0x140] sm:$0xff]
      %v448 = vld [vmem:[%s387 + $0x148] sm:$0xff]
      %v449 = vld [vmem:[%s387 + $0x150] sm:$0xff]
      %v450 = vld [vmem:[%s387 + $0x158] sm:$0xff]
      %v451 = vld [vmem:[%s387 + $0x160] sm:$0xff]
      %v452 = vld [vmem:[%s387 + $0x168] sm:$0xff]
      %v453 = vld [vmem:[%s387 + $0x170] sm:$0xff]
      %v454 = vld [vmem:[%s387 + $0x178] sm:$0xff]
      %v455 = vld [vmem:[%s387 + $0x180] sm:$0xff]
      %v456 = vld [vmem:[%s387 + $0x188] sm:$0xff]
      %v457 = vld [vmem:[%s387 + $0x190] sm:$0xff]
      %v458 = vld [vmem:[%s387 + $0x198] sm:$0xff]
      %v459 = vld [vmem:[%s387 + $0x1a0] sm:$0xff]
      %v460 = vld [vmem:[%s387 + $0x1a8] sm:$0xff]
      %v461 = vld [vmem:[%s387 + $0x1b0] sm:$0xff]
      %v462 = vld [vmem:[%s387 + $0x1b8] sm:$0xff]
      %v463 = vld [vmem:[%s387 + $0x1c0] sm:$0xff]
      %v464 = vld [vmem:[%s387 + $0x1c8] sm:$0xff]
      %v465 = vld [vmem:[%s387 + $0x1d0] sm:$0xff]
      %v466 = vld [vmem:[%s387 + $0x1d8] sm:$0xff]
      %v467 = vld [vmem:[%s387 + $0x1e0] sm:$0xff]
      %v468 = vld [vmem:[%s387 + $0x1e8] sm:$0xff]
      %v469 = vld [vmem:[%s387 + $0x1f0] sm:$0xff]
      %v470 = vld [vmem:[%s387 + $0x1f8] sm:$0xff]
      %v471 = vld [vmem:[%s387 + $0x200] sm:$0xff]
      %v472 = vld [vmem:[%s387 + $0x208] sm:$0xff]
      %v473 = vld [vmem:[%s387 + $0x210] sm:$0xff]
      %v474 = vld [vmem:[%s387 + $0x218] sm:$0xff]
      %v475 = vld [vmem:[%s387 + $0x220] sm:$0xff]
      %v476 = vld [vmem:[%s387 + $0x228] sm:$0xff]
      %v477 = vld [vmem:[%s387 + $0x230] sm:$0xff]
      %v478 = vld [vmem:[%s387 + $0x238] sm:$0xff]
      %v479 = vld [vmem:[%s387 + $0x240] sm:$0xff]
      %v480 = vld [vmem:[%s387 + $0x248] sm:$0xff]
      %v481 = vld [vmem:[%s387 + $0x250] sm:$0xff]
      %v482 = vld [vmem:[%s387 + $0x258] sm:$0xff]
      %v483 = vld [vmem:[%s387 + $0x260] sm:$0xff]
      %v484 = vld [vmem:[%s387 + $0x268] sm:$0xff]
      %v485 = vld [vmem:[%s387 + $0x270] sm:$0xff]
      %v486 = vld [vmem:[%s387 + $0x278] sm:$0xff]
      %v487 = vld [vmem:[%s387 + $0x280] sm:$0xff]
      %v488 = vld [vmem:[%s387 + $0x288] sm:$0xff]
      %v489 = vld [vmem:[%s387 + $0x290] sm:$0xff]
      %v490 = vld [vmem:[%s387 + $0x298] sm:$0xff]
      %v491 = vld [vmem:[%s387 + $0x2a0] sm:$0xff]
      %v492 = vld [vmem:[%s387 + $0x2a8] sm:$0xff]
      %v493 = vld [vmem:[%s387 + $0x2b0] sm:$0xff]
      %v494 = vld [vmem:[%s387 + $0x2b8] sm:$0xff]
      %v495 = vld [vmem:[%s387 + $0x2c0] sm:$0xff]
      %v496 = vld [vmem:[%s387 + $0x2c8] sm:$0xff]
      %v497 = vld [vmem:[%s387 + $0x2d0] sm:$0xff]
      %v498 = vld [vmem:[%s387 + $0x2d8] sm:$0xff]
      %v499 = vld [vmem:[%s387 + $0x2e0] sm:$0xff]
      %v500 = vld [vmem:[%s387 + $0x2e8] sm:$0xff]
      %v501 = vld [vmem:[%s387 + $0x2f0] sm:$0xff]
      %v502 = vld [vmem:[%s387 + $0x2f8] sm:$0xff]
      %v503 = vld [vmem:[%s387 + $0x300] sm:$0xff]
      %v504 = vld [vmem:[%s387 + $0x308] sm:$0xff]
      %v505 = vld [vmem:[%s387 + $0x310] sm:$0xff]
      %v506 = vld [vmem:[%s387 + $0x318] sm:$0xff]
      %v507 = vld [vmem:[%s387 + $0x320] sm:$0xff]
      %v508 = vld [vmem:[%s387 + $0x328] sm:$0xff]
      %v509 = vld [vmem:[%s387 + $0x330] sm:$0xff]
      %v510 = vld [vmem:[%s387 + $0x338] sm:$0xff]
      %v511 = vld [vmem:[%s387 + $0x340] sm:$0xff]
      %v512 = vld [vmem:[%s387 + $0x348] sm:$0xff]
      %v513 = vld [vmem:[%s387 + $0x350] sm:$0xff]
      %v514 = vld [vmem:[%s387 + $0x358] sm:$0xff]
      %v515 = vld [vmem:[%s387 + $0x360] sm:$0xff]
      %v516 = vld [vmem:[%s387 + $0x368] sm:$0xff]
      %v517 = vld [vmem:[%s387 + $0x370] sm:$0xff]
      %v518 = vld [vmem:[%s387 + $0x378] sm:$0xff]
      %v519 = vld [vmem:[%s387 + $0x380] sm:$0xff]
      %v520 = vld [vmem:[%s387 + $0x388] sm:$0xff]
      %v521 = vld [vmem:[%s387 + $0x390] sm:$0xff]
      %v522 = vld [vmem:[%s387 + $0x398] sm:$0xff]
      %v523 = vld [vmem:[%s387 + $0x3a0] sm:$0xff]
      %v524 = vld [vmem:[%s387 + $0x3a8] sm:$0xff]
      %v525 = vld [vmem:[%s387 + $0x3b0] sm:$0xff]
      %v526 = vld [vmem:[%s387 + $0x3b8] sm:$0xff]
      %v527 = vld [vmem:[%s387 + $0x3c0] sm:$0xff]
      %v528 = vld [vmem:[%s387 + $0x3c8] sm:$0xff]
      %v529 = vld [vmem:[%s387 + $0x3d0] sm:$0xff]
      %v530 = vld [vmem:[%s387 + $0x3d8] sm:$0xff]
      %v531 = vld [vmem:[%s387 + $0x3e0] sm:$0xff]
      %v532 = vld [vmem:[%s387 + $0x3e8] sm:$0xff]
      %v533 = vld [vmem:[%s387 + $0x3f0] sm:$0xff]
      %v534 = vld [vmem:[%s387 + $0x3f8] sm:$0xff]
      %v535 = vld [vmem:[%s393] sm:$0xff]
      %v536 = vld [vmem:[%s393 + $0x8] sm:$0xff]
      %v537 = vld [vmem:[%s393 + $0x10] sm:$0xff]
      %v538 = vld [vmem:[%s393 + $0x18] sm:$0xff]
      %v539 = vld [vmem:[%s393 + $0x20] sm:$0xff]
      %v540 = vld [vmem:[%s393 + $0x28] sm:$0xff]
      %v541 = vld [vmem:[%s393 + $0x30] sm:$0xff]
      %v542 = vld [vmem:[%s393 + $0x38] sm:$0xff]
      %v543 = vld [vmem:[%s393 + $0x40] sm:$0xff]
      %v544 = vld [vmem:[%s393 + $0x48] sm:$0xff]
      %v545 = vld [vmem:[%s393 + $0x50] sm:$0xff]
      %v546 = vld [vmem:[%s393 + $0x58] sm:$0xff]
      %v547 = vld [vmem:[%s393 + $0x60] sm:$0xff]
      %v548 = vld [vmem:[%s393 + $0x68] sm:$0xff]
      %v549 = vld [vmem:[%s393 + $0x70] sm:$0xff]
      %v550 = vld [vmem:[%s393 + $0x78] sm:$0xff]
      %v551 = vld [vmem:[%s393 + $0x80] sm:$0xff]
      %v552 = vld [vmem:[%s393 + $0x88] sm:$0xff]
      %v553 = vld [vmem:[%s393 + $0x90] sm:$0xff]
      %v554 = vld [vmem:[%s393 + $0x98] sm:$0xff]
      %v555 = vld [vmem:[%s393 + $0xa0] sm:$0xff]
      %v556 = vld [vmem:[%s393 + $0xa8] sm:$0xff]
      %v557 = vld [vmem:[%s393 + $0xb0] sm:$0xff]
      %v558 = vld [vmem:[%s393 + $0xb8] sm:$0xff]
      %v559 = vld [vmem:[%s393 + $0xc0] sm:$0xff]
      %v560 = vld [vmem:[%s393 + $0xc8] sm:$0xff]
      %v561 = vld [vmem:[%s393 + $0xd0] sm:$0xff]
      %v562 = vld [vmem:[%s393 + $0xd8] sm:$0xff]
      %v563 = vld [vmem:[%s393 + $0xe0] sm:$0xff]
      %v564 = vld [vmem:[%s393 + $0xe8] sm:$0xff]
      %v565 = vld [vmem:[%s393 + $0xf0] sm:$0xff]
      %v566 = vld [vmem:[%s393 + $0xf8] sm:$0xff]
      %v567 = vld [vmem:[%s393 + $0x100] sm:$0xff]
      %v568 = vld [vmem:[%s393 + $0x108] sm:$0xff]
      %v569 = vld [vmem:[%s393 + $0x110] sm:$0xff]
      %v570 = vld [vmem:[%s393 + $0x118] sm:$0xff]
      %v571 = vld [vmem:[%s393 + $0x120] sm:$0xff]
      %v572 = vld [vmem:[%s393 + $0x128] sm:$0xff]
      %v573 = vld [vmem:[%s393 + $0x130] sm:$0xff]
      %v574 = vld [vmem:[%s393 + $0x138] sm:$0xff]
      %v575 = vld [vmem:[%s393 + $0x140] sm:$0xff]
      %v576 = vld [vmem:[%s393 + $0x148] sm:$0xff]
      %v577 = vld [vmem:[%s393 + $0x150] sm:$0xff]
      %v578 = vld [vmem:[%s393 + $0x158] sm:$0xff]
      %v579 = vld [vmem:[%s393 + $0x160] sm:$0xff]
      %v580 = vld [vmem:[%s393 + $0x168] sm:$0xff]
      %v581 = vld [vmem:[%s393 + $0x170] sm:$0xff]
      %v582 = vld [vmem:[%s393 + $0x178] sm:$0xff]
      %v583 = vld [vmem:[%s393 + $0x180] sm:$0xff]
      %v584 = vld [vmem:[%s393 + $0x188] sm:$0xff]
      %v585 = vld [vmem:[%s393 + $0x190] sm:$0xff]
      %v586 = vld [vmem:[%s393 + $0x198] sm:$0xff]
      %v587 = vld [vmem:[%s393 + $0x1a0] sm:$0xff]
      %v588 = vld [vmem:[%s393 + $0x1a8] sm:$0xff]
      %v589 = vld [vmem:[%s393 + $0x1b0] sm:$0xff]
      %v590 = vld [vmem:[%s393 + $0x1b8] sm:$0xff]
      %v591 = vld [vmem:[%s393 + $0x1c0] sm:$0xff]
      %v592 = vld [vmem:[%s393 + $0x1c8] sm:$0xff]
      %v593 = vld [vmem:[%s393 + $0x1d0] sm:$0xff]
      %v594 = vld [vmem:[%s393 + $0x1d8] sm:$0xff]
      %v595 = vld [vmem:[%s393 + $0x1e0] sm:$0xff]
      %v596 = vld [vmem:[%s393 + $0x1e8] sm:$0xff]
      %v597 = vld [vmem:[%s393 + $0x1f0] sm:$0xff]
      %v598 = vld [vmem:[%s393 + $0x1f8] sm:$0xff]
      %v599 = vld [vmem:[%s393 + $0x200] sm:$0xff]
      %v600 = vld [vmem:[%s393 + $0x208] sm:$0xff]
      %v601 = vld [vmem:[%s393 + $0x210] sm:$0xff]
      %v602 = vld [vmem:[%s393 + $0x218] sm:$0xff]
      %v603 = vld [vmem:[%s393 + $0x220] sm:$0xff]
      %v604 = vld [vmem:[%s393 + $0x228] sm:$0xff]
      %v605 = vld [vmem:[%s393 + $0x230] sm:$0xff]
      %v606 = vld [vmem:[%s393 + $0x238] sm:$0xff]
      %v607 = vld [vmem:[%s393 + $0x240] sm:$0xff]
      %v608 = vld [vmem:[%s393 + $0x248] sm:$0xff]
      %v609 = vld [vmem:[%s393 + $0x250] sm:$0xff]
      %v610 = vld [vmem:[%s393 + $0x258] sm:$0xff]
      %v611 = vld [vmem:[%s393 + $0x260] sm:$0xff]
      %v612 = vld [vmem:[%s393 + $0x268] sm:$0xff]
      %v613 = vld [vmem:[%s393 + $0x270] sm:$0xff]
      %v614 = vld [vmem:[%s393 + $0x278] sm:$0xff]
      %v615 = vld [vmem:[%s393 + $0x280] sm:$0xff]
      %v616 = vld [vmem:[%s393 + $0x288] sm:$0xff]
      %v617 = vld [vmem:[%s393 + $0x290] sm:$0xff]
      %v618 = vld [vmem:[%s393 + $0x298] sm:$0xff]
      %v619 = vld [vmem:[%s393 + $0x2a0] sm:$0xff]
      %v620 = vld [vmem:[%s393 + $0x2a8] sm:$0xff]
      %v621 = vld [vmem:[%s393 + $0x2b0] sm:$0xff]
      %v622 = vld [vmem:[%s393 + $0x2b8] sm:$0xff]
      %v623 = vld [vmem:[%s393 + $0x2c0] sm:$0xff]
      %v624 = vld [vmem:[%s393 + $0x2c8] sm:$0xff]
      %v625 = vld [vmem:[%s393 + $0x2d0] sm:$0xff]
      %v626 = vld [vmem:[%s393 + $0x2d8] sm:$0xff]
      %v627 = vld [vmem:[%s393 + $0x2e0] sm:$0xff]
      %v628 = vld [vmem:[%s393 + $0x2e8] sm:$0xff]
      %v629 = vld [vmem:[%s393 + $0x2f0] sm:$0xff]
      %v630 = vld [vmem:[%s393 + $0x2f8] sm:$0xff]
      %v631 = vld [vmem:[%s393 + $0x300] sm:$0xff]
      %v632 = vld [vmem:[%s393 + $0x308] sm:$0xff]
      %v633 = vld [vmem:[%s393 + $0x310] sm:$0xff]
      %v634 = vld [vmem:[%s393 + $0x318] sm:$0xff]
      %v635 = vld [vmem:[%s393 + $0x320] sm:$0xff]
      %v636 = vld [vmem:[%s393 + $0x328] sm:$0xff]
      %v637 = vld [vmem:[%s393 + $0x330] sm:$0xff]
      %v638 = vld [vmem:[%s393 + $0x338] sm:$0xff]
      %v639 = vld [vmem:[%s393 + $0x340] sm:$0xff]
      %v640 = vld [vmem:[%s393 + $0x348] sm:$0xff]
      %v641 = vld [vmem:[%s393 + $0x350] sm:$0xff]
      %v642 = vld [vmem:[%s393 + $0x358] sm:$0xff]
      %v643 = vld [vmem:[%s393 + $0x360] sm:$0xff]
      %v644 = vld [vmem:[%s393 + $0x368] sm:$0xff]
      %v645 = vld [vmem:[%s393 + $0x370] sm:$0xff]
      %v646 = vld [vmem:[%s393 + $0x378] sm:$0xff]
      %v647 = vld [vmem:[%s393 + $0x380] sm:$0xff]
      %v648 = vld [vmem:[%s393 + $0x388] sm:$0xff]
      %v649 = vld [vmem:[%s393 + $0x390] sm:$0xff]
      %v650 = vld [vmem:[%s393 + $0x398] sm:$0xff]
      %v651 = vld [vmem:[%s393 + $0x3a0] sm:$0xff]
      %v652 = vld [vmem:[%s393 + $0x3a8] sm:$0xff]
      %v653 = vld [vmem:[%s393 + $0x3b0] sm:$0xff]
      %v654 = vld [vmem:[%s393 + $0x3b8] sm:$0xff]
      %v655 = vld [vmem:[%s393 + $0x3c0] sm:$0xff]
      %v656 = vld [vmem:[%s393 + $0x3c8] sm:$0xff]
      %v657 = vld [vmem:[%s393 + $0x3d0] sm:$0xff]
      %v658 = vld [vmem:[%s393 + $0x3d8] sm:$0xff]
      %v659 = vld [vmem:[%s393 + $0x3e0] sm:$0xff]
      %v660 = vld [vmem:[%s393 + $0x3e8] sm:$0xff]
      %v661 = vld [vmem:[%s393 + $0x3f0] sm:$0xff]
      %v662 = vld [vmem:[%s393 + $0x3f8] sm:$0xff]
      %v663 = vld [vmem:[%s399] sm:$0xff]
      %v664 = vld [vmem:[%s399 + $0x8] sm:$0xff]
      %v665 = vld [vmem:[%s399 + $0x10] sm:$0xff]
      %v666 = vld [vmem:[%s399 + $0x18] sm:$0xff]
      %v667 = vld [vmem:[%s399 + $0x20] sm:$0xff]
      %v668 = vld [vmem:[%s399 + $0x28] sm:$0xff]
      %v669 = vld [vmem:[%s399 + $0x30] sm:$0xff]
      %v670 = vld [vmem:[%s399 + $0x38] sm:$0xff]
      %v671 = vld [vmem:[%s399 + $0x40] sm:$0xff]
      %v672 = vld [vmem:[%s399 + $0x48] sm:$0xff]
      %v673 = vld [vmem:[%s399 + $0x50] sm:$0xff]
      %v674 = vld [vmem:[%s399 + $0x58] sm:$0xff]
      %v675 = vld [vmem:[%s399 + $0x60] sm:$0xff]
      %v676 = vld [vmem:[%s399 + $0x68] sm:$0xff]
      %v677 = vld [vmem:[%s399 + $0x70] sm:$0xff]
      %v678 = vld [vmem:[%s399 + $0x78] sm:$0xff]
      %v679 = vld [vmem:[%s399 + $0x80] sm:$0xff]
      %v680 = vld [vmem:[%s399 + $0x88] sm:$0xff]
      %v681 = vld [vmem:[%s399 + $0x90] sm:$0xff]
      %v682 = vld [vmem:[%s399 + $0x98] sm:$0xff]
      %v683 = vld [vmem:[%s399 + $0xa0] sm:$0xff]
      %v684 = vld [vmem:[%s399 + $0xa8] sm:$0xff]
      %v685 = vld [vmem:[%s399 + $0xb0] sm:$0xff]
      %v686 = vld [vmem:[%s399 + $0xb8] sm:$0xff]
      %v687 = vld [vmem:[%s399 + $0xc0] sm:$0xff]
      %v688 = vld [vmem:[%s399 + $0xc8] sm:$0xff]
      %v689 = vld [vmem:[%s399 + $0xd0] sm:$0xff]
      %v690 = vld [vmem:[%s399 + $0xd8] sm:$0xff]
      %v691 = vld [vmem:[%s399 + $0xe0] sm:$0xff]
      %v692 = vld [vmem:[%s399 + $0xe8] sm:$0xff]
      %v693 = vld [vmem:[%s399 + $0xf0] sm:$0xff]
      %v694 = vld [vmem:[%s399 + $0xf8] sm:$0xff]
      %v695 = vld [vmem:[%s399 + $0x100] sm:$0xff]
      %v696 = vld [vmem:[%s399 + $0x108] sm:$0xff]
      %v697 = vld [vmem:[%s399 + $0x110] sm:$0xff]
      %v698 = vld [vmem:[%s399 + $0x118] sm:$0xff]
      %v699 = vld [vmem:[%s399 + $0x120] sm:$0xff]
      %v700 = vld [vmem:[%s399 + $0x128] sm:$0xff]
      %v701 = vld [vmem:[%s399 + $0x130] sm:$0xff]
      %v702 = vld [vmem:[%s399 + $0x138] sm:$0xff]
      %v703 = vld [vmem:[%s399 + $0x140] sm:$0xff]
      %v704 = vld [vmem:[%s399 + $0x148] sm:$0xff]
      %v705 = vld [vmem:[%s399 + $0x150] sm:$0xff]
      %v706 = vld [vmem:[%s399 + $0x158] sm:$0xff]
      %v707 = vld [vmem:[%s399 + $0x160] sm:$0xff]
      %v708 = vld [vmem:[%s399 + $0x168] sm:$0xff]
      %v709 = vld [vmem:[%s399 + $0x170] sm:$0xff]
      %v710 = vld [vmem:[%s399 + $0x178] sm:$0xff]
      %v711 = vld [vmem:[%s399 + $0x180] sm:$0xff]
      %v712 = vld [vmem:[%s399 + $0x188] sm:$0xff]
      %v713 = vld [vmem:[%s399 + $0x190] sm:$0xff]
      %v714 = vld [vmem:[%s399 + $0x198] sm:$0xff]
      %v715 = vld [vmem:[%s399 + $0x1a0] sm:$0xff]
      %v716 = vld [vmem:[%s399 + $0x1a8] sm:$0xff]
      %v717 = vld [vmem:[%s399 + $0x1b0] sm:$0xff]
      %v718 = vld [vmem:[%s399 + $0x1b8] sm:$0xff]
      %v719 = vld [vmem:[%s399 + $0x1c0] sm:$0xff]
      %v720 = vld [vmem:[%s399 + $0x1c8] sm:$0xff]
      %v721 = vld [vmem:[%s399 + $0x1d0] sm:$0xff]
      %v722 = vld [vmem:[%s399 + $0x1d8] sm:$0xff]
      %v723 = vld [vmem:[%s399 + $0x1e0] sm:$0xff]
      %v724 = vld [vmem:[%s399 + $0x1e8] sm:$0xff]
      %v725 = vld [vmem:[%s399 + $0x1f0] sm:$0xff]
      %v726 = vld [vmem:[%s399 + $0x1f8] sm:$0xff]
      %v727 = vld [vmem:[%s399 + $0x200] sm:$0xff]
      %v728 = vld [vmem:[%s399 + $0x208] sm:$0xff]
      %v729 = vld [vmem:[%s399 + $0x210] sm:$0xff]
      %v730 = vld [vmem:[%s399 + $0x218] sm:$0xff]
      %v731 = vld [vmem:[%s399 + $0x220] sm:$0xff]
      %v732 = vld [vmem:[%s399 + $0x228] sm:$0xff]
      %v733 = vld [vmem:[%s399 + $0x230] sm:$0xff]
      %v734 = vld [vmem:[%s399 + $0x238] sm:$0xff]
      %v735 = vld [vmem:[%s399 + $0x240] sm:$0xff]
      %v736 = vld [vmem:[%s399 + $0x248] sm:$0xff]
      %v737 = vld [vmem:[%s399 + $0x250] sm:$0xff]
      %v738 = vld [vmem:[%s399 + $0x258] sm:$0xff]
      %v739 = vld [vmem:[%s399 + $0x260] sm:$0xff]
      %v740 = vld [vmem:[%s399 + $0x268] sm:$0xff]
      %v741 = vld [vmem:[%s399 + $0x270] sm:$0xff]
      %v742 = vld [vmem:[%s399 + $0x278] sm:$0xff]
      %v743 = vld [vmem:[%s399 + $0x280] sm:$0xff]
      %v744 = vld [vmem:[%s399 + $0x288] sm:$0xff]
      %v745 = vld [vmem:[%s399 + $0x290] sm:$0xff]
      %v746 = vld [vmem:[%s399 + $0x298] sm:$0xff]
      %v747 = vld [vmem:[%s399 + $0x2a0] sm:$0xff]
      %v748 = vld [vmem:[%s399 + $0x2a8] sm:$0xff]
      %v749 = vld [vmem:[%s399 + $0x2b0] sm:$0xff]
      %v750 = vld [vmem:[%s399 + $0x2b8] sm:$0xff]
      %v751 = vld [vmem:[%s399 + $0x2c0] sm:$0xff]
      %v752 = vld [vmem:[%s399 + $0x2c8] sm:$0xff]
      %v753 = vld [vmem:[%s399 + $0x2d0] sm:$0xff]
      %v754 = vld [vmem:[%s399 + $0x2d8] sm:$0xff]
      %v755 = vld [vmem:[%s399 + $0x2e0] sm:$0xff]
      %v756 = vld [vmem:[%s399 + $0x2e8] sm:$0xff]
      %v757 = vld [vmem:[%s399 + $0x2f0] sm:$0xff]
      %v758 = vld [vmem:[%s399 + $0x2f8] sm:$0xff]
      %v759 = vld [vmem:[%s399 + $0x300] sm:$0xff]
      %v760 = vld [vmem:[%s399 + $0x308] sm:$0xff]
      %v761 = vld [vmem:[%s399 + $0x310] sm:$0xff]
      %v762 = vld [vmem:[%s399 + $0x318] sm:$0xff]
      %v763 = vld [vmem:[%s399 + $0x320] sm:$0xff]
      %v764 = vld [vmem:[%s399 + $0x328] sm:$0xff]
      %v765 = vld [vmem:[%s399 + $0x330] sm:$0xff]
      %v766 = vld [vmem:[%s399 + $0x338] sm:$0xff]
      %v767 = vld [vmem:[%s399 + $0x340] sm:$0xff]
      %v768 = vld [vmem:[%s399 + $0x348] sm:$0xff]
      %v769 = vld [vmem:[%s399 + $0x350] sm:$0xff]
      %v770 = vld [vmem:[%s399 + $0x358] sm:$0xff]
      %v771 = vld [vmem:[%s399 + $0x360] sm:$0xff]
      %v772 = vld [vmem:[%s399 + $0x368] sm:$0xff]
      %v773 = vld [vmem:[%s399 + $0x370] sm:$0xff]
      %v774 = vld [vmem:[%s399 + $0x378] sm:$0xff]
      %v775 = vld [vmem:[%s399 + $0x380] sm:$0xff]
      %v776 = vld [vmem:[%s399 + $0x388] sm:$0xff]
      %v777 = vld [vmem:[%s399 + $0x390] sm:$0xff]
      %v778 = vld [vmem:[%s399 + $0x398] sm:$0xff]
      %v779 = vld [vmem:[%s399 + $0x3a0] sm:$0xff]
      %v780 = vld [vmem:[%s399 + $0x3a8] sm:$0xff]
      %v781 = vld [vmem:[%s399 + $0x3b0] sm:$0xff]
      %v782 = vld [vmem:[%s399 + $0x3b8] sm:$0xff]
      %v783 = vld [vmem:[%s399 + $0x3c0] sm:$0xff]
      %v784 = vld [vmem:[%s399 + $0x3c8] sm:$0xff]
      %v785 = vld [vmem:[%s399 + $0x3d0] sm:$0xff]
      %v786 = vld [vmem:[%s399 + $0x3d8] sm:$0xff]
      %v787 = vld [vmem:[%s399 + $0x3e0] sm:$0xff]
      %v788 = vld [vmem:[%s399 + $0x3e8] sm:$0xff]
      %v789 = vld [vmem:[%s399 + $0x3f0] sm:$0xff]
      %v790 = vld [vmem:[%s399 + $0x3f8] sm:$0xff]
      %v791 = vld [vmem:[%s3] sm:$0xff]
      %v792 = vld [vmem:[%s3 + $0x8] sm:$0xff]
      %v793 = vld [vmem:[%s3 + $0x10] sm:$0xff]
      %v794 = vld [vmem:[%s3 + $0x18] sm:$0xff]
      %v795 = vld [vmem:[%s3 + $0x20] sm:$0xff]
      %v796 = vlaneseq
      %v797 = vand.u32 %v796, 127
      %798 = vset.pattern.permute.xlu0 0
      %799 = vperm.xlu0 %798, %v535
      %v800 = vpop.permute.xlu0 %799
      %801 = vset.pattern.permute.xlu0 0
      %802 = vperm.xlu0 %801, %v536
      %v803 = vpop.permute.xlu0 %802
      %804 = vset.pattern.permute.xlu0 0
      %805 = vperm.xlu0 %804, %v537
      %v806 = vpop.permute.xlu0 %805
      %807 = vset.pattern.permute.xlu0 0
      %808 = vperm.xlu0 %807, %v538
      %v809 = vpop.permute.xlu0 %808
      %810 = vset.pattern.permute.xlu0 0
      %811 = vperm.xlu0 %810, %v539
      %v812 = vpop.permute.xlu0 %811
      %813 = vset.pattern.permute.xlu0 0
      %814 = vperm.xlu0 %813, %v540
      %v815 = vpop.permute.xlu0 %814
      %816 = vset.pattern.permute.xlu0 0
      %817 = vperm.xlu0 %816, %v541
      %v818 = vpop.permute.xlu0 %817
      %819 = vset.pattern.permute.xlu0 0
      %820 = vperm.xlu0 %819, %v542
      %v821 = vpop.permute.xlu0 %820
      %822 = vset.pattern.permute.xlu0 0
      %823 = vperm.xlu0 %822, %v543
      %v824 = vpop.permute.xlu0 %823
      %825 = vset.pattern.permute.xlu0 0
      %826 = vperm.xlu0 %825, %v544
      %v827 = vpop.permute.xlu0 %826
      %828 = vset.pattern.permute.xlu0 0
      %829 = vperm.xlu0 %828, %v545
      %v830 = vpop.permute.xlu0 %829
      %831 = vset.pattern.permute.xlu0 0
      %832 = vperm.xlu0 %831, %v546
      %v833 = vpop.permute.xlu0 %832
      %834 = vset.pattern.permute.xlu0 0
      %835 = vperm.xlu0 %834, %v547
      %v836 = vpop.permute.xlu0 %835
      %837 = vset.pattern.permute.xlu0 0
      %838 = vperm.xlu0 %837, %v548
      %v839 = vpop.permute.xlu0 %838
      %840 = vset.pattern.permute.xlu0 0
      %841 = vperm.xlu0 %840, %v549
      %v842 = vpop.permute.xlu0 %841
      %843 = vset.pattern.permute.xlu0 0
      %844 = vperm.xlu0 %843, %v550
      %v845 = vpop.permute.xlu0 %844
      %846 = vset.pattern.permute.xlu0 0
      %847 = vperm.xlu0 %846, %v551
      %v848 = vpop.permute.xlu0 %847
      %849 = vset.pattern.permute.xlu0 0
      %850 = vperm.xlu0 %849, %v552
      %v851 = vpop.permute.xlu0 %850
      %852 = vset.pattern.permute.xlu0 0
      %853 = vperm.xlu0 %852, %v553
      %v854 = vpop.permute.xlu0 %853
      %855 = vset.pattern.permute.xlu0 0
      %856 = vperm.xlu0 %855, %v554
      %v857 = vpop.permute.xlu0 %856
      %858 = vset.pattern.permute.xlu0 0
      %859 = vperm.xlu0 %858, %v555
      %v860 = vpop.permute.xlu0 %859
      %861 = vset.pattern.permute.xlu0 0
      %862 = vperm.xlu0 %861, %v556
      %v863 = vpop.permute.xlu0 %862
      %864 = vset.pattern.permute.xlu0 0
      %865 = vperm.xlu0 %864, %v557
      %v866 = vpop.permute.xlu0 %865
      %867 = vset.pattern.permute.xlu0 0
      %868 = vperm.xlu0 %867, %v558
      %v869 = vpop.permute.xlu0 %868
      %870 = vset.pattern.permute.xlu0 0
      %871 = vperm.xlu0 %870, %v559
      %v872 = vpop.permute.xlu0 %871
      %873 = vset.pattern.permute.xlu0 0
      %874 = vperm.xlu0 %873, %v560
      %v875 = vpop.permute.xlu0 %874
      %876 = vset.pattern.permute.xlu0 0
      %877 = vperm.xlu0 %876, %v561
      %v878 = vpop.permute.xlu0 %877
      %879 = vset.pattern.permute.xlu0 0
      %880 = vperm.xlu0 %879, %v562
      %v881 = vpop.permute.xlu0 %880
      %882 = vset.pattern.permute.xlu0 0
      %883 = vperm.xlu0 %882, %v563
      %v884 = vpop.permute.xlu0 %883
      %885 = vset.pattern.permute.xlu0 0
      %886 = vperm.xlu0 %885, %v564
      %v887 = vpop.permute.xlu0 %886
      %888 = vset.pattern.permute.xlu0 0
      %889 = vperm.xlu0 %888, %v565
      %v890 = vpop.permute.xlu0 %889
      %891 = vset.pattern.permute.xlu0 0
      %892 = vperm.xlu0 %891, %v566
      %v893 = vpop.permute.xlu0 %892
      %894 = vset.pattern.permute.xlu0 0
      %895 = vperm.xlu0 %894, %v567
      %v896 = vpop.permute.xlu0 %895
      %897 = vset.pattern.permute.xlu0 0
      %898 = vperm.xlu0 %897, %v568
      %v899 = vpop.permute.xlu0 %898
      %900 = vset.pattern.permute.xlu0 0
      %901 = vperm.xlu0 %900, %v569
      %v902 = vpop.permute.xlu0 %901
      %903 = vset.pattern.permute.xlu0 0
      %904 = vperm.xlu0 %903, %v570
      %v905 = vpop.permute.xlu0 %904
      %906 = vset.pattern.permute.xlu0 0
      %907 = vperm.xlu0 %906, %v571
      %v908 = vpop.permute.xlu0 %907
      %909 = vset.pattern.permute.xlu0 0
      %910 = vperm.xlu0 %909, %v572
      %v911 = vpop.permute.xlu0 %910
      %912 = vset.pattern.permute.xlu0 0
      %913 = vperm.xlu0 %912, %v573
      %v914 = vpop.permute.xlu0 %913
      %915 = vset.pattern.permute.xlu0 0
      %916 = vperm.xlu0 %915, %v574
      %v917 = vpop.permute.xlu0 %916
      %918 = vset.pattern.permute.xlu0 0
      %919 = vperm.xlu0 %918, %v575
      %v920 = vpop.permute.xlu0 %919
      %921 = vset.pattern.permute.xlu0 0
      %922 = vperm.xlu0 %921, %v576
      %v923 = vpop.permute.xlu0 %922
      %924 = vset.pattern.permute.xlu0 0
      %925 = vperm.xlu0 %924, %v577
      %v926 = vpop.permute.xlu0 %925
      %927 = vset.pattern.permute.xlu0 0
      %928 = vperm.xlu0 %927, %v578
      %v929 = vpop.permute.xlu0 %928
      %930 = vset.pattern.permute.xlu0 0
      %931 = vperm.xlu0 %930, %v579
      %v932 = vpop.permute.xlu0 %931
      %933 = vset.pattern.permute.xlu0 0
      %934 = vperm.xlu0 %933, %v580
      %v935 = vpop.permute.xlu0 %934
      %936 = vset.pattern.permute.xlu0 0
      %937 = vperm.xlu0 %936, %v581
      %v938 = vpop.permute.xlu0 %937
      %939 = vset.pattern.permute.xlu0 0
      %940 = vperm.xlu0 %939, %v582
      %v941 = vpop.permute.xlu0 %940
      %942 = vset.pattern.permute.xlu0 0
      %943 = vperm.xlu0 %942, %v583
      %v944 = vpop.permute.xlu0 %943
      %945 = vset.pattern.permute.xlu0 0
      %946 = vperm.xlu0 %945, %v584
      %v947 = vpop.permute.xlu0 %946
      %948 = vset.pattern.permute.xlu0 0
      %949 = vperm.xlu0 %948, %v585
      %v950 = vpop.permute.xlu0 %949
      %951 = vset.pattern.permute.xlu0 0
      %952 = vperm.xlu0 %951, %v586
      %v953 = vpop.permute.xlu0 %952
      %954 = vset.pattern.permute.xlu0 0
      %955 = vperm.xlu0 %954, %v587
      %v956 = vpop.permute.xlu0 %955
      %957 = vset.pattern.permute.xlu0 0
      %958 = vperm.xlu0 %957, %v588
      %v959 = vpop.permute.xlu0 %958
      %960 = vset.pattern.permute.xlu0 0
      %961 = vperm.xlu0 %960, %v589
      %v962 = vpop.permute.xlu0 %961
      %963 = vset.pattern.permute.xlu0 0
      %964 = vperm.xlu0 %963, %v590
      %v965 = vpop.permute.xlu0 %964
      %966 = vset.pattern.permute.xlu0 0
      %967 = vperm.xlu0 %966, %v591
      %v968 = vpop.permute.xlu0 %967
      %969 = vset.pattern.permute.xlu0 0
      %970 = vperm.xlu0 %969, %v592
      %v971 = vpop.permute.xlu0 %970
      %972 = vset.pattern.permute.xlu0 0
      %973 = vperm.xlu0 %972, %v593
      %v974 = vpop.permute.xlu0 %973
      %975 = vset.pattern.permute.xlu0 0
      %976 = vperm.xlu0 %975, %v594
      %v977 = vpop.permute.xlu0 %976
      %978 = vset.pattern.permute.xlu0 0
      %979 = vperm.xlu0 %978, %v595
      %v980 = vpop.permute.xlu0 %979
      %981 = vset.pattern.permute.xlu0 0
      %982 = vperm.xlu0 %981, %v596
      %v983 = vpop.permute.xlu0 %982
      %984 = vset.pattern.permute.xlu0 0
      %985 = vperm.xlu0 %984, %v597
      %v986 = vpop.permute.xlu0 %985
      %987 = vset.pattern.permute.xlu0 0
      %988 = vperm.xlu0 %987, %v598
      %v989 = vpop.permute.xlu0 %988
      %990 = vset.pattern.permute.xlu0 0
      %991 = vperm.xlu0 %990, %v599
      %v992 = vpop.permute.xlu0 %991
      %993 = vset.pattern.permute.xlu0 0
      %994 = vperm.xlu0 %993, %v600
      %v995 = vpop.permute.xlu0 %994
      %996 = vset.pattern.permute.xlu0 0
      %997 = vperm.xlu0 %996, %v601
      %v998 = vpop.permute.xlu0 %997
      %999 = vset.pattern.permute.xlu0 0
      %1000 = vperm.xlu0 %999, %v602
      %v1001 = vpop.permute.xlu0 %1000
      %1002 = vset.pattern.permute.xlu0 0
      %1003 = vperm.xlu0 %1002, %v603
      %v1004 = vpop.permute.xlu0 %1003
      %1005 = vset.pattern.permute.xlu0 0
      %1006 = vperm.xlu0 %1005, %v604
      %v1007 = vpop.permute.xlu0 %1006
      %1008 = vset.pattern.permute.xlu0 0
      %1009 = vperm.xlu0 %1008, %v605
      %v1010 = vpop.permute.xlu0 %1009
      %1011 = vset.pattern.permute.xlu0 0
      %1012 = vperm.xlu0 %1011, %v606
      %v1013 = vpop.permute.xlu0 %1012
      %1014 = vset.pattern.permute.xlu0 0
      %1015 = vperm.xlu0 %1014, %v607
      %v1016 = vpop.permute.xlu0 %1015
      %1017 = vset.pattern.permute.xlu0 0
      %1018 = vperm.xlu0 %1017, %v608
      %v1019 = vpop.permute.xlu0 %1018
      %1020 = vset.pattern.permute.xlu0 0
      %1021 = vperm.xlu0 %1020, %v609
      %v1022 = vpop.permute.xlu0 %1021
      %1023 = vset.pattern.permute.xlu0 0
      %1024 = vperm.xlu0 %1023, %v610
      %v1025 = vpop.permute.xlu0 %1024
      %1026 = vset.pattern.permute.xlu0 0
      %1027 = vperm.xlu0 %1026, %v611
      %v1028 = vpop.permute.xlu0 %1027
      %1029 = vset.pattern.permute.xlu0 0
      %1030 = vperm.xlu0 %1029, %v612
      %v1031 = vpop.permute.xlu0 %1030
      %1032 = vset.pattern.permute.xlu0 0
      %1033 = vperm.xlu0 %1032, %v613
      %v1034 = vpop.permute.xlu0 %1033
      %1035 = vset.pattern.permute.xlu0 0
      %1036 = vperm.xlu0 %1035, %v614
      %v1037 = vpop.permute.xlu0 %1036
      %1038 = vset.pattern.permute.xlu0 0
      %1039 = vperm.xlu0 %1038, %v615
      %v1040 = vpop.permute.xlu0 %1039
      %1041 = vset.pattern.permute.xlu0 0
      %1042 = vperm.xlu0 %1041, %v616
      %v1043 = vpop.permute.xlu0 %1042
      %1044 = vset.pattern.permute.xlu0 0
      %1045 = vperm.xlu0 %1044, %v617
      %v1046 = vpop.permute.xlu0 %1045
      %1047 = vset.pattern.permute.xlu0 0
      %1048 = vperm.xlu0 %1047, %v618
      %v1049 = vpop.permute.xlu0 %1048
      %1050 = vset.pattern.permute.xlu0 0
      %1051 = vperm.xlu0 %1050, %v619
      %v1052 = vpop.permute.xlu0 %1051
      %1053 = vset.pattern.permute.xlu0 0
      %1054 = vperm.xlu0 %1053, %v620
      %v1055 = vpop.permute.xlu0 %1054
      %1056 = vset.pattern.permute.xlu0 0
      %1057 = vperm.xlu0 %1056, %v621
      %v1058 = vpop.permute.xlu0 %1057
      %1059 = vset.pattern.permute.xlu0 0
      %1060 = vperm.xlu0 %1059, %v622
      %v1061 = vpop.permute.xlu0 %1060
      %1062 = vset.pattern.permute.xlu0 0
      %1063 = vperm.xlu0 %1062, %v623
      %v1064 = vpop.permute.xlu0 %1063
      %1065 = vset.pattern.permute.xlu0 0
      %1066 = vperm.xlu0 %1065, %v624
      %v1067 = vpop.permute.xlu0 %1066
      %1068 = vset.pattern.permute.xlu0 0
      %1069 = vperm.xlu0 %1068, %v625
      %v1070 = vpop.permute.xlu0 %1069
      %1071 = vset.pattern.permute.xlu0 0
      %1072 = vperm.xlu0 %1071, %v626
      %v1073 = vpop.permute.xlu0 %1072
      %1074 = vset.pattern.permute.xlu0 0
      %1075 = vperm.xlu0 %1074, %v627
      %v1076 = vpop.permute.xlu0 %1075
      %1077 = vset.pattern.permute.xlu0 0
      %1078 = vperm.xlu0 %1077, %v628
      %v1079 = vpop.permute.xlu0 %1078
      %1080 = vset.pattern.permute.xlu0 0
      %1081 = vperm.xlu0 %1080, %v629
      %v1082 = vpop.permute.xlu0 %1081
      %1083 = vset.pattern.permute.xlu0 0
      %1084 = vperm.xlu0 %1083, %v630
      %v1085 = vpop.permute.xlu0 %1084
      %1086 = vset.pattern.permute.xlu0 0
      %1087 = vperm.xlu0 %1086, %v631
      %v1088 = vpop.permute.xlu0 %1087
      %1089 = vset.pattern.permute.xlu0 0
      %1090 = vperm.xlu0 %1089, %v632
      %v1091 = vpop.permute.xlu0 %1090
      %1092 = vset.pattern.permute.xlu0 0
      %1093 = vperm.xlu0 %1092, %v633
      %v1094 = vpop.permute.xlu0 %1093
      %1095 = vset.pattern.permute.xlu0 0
      %1096 = vperm.xlu0 %1095, %v634
      %v1097 = vpop.permute.xlu0 %1096
      %1098 = vset.pattern.permute.xlu0 0
      %1099 = vperm.xlu0 %1098, %v635
      %v1100 = vpop.permute.xlu0 %1099
      %1101 = vset.pattern.permute.xlu0 0
      %1102 = vperm.xlu0 %1101, %v636
      %v1103 = vpop.permute.xlu0 %1102
      %1104 = vset.pattern.permute.xlu0 0
      %1105 = vperm.xlu0 %1104, %v637
      %v1106 = vpop.permute.xlu0 %1105
      %1107 = vset.pattern.permute.xlu0 0
      %1108 = vperm.xlu0 %1107, %v638
      %v1109 = vpop.permute.xlu0 %1108
      %1110 = vset.pattern.permute.xlu0 0
      %1111 = vperm.xlu0 %1110, %v639
      %v1112 = vpop.permute.xlu0 %1111
      %1113 = vset.pattern.permute.xlu0 0
      %1114 = vperm.xlu0 %1113, %v640
      %v1115 = vpop.permute.xlu0 %1114
      %1116 = vset.pattern.permute.xlu0 0
      %1117 = vperm.xlu0 %1116, %v641
      %v1118 = vpop.permute.xlu0 %1117
      %1119 = vset.pattern.permute.xlu0 0
      %1120 = vperm.xlu0 %1119, %v642
      %v1121 = vpop.permute.xlu0 %1120
      %1122 = vset.pattern.permute.xlu0 0
      %1123 = vperm.xlu0 %1122, %v643
      %v1124 = vpop.permute.xlu0 %1123
      %1125 = vset.pattern.permute.xlu0 0
      %1126 = vperm.xlu0 %1125, %v644
      %v1127 = vpop.permute.xlu0 %1126
      %1128 = vset.pattern.permute.xlu0 0
      %1129 = vperm.xlu0 %1128, %v645
      %v1130 = vpop.permute.xlu0 %1129
      %1131 = vset.pattern.permute.xlu0 0
      %1132 = vperm.xlu0 %1131, %v646
      %v1133 = vpop.permute.xlu0 %1132
      %1134 = vset.pattern.permute.xlu0 0
      %1135 = vperm.xlu0 %1134, %v647
      %v1136 = vpop.permute.xlu0 %1135
      %1137 = vset.pattern.permute.xlu0 0
      %1138 = vperm.xlu0 %1137, %v648
      %v1139 = vpop.permute.xlu0 %1138
      %1140 = vset.pattern.permute.xlu0 0
      %1141 = vperm.xlu0 %1140, %v649
      %v1142 = vpop.permute.xlu0 %1141
      %1143 = vset.pattern.permute.xlu0 0
      %1144 = vperm.xlu0 %1143, %v650
      %v1145 = vpop.permute.xlu0 %1144
      %1146 = vset.pattern.permute.xlu0 0
      %1147 = vperm.xlu0 %1146, %v651
      %v1148 = vpop.permute.xlu0 %1147
      %1149 = vset.pattern.permute.xlu0 0
      %1150 = vperm.xlu0 %1149, %v652
      %v1151 = vpop.permute.xlu0 %1150
      %1152 = vset.pattern.permute.xlu0 0
      %1153 = vperm.xlu0 %1152, %v653
      %v1154 = vpop.permute.xlu0 %1153
      %1155 = vset.pattern.permute.xlu0 0
      %1156 = vperm.xlu0 %1155, %v654
      %v1157 = vpop.permute.xlu0 %1156
      %1158 = vset.pattern.permute.xlu0 0
      %1159 = vperm.xlu0 %1158, %v655
      %v1160 = vpop.permute.xlu0 %1159
      %1161 = vset.pattern.permute.xlu0 0
      %1162 = vperm.xlu0 %1161, %v656
      %v1163 = vpop.permute.xlu0 %1162
      %1164 = vset.pattern.permute.xlu0 0
      %1165 = vperm.xlu0 %1164, %v657
      %v1166 = vpop.permute.xlu0 %1165
      %1167 = vset.pattern.permute.xlu0 0
      %1168 = vperm.xlu0 %1167, %v658
      %v1169 = vpop.permute.xlu0 %1168
      %1170 = vset.pattern.permute.xlu0 0
      %1171 = vperm.xlu0 %1170, %v659
      %v1172 = vpop.permute.xlu0 %1171
      %1173 = vset.pattern.permute.xlu0 0
      %1174 = vperm.xlu0 %1173, %v660
      %v1175 = vpop.permute.xlu0 %1174
      %1176 = vset.pattern.permute.xlu0 0
      %1177 = vperm.xlu0 %1176, %v661
      %v1178 = vpop.permute.xlu0 %1177
      %1179 = vset.pattern.permute.xlu0 0
      %1180 = vperm.xlu0 %1179, %v662
      %v1181 = vpop.permute.xlu0 %1180
      %vm1182 = vcmp.eq.s32.totalorder %v800, %v797
      %vm1183 = vcmp.eq.s32.totalorder %v803, %v797
      %vm1184 = vcmp.eq.s32.totalorder %v806, %v797
      %vm1185 = vcmp.eq.s32.totalorder %v809, %v797
      %vm1186 = vcmp.eq.s32.totalorder %v812, %v797
      %vm1187 = vcmp.eq.s32.totalorder %v815, %v797
      %vm1188 = vcmp.eq.s32.totalorder %v818, %v797
      %vm1189 = vcmp.eq.s32.totalorder %v821, %v797
      %vm1190 = vcmp.eq.s32.totalorder %v824, %v797
      %vm1191 = vcmp.eq.s32.totalorder %v827, %v797
      %vm1192 = vcmp.eq.s32.totalorder %v830, %v797
      %vm1193 = vcmp.eq.s32.totalorder %v833, %v797
      %vm1194 = vcmp.eq.s32.totalorder %v836, %v797
      %vm1195 = vcmp.eq.s32.totalorder %v839, %v797
      %vm1196 = vcmp.eq.s32.totalorder %v842, %v797
      %vm1197 = vcmp.eq.s32.totalorder %v845, %v797
      %vm1198 = vcmp.eq.s32.totalorder %v848, %v797
      %vm1199 = vcmp.eq.s32.totalorder %v851, %v797
      %vm1200 = vcmp.eq.s32.totalorder %v854, %v797
      %vm1201 = vcmp.eq.s32.totalorder %v857, %v797
      %vm1202 = vcmp.eq.s32.totalorder %v860, %v797
      %vm1203 = vcmp.eq.s32.totalorder %v863, %v797
      %vm1204 = vcmp.eq.s32.totalorder %v866, %v797
      %vm1205 = vcmp.eq.s32.totalorder %v869, %v797
      %vm1206 = vcmp.eq.s32.totalorder %v872, %v797
      %vm1207 = vcmp.eq.s32.totalorder %v875, %v797
      %vm1208 = vcmp.eq.s32.totalorder %v878, %v797
      %vm1209 = vcmp.eq.s32.totalorder %v881, %v797
      %vm1210 = vcmp.eq.s32.totalorder %v884, %v797
      %vm1211 = vcmp.eq.s32.totalorder %v887, %v797
      %vm1212 = vcmp.eq.s32.totalorder %v890, %v797
      %vm1213 = vcmp.eq.s32.totalorder %v893, %v797
      %vm1214 = vcmp.eq.s32.totalorder %v896, %v797
      %vm1215 = vcmp.eq.s32.totalorder %v899, %v797
      %vm1216 = vcmp.eq.s32.totalorder %v902, %v797
      %vm1217 = vcmp.eq.s32.totalorder %v905, %v797
      %vm1218 = vcmp.eq.s32.totalorder %v908, %v797
      %vm1219 = vcmp.eq.s32.totalorder %v911, %v797
      %vm1220 = vcmp.eq.s32.totalorder %v914, %v797
      %vm1221 = vcmp.eq.s32.totalorder %v917, %v797
      %vm1222 = vcmp.eq.s32.totalorder %v920, %v797
      %vm1223 = vcmp.eq.s32.totalorder %v923, %v797
      %vm1224 = vcmp.eq.s32.totalorder %v926, %v797
      %vm1225 = vcmp.eq.s32.totalorder %v929, %v797
      %vm1226 = vcmp.eq.s32.totalorder %v932, %v797
      %vm1227 = vcmp.eq.s32.totalorder %v935, %v797
      %vm1228 = vcmp.eq.s32.totalorder %v938, %v797
      %vm1229 = vcmp.eq.s32.totalorder %v941, %v797
      %vm1230 = vcmp.eq.s32.totalorder %v944, %v797
      %vm1231 = vcmp.eq.s32.totalorder %v947, %v797
      %vm1232 = vcmp.eq.s32.totalorder %v950, %v797
      %vm1233 = vcmp.eq.s32.totalorder %v953, %v797
      %vm1234 = vcmp.eq.s32.totalorder %v956, %v797
      %vm1235 = vcmp.eq.s32.totalorder %v959, %v797
      %vm1236 = vcmp.eq.s32.totalorder %v962, %v797
      %vm1237 = vcmp.eq.s32.totalorder %v965, %v797
      %vm1238 = vcmp.eq.s32.totalorder %v968, %v797
      %vm1239 = vcmp.eq.s32.totalorder %v971, %v797
      %vm1240 = vcmp.eq.s32.totalorder %v974, %v797
      %vm1241 = vcmp.eq.s32.totalorder %v977, %v797
      %vm1242 = vcmp.eq.s32.totalorder %v980, %v797
      %vm1243 = vcmp.eq.s32.totalorder %v983, %v797
      %vm1244 = vcmp.eq.s32.totalorder %v986, %v797
      %vm1245 = vcmp.eq.s32.totalorder %v989, %v797
      %vm1246 = vcmp.eq.s32.totalorder %v992, %v797
      %vm1247 = vcmp.eq.s32.totalorder %v995, %v797
      %vm1248 = vcmp.eq.s32.totalorder %v998, %v797
      %vm1249 = vcmp.eq.s32.totalorder %v1001, %v797
      %vm1250 = vcmp.eq.s32.totalorder %v1004, %v797
      %vm1251 = vcmp.eq.s32.totalorder %v1007, %v797
      %vm1252 = vcmp.eq.s32.totalorder %v1010, %v797
      %vm1253 = vcmp.eq.s32.totalorder %v1013, %v797
      %vm1254 = vcmp.eq.s32.totalorder %v1016, %v797
      %vm1255 = vcmp.eq.s32.totalorder %v1019, %v797
      %vm1256 = vcmp.eq.s32.totalorder %v1022, %v797
      %vm1257 = vcmp.eq.s32.totalorder %v1025, %v797
      %vm1258 = vcmp.eq.s32.totalorder %v1028, %v797
      %vm1259 = vcmp.eq.s32.totalorder %v1031, %v797
      %vm1260 = vcmp.eq.s32.totalorder %v1034, %v797
      %vm1261 = vcmp.eq.s32.totalorder %v1037, %v797
      %vm1262 = vcmp.eq.s32.totalorder %v1040, %v797
      %vm1263 = vcmp.eq.s32.totalorder %v1043, %v797
      %vm1264 = vcmp.eq.s32.totalorder %v1046, %v797
      %vm1265 = vcmp.eq.s32.totalorder %v1049, %v797
      %vm1266 = vcmp.eq.s32.totalorder %v1052, %v797
      %vm1267 = vcmp.eq.s32.totalorder %v1055, %v797
      %vm1268 = vcmp.eq.s32.totalorder %v1058, %v797
      %vm1269 = vcmp.eq.s32.totalorder %v1061, %v797
      %vm1270 = vcmp.eq.s32.totalorder %v1064, %v797
      %vm1271 = vcmp.eq.s32.totalorder %v1067, %v797
      %vm1272 = vcmp.eq.s32.totalorder %v1070, %v797
      %vm1273 = vcmp.eq.s32.totalorder %v1073, %v797
      %vm1274 = vcmp.eq.s32.totalorder %v1076, %v797
      %vm1275 = vcmp.eq.s32.totalorder %v1079, %v797
      %vm1276 = vcmp.eq.s32.totalorder %v1082, %v797
      %vm1277 = vcmp.eq.s32.totalorder %v1085, %v797
      %vm1278 = vcmp.eq.s32.totalorder %v1088, %v797
      %vm1279 = vcmp.eq.s32.totalorder %v1091, %v797
      %vm1280 = vcmp.eq.s32.totalorder %v1094, %v797
      %vm1281 = vcmp.eq.s32.totalorder %v1097, %v797
      %vm1282 = vcmp.eq.s32.totalorder %v1100, %v797
      %vm1283 = vcmp.eq.s32.totalorder %v1103, %v797
      %vm1284 = vcmp.eq.s32.totalorder %v1106, %v797
      %vm1285 = vcmp.eq.s32.totalorder %v1109, %v797
      %vm1286 = vcmp.eq.s32.totalorder %v1112, %v797
      %vm1287 = vcmp.eq.s32.totalorder %v1115, %v797
      %vm1288 = vcmp.eq.s32.totalorder %v1118, %v797
      %vm1289 = vcmp.eq.s32.totalorder %v1121, %v797
      %vm1290 = vcmp.eq.s32.totalorder %v1124, %v797
      %vm1291 = vcmp.eq.s32.totalorder %v1127, %v797
      %vm1292 = vcmp.eq.s32.totalorder %v1130, %v797
      %vm1293 = vcmp.eq.s32.totalorder %v1133, %v797
      %vm1294 = vcmp.eq.s32.totalorder %v1136, %v797
      %vm1295 = vcmp.eq.s32.totalorder %v1139, %v797
      %vm1296 = vcmp.eq.s32.totalorder %v1142, %v797
      %vm1297 = vcmp.eq.s32.totalorder %v1145, %v797
      %vm1298 = vcmp.eq.s32.totalorder %v1148, %v797
      %vm1299 = vcmp.eq.s32.totalorder %v1151, %v797
      %vm1300 = vcmp.eq.s32.totalorder %v1154, %v797
      %vm1301 = vcmp.eq.s32.totalorder %v1157, %v797
      %vm1302 = vcmp.eq.s32.totalorder %v1160, %v797
      %vm1303 = vcmp.eq.s32.totalorder %v1163, %v797
      %vm1304 = vcmp.eq.s32.totalorder %v1166, %v797
      %vm1305 = vcmp.eq.s32.totalorder %v1169, %v797
      %vm1306 = vcmp.eq.s32.totalorder %v1172, %v797
      %vm1307 = vcmp.eq.s32.totalorder %v1175, %v797
      %vm1308 = vcmp.eq.s32.totalorder %v1178, %v797
      %vm1309 = vcmp.eq.s32.totalorder %v1181, %v797
      %v1310 = vsel %vm1182, 1, 0
      %v1311 = vsel %vm1183, 1, 0
      %v1312 = vsel %vm1184, 1, 0
      %v1313 = vsel %vm1185, 1, 0
      %v1314 = vsel %vm1186, 1, 0
      %v1315 = vsel %vm1187, 1, 0
      %v1316 = vsel %vm1188, 1, 0
      %v1317 = vsel %vm1189, 1, 0
      %v1318 = vsel %vm1190, 1, 0
      %v1319 = vsel %vm1191, 1, 0
      %v1320 = vsel %vm1192, 1, 0
      %v1321 = vsel %vm1193, 1, 0
      %v1322 = vsel %vm1194, 1, 0
      %v1323 = vsel %vm1195, 1, 0
      %v1324 = vsel %vm1196, 1, 0
      %v1325 = vsel %vm1197, 1, 0
      %v1326 = vsel %vm1198, 1, 0
      %v1327 = vsel %vm1199, 1, 0
      %v1328 = vsel %vm1200, 1, 0
      %v1329 = vsel %vm1201, 1, 0
      %v1330 = vsel %vm1202, 1, 0
      %v1331 = vsel %vm1203, 1, 0
      %v1332 = vsel %vm1204, 1, 0
      %v1333 = vsel %vm1205, 1, 0
      %v1334 = vsel %vm1206, 1, 0
      %v1335 = vsel %vm1207, 1, 0
      %v1336 = vsel %vm1208, 1, 0
      %v1337 = vsel %vm1209, 1, 0
      %v1338 = vsel %vm1210, 1, 0
      %v1339 = vsel %vm1211, 1, 0
      %v1340 = vsel %vm1212, 1, 0
      %v1341 = vsel %vm1213, 1, 0
      %v1342 = vsel %vm1214, 1, 0
      %v1343 = vsel %vm1215, 1, 0
      %v1344 = vsel %vm1216, 1, 0
      %v1345 = vsel %vm1217, 1, 0
      %v1346 = vsel %vm1218, 1, 0
      %v1347 = vsel %vm1219, 1, 0
      %v1348 = vsel %vm1220, 1, 0
      %v1349 = vsel %vm1221, 1, 0
      %v1350 = vsel %vm1222, 1, 0
      %v1351 = vsel %vm1223, 1, 0
      %v1352 = vsel %vm1224, 1, 0
      %v1353 = vsel %vm1225, 1, 0
      %v1354 = vsel %vm1226, 1, 0
      %v1355 = vsel %vm1227, 1, 0
      %v1356 = vsel %vm1228, 1, 0
      %v1357 = vsel %vm1229, 1, 0
      %v1358 = vsel %vm1230, 1, 0
      %v1359 = vsel %vm1231, 1, 0
      %v1360 = vsel %vm1232, 1, 0
      %v1361 = vsel %vm1233, 1, 0
      %v1362 = vsel %vm1234, 1, 0
      %v1363 = vsel %vm1235, 1, 0
      %v1364 = vsel %vm1236, 1, 0
      %v1365 = vsel %vm1237, 1, 0
      %v1366 = vsel %vm1238, 1, 0
      %v1367 = vsel %vm1239, 1, 0
      %v1368 = vsel %vm1240, 1, 0
      %v1369 = vsel %vm1241, 1, 0
      %v1370 = vsel %vm1242, 1, 0
      %v1371 = vsel %vm1243, 1, 0
      %v1372 = vsel %vm1244, 1, 0
      %v1373 = vsel %vm1245, 1, 0
      %v1374 = vsel %vm1246, 1, 0
      %v1375 = vsel %vm1247, 1, 0
      %v1376 = vsel %vm1248, 1, 0
      %v1377 = vsel %vm1249, 1, 0
      %v1378 = vsel %vm1250, 1, 0
      %v1379 = vsel %vm1251, 1, 0
      %v1380 = vsel %vm1252, 1, 0
      %v1381 = vsel %vm1253, 1, 0
      %v1382 = vsel %vm1254, 1, 0
      %v1383 = vsel %vm1255, 1, 0
      %v1384 = vsel %vm1256, 1, 0
      %v1385 = vsel %vm1257, 1, 0
      %v1386 = vsel %vm1258, 1, 0
      %v1387 = vsel %vm1259, 1, 0
      %v1388 = vsel %vm1260, 1, 0
      %v1389 = vsel %vm1261, 1, 0
      %v1390 = vsel %vm1262, 1, 0
      %v1391 = vsel %vm1263, 1, 0
      %v1392 = vsel %vm1264, 1, 0
      %v1393 = vsel %vm1265, 1, 0
      %v1394 = vsel %vm1266, 1, 0
      %v1395 = vsel %vm1267, 1, 0
      %v1396 = vsel %vm1268, 1, 0
      %v1397 = vsel %vm1269, 1, 0
      %v1398 = vsel %vm1270, 1, 0
      %v1399 = vsel %vm1271, 1, 0
      %v1400 = vsel %vm1272, 1, 0
      %v1401 = vsel %vm1273, 1, 0
      %v1402 = vsel %vm1274, 1, 0
      %v1403 = vsel %vm1275, 1, 0
      %v1404 = vsel %vm1276, 1, 0
      %v1405 = vsel %vm1277, 1, 0
      %v1406 = vsel %vm1278, 1, 0
      %v1407 = vsel %vm1279, 1, 0
      %v1408 = vsel %vm1280, 1, 0
      %v1409 = vsel %vm1281, 1, 0
      %v1410 = vsel %vm1282, 1, 0
      %v1411 = vsel %vm1283, 1, 0
      %v1412 = vsel %vm1284, 1, 0
      %v1413 = vsel %vm1285, 1, 0
      %v1414 = vsel %vm1286, 1, 0
      %v1415 = vsel %vm1287, 1, 0
      %v1416 = vsel %vm1288, 1, 0
      %v1417 = vsel %vm1289, 1, 0
      %v1418 = vsel %vm1290, 1, 0
      %v1419 = vsel %vm1291, 1, 0
      %v1420 = vsel %vm1292, 1, 0
      %v1421 = vsel %vm1293, 1, 0
      %v1422 = vsel %vm1294, 1, 0
      %v1423 = vsel %vm1295, 1, 0
      %v1424 = vsel %vm1296, 1, 0
      %v1425 = vsel %vm1297, 1, 0
      %v1426 = vsel %vm1298, 1, 0
      %v1427 = vsel %vm1299, 1, 0
      %v1428 = vsel %vm1300, 1, 0
      %v1429 = vsel %vm1301, 1, 0
      %v1430 = vsel %vm1302, 1, 0
      %v1431 = vsel %vm1303, 1, 0
      %v1432 = vsel %vm1304, 1, 0
      %v1433 = vsel %vm1305, 1, 0
      %v1434 = vsel %vm1306, 1, 0
      %v1435 = vsel %vm1307, 1, 0
      %v1436 = vsel %vm1308, 1, 0
      %v1437 = vsel %vm1309, 1, 0
      %v1438 = vcvt.s32.f32 %v1310
      %v1439 = vcvt.s32.f32 %v1311
      %v1440 = vcvt.s32.f32 %v1312
      %v1441 = vcvt.s32.f32 %v1313
      %v1442 = vcvt.s32.f32 %v1314
      %v1443 = vcvt.s32.f32 %v1315
      %v1444 = vcvt.s32.f32 %v1316
      %v1445 = vcvt.s32.f32 %v1317
      %v1446 = vcvt.s32.f32 %v1318
      %v1447 = vcvt.s32.f32 %v1319
      %v1448 = vcvt.s32.f32 %v1320
      %v1449 = vcvt.s32.f32 %v1321
      %v1450 = vcvt.s32.f32 %v1322
      %v1451 = vcvt.s32.f32 %v1323
      %v1452 = vcvt.s32.f32 %v1324
      %v1453 = vcvt.s32.f32 %v1325
      %v1454 = vcvt.s32.f32 %v1326
      %v1455 = vcvt.s32.f32 %v1327
      %v1456 = vcvt.s32.f32 %v1328
      %v1457 = vcvt.s32.f32 %v1329
      %v1458 = vcvt.s32.f32 %v1330
      %v1459 = vcvt.s32.f32 %v1331
      %v1460 = vcvt.s32.f32 %v1332
      %v1461 = vcvt.s32.f32 %v1333
      %v1462 = vcvt.s32.f32 %v1334
      %v1463 = vcvt.s32.f32 %v1335
      %v1464 = vcvt.s32.f32 %v1336
      %v1465 = vcvt.s32.f32 %v1337
      %v1466 = vcvt.s32.f32 %v1338
      %v1467 = vcvt.s32.f32 %v1339
      %v1468 = vcvt.s32.f32 %v1340
      %v1469 = vcvt.s32.f32 %v1341
      %v1470 = vcvt.s32.f32 %v1342
      %v1471 = vcvt.s32.f32 %v1343
      %v1472 = vcvt.s32.f32 %v1344
      %v1473 = vcvt.s32.f32 %v1345
      %v1474 = vcvt.s32.f32 %v1346
      %v1475 = vcvt.s32.f32 %v1347
      %v1476 = vcvt.s32.f32 %v1348
      %v1477 = vcvt.s32.f32 %v1349
      %v1478 = vcvt.s32.f32 %v1350
      %v1479 = vcvt.s32.f32 %v1351
      %v1480 = vcvt.s32.f32 %v1352
      %v1481 = vcvt.s32.f32 %v1353
      %v1482 = vcvt.s32.f32 %v1354
      %v1483 = vcvt.s32.f32 %v1355
      %v1484 = vcvt.s32.f32 %v1356
      %v1485 = vcvt.s32.f32 %v1357
      %v1486 = vcvt.s32.f32 %v1358
      %v1487 = vcvt.s32.f32 %v1359
      %v1488 = vcvt.s32.f32 %v1360
      %v1489 = vcvt.s32.f32 %v1361
      %v1490 = vcvt.s32.f32 %v1362
      %v1491 = vcvt.s32.f32 %v1363
      %v1492 = vcvt.s32.f32 %v1364
      %v1493 = vcvt.s32.f32 %v1365
      %v1494 = vcvt.s32.f32 %v1366
      %v1495 = vcvt.s32.f32 %v1367
      %v1496 = vcvt.s32.f32 %v1368
      %v1497 = vcvt.s32.f32 %v1369
      %v1498 = vcvt.s32.f32 %v1370
      %v1499 = vcvt.s32.f32 %v1371
      %v1500 = vcvt.s32.f32 %v1372
      %v1501 = vcvt.s32.f32 %v1373
      %v1502 = vcvt.s32.f32 %v1374
      %v1503 = vcvt.s32.f32 %v1375
      %v1504 = vcvt.s32.f32 %v1376
      %v1505 = vcvt.s32.f32 %v1377
      %v1506 = vcvt.s32.f32 %v1378
      %v1507 = vcvt.s32.f32 %v1379
      %v1508 = vcvt.s32.f32 %v1380
      %v1509 = vcvt.s32.f32 %v1381
      %v1510 = vcvt.s32.f32 %v1382
      %v1511 = vcvt.s32.f32 %v1383
      %v1512 = vcvt.s32.f32 %v1384
      %v1513 = vcvt.s32.f32 %v1385
      %v1514 = vcvt.s32.f32 %v1386
      %v1515 = vcvt.s32.f32 %v1387
      %v1516 = vcvt.s32.f32 %v1388
      %v1517 = vcvt.s32.f32 %v1389
      %v1518 = vcvt.s32.f32 %v1390
      %v1519 = vcvt.s32.f32 %v1391
      %v1520 = vcvt.s32.f32 %v1392
      %v1521 = vcvt.s32.f32 %v1393
      %v1522 = vcvt.s32.f32 %v1394
      %v1523 = vcvt.s32.f32 %v1395
      %v1524 = vcvt.s32.f32 %v1396
      %v1525 = vcvt.s32.f32 %v1397
      %v1526 = vcvt.s32.f32 %v1398
      %v1527 = vcvt.s32.f32 %v1399
      %v1528 = vcvt.s32.f32 %v1400
      %v1529 = vcvt.s32.f32 %v1401
      %v1530 = vcvt.s32.f32 %v1402
      %v1531 = vcvt.s32.f32 %v1403
      %v1532 = vcvt.s32.f32 %v1404
      %v1533 = vcvt.s32.f32 %v1405
      %v1534 = vcvt.s32.f32 %v1406
      %v1535 = vcvt.s32.f32 %v1407
      %v1536 = vcvt.s32.f32 %v1408
      %v1537 = vcvt.s32.f32 %v1409
      %v1538 = vcvt.s32.f32 %v1410
      %v1539 = vcvt.s32.f32 %v1411
      %v1540 = vcvt.s32.f32 %v1412
      %v1541 = vcvt.s32.f32 %v1413
      %v1542 = vcvt.s32.f32 %v1414
      %v1543 = vcvt.s32.f32 %v1415
      %v1544 = vcvt.s32.f32 %v1416
      %v1545 = vcvt.s32.f32 %v1417
      %v1546 = vcvt.s32.f32 %v1418
      %v1547 = vcvt.s32.f32 %v1419
      %v1548 = vcvt.s32.f32 %v1420
      %v1549 = vcvt.s32.f32 %v1421
      %v1550 = vcvt.s32.f32 %v1422
      %v1551 = vcvt.s32.f32 %v1423
      %v1552 = vcvt.s32.f32 %v1424
      %v1553 = vcvt.s32.f32 %v1425
      %v1554 = vcvt.s32.f32 %v1426
      %v1555 = vcvt.s32.f32 %v1427
      %v1556 = vcvt.s32.f32 %v1428
      %v1557 = vcvt.s32.f32 %v1429
      %v1558 = vcvt.s32.f32 %v1430
      %v1559 = vcvt.s32.f32 %v1431
      %v1560 = vcvt.s32.f32 %v1432
      %v1561 = vcvt.s32.f32 %v1433
      %v1562 = vcvt.s32.f32 %v1434
      %v1563 = vcvt.s32.f32 %v1435
      %v1564 = vcvt.s32.f32 %v1436
      %v1565 = vcvt.s32.f32 %v1437
      %vm1566 = vcmask 326656
      %v1568 = vsel %vm1566, %v1438, 0
      %v1571 = vsel %vm1566, %v1439, 0
      %v1574 = vsel %vm1566, %v1440, 0
      %v1577 = vsel %vm1566, %v1441, 0
      %v1580 = vsel %vm1566, %v1442, 0
      %v1583 = vsel %vm1566, %v1443, 0
      %v1586 = vsel %vm1566, %v1444, 0
      %v1589 = vsel %vm1566, %v1445, 0
      %v1592 = vsel %vm1566, %v1446, 0
      %v1595 = vsel %vm1566, %v1447, 0
      %v1598 = vsel %vm1566, %v1448, 0
      %v1601 = vsel %vm1566, %v1449, 0
      %v1604 = vsel %vm1566, %v1450, 0
      %v1607 = vsel %vm1566, %v1451, 0
      %v1610 = vsel %vm1566, %v1452, 0
      %v1613 = vsel %vm1566, %v1453, 0
      %v1616 = vsel %vm1566, %v1454, 0
      %v1619 = vsel %vm1566, %v1455, 0
      %v1622 = vsel %vm1566, %v1456, 0
      %v1625 = vsel %vm1566, %v1457, 0
      %v1628 = vsel %vm1566, %v1458, 0
      %v1631 = vsel %vm1566, %v1459, 0
      %v1634 = vsel %vm1566, %v1460, 0
      %v1637 = vsel %vm1566, %v1461, 0
      %v1640 = vsel %vm1566, %v1462, 0
      %v1643 = vsel %vm1566, %v1463, 0
      %v1646 = vsel %vm1566, %v1464, 0
      %v1649 = vsel %vm1566, %v1465, 0
      %v1652 = vsel %vm1566, %v1466, 0
      %v1655 = vsel %vm1566, %v1467, 0
      %v1658 = vsel %vm1566, %v1468, 0
      %v1661 = vsel %vm1566, %v1469, 0
      %v1664 = vsel %vm1566, %v1470, 0
      %v1667 = vsel %vm1566, %v1471, 0
      %v1670 = vsel %vm1566, %v1472, 0
      %v1673 = vsel %vm1566, %v1473, 0
      %v1676 = vsel %vm1566, %v1474, 0
      %v1679 = vsel %vm1566, %v1475, 0
      %v1682 = vsel %vm1566, %v1476, 0
      %v1685 = vsel %vm1566, %v1477, 0
      %v1688 = vsel %vm1566, %v1478, 0
      %v1691 = vsel %vm1566, %v1479, 0
      %v1694 = vsel %vm1566, %v1480, 0
      %v1697 = vsel %vm1566, %v1481, 0
      %v1700 = vsel %vm1566, %v1482, 0
      %v1703 = vsel %vm1566, %v1483, 0
      %v1706 = vsel %vm1566, %v1484, 0
      %v1709 = vsel %vm1566, %v1485, 0
      %v1712 = vsel %vm1566, %v1486, 0
      %v1715 = vsel %vm1566, %v1487, 0
      %v1718 = vsel %vm1566, %v1488, 0
      %v1721 = vsel %vm1566, %v1489, 0
      %v1724 = vsel %vm1566, %v1490, 0
      %v1727 = vsel %vm1566, %v1491, 0
      %v1730 = vsel %vm1566, %v1492, 0
      %v1733 = vsel %vm1566, %v1493, 0
      %v1736 = vsel %vm1566, %v1494, 0
      %v1739 = vsel %vm1566, %v1495, 0
      %v1742 = vsel %vm1566, %v1496, 0
      %v1745 = vsel %vm1566, %v1497, 0
      %v1748 = vsel %vm1566, %v1498, 0
      %v1751 = vsel %vm1566, %v1499, 0
      %v1754 = vsel %vm1566, %v1500, 0
      %v1757 = vsel %vm1566, %v1501, 0
      %v1760 = vsel %vm1566, %v1502, 0
      %v1763 = vsel %vm1566, %v1503, 0
      %v1766 = vsel %vm1566, %v1504, 0
      %v1769 = vsel %vm1566, %v1505, 0
      %v1772 = vsel %vm1566, %v1506, 0
      %v1775 = vsel %vm1566, %v1507, 0
      %v1778 = vsel %vm1566, %v1508, 0
      %v1781 = vsel %vm1566, %v1509, 0
      %v1784 = vsel %vm1566, %v1510, 0
      %v1787 = vsel %vm1566, %v1511, 0
      %v1790 = vsel %vm1566, %v1512, 0
      %v1793 = vsel %vm1566, %v1513, 0
      %v1796 = vsel %vm1566, %v1514, 0
      %v1799 = vsel %vm1566, %v1515, 0
      %v1802 = vsel %vm1566, %v1516, 0
      %v1805 = vsel %vm1566, %v1517, 0
      %v1808 = vsel %vm1566, %v1518, 0
      %v1811 = vsel %vm1566, %v1519, 0
      %v1814 = vsel %vm1566, %v1520, 0
      %v1817 = vsel %vm1566, %v1521, 0
      %v1820 = vsel %vm1566, %v1522, 0
      %v1823 = vsel %vm1566, %v1523, 0
      %v1826 = vsel %vm1566, %v1524, 0
      %v1829 = vsel %vm1566, %v1525, 0
      %v1832 = vsel %vm1566, %v1526, 0
      %v1835 = vsel %vm1566, %v1527, 0
      %v1838 = vsel %vm1566, %v1528, 0
      %v1841 = vsel %vm1566, %v1529, 0
      %v1844 = vsel %vm1566, %v1530, 0
      %v1847 = vsel %vm1566, %v1531, 0
      %v1850 = vsel %vm1566, %v1532, 0
      %v1853 = vsel %vm1566, %v1533, 0
      %v1856 = vsel %vm1566, %v1534, 0
      %v1859 = vsel %vm1566, %v1535, 0
      %v1862 = vsel %vm1566, %v1536, 0
      %v1865 = vsel %vm1566, %v1537, 0
      %v1868 = vsel %vm1566, %v1538, 0
      %v1871 = vsel %vm1566, %v1539, 0
      %v1874 = vsel %vm1566, %v1540, 0
      %v1877 = vsel %vm1566, %v1541, 0
      %v1880 = vsel %vm1566, %v1542, 0
      %v1883 = vsel %vm1566, %v1543, 0
      %v1886 = vsel %vm1566, %v1544, 0
      %v1889 = vsel %vm1566, %v1545, 0
      %v1892 = vsel %vm1566, %v1546, 0
      %v1895 = vsel %vm1566, %v1547, 0
      %v1898 = vsel %vm1566, %v1548, 0
      %v1901 = vsel %vm1566, %v1549, 0
      %v1904 = vsel %vm1566, %v1550, 0
      %v1907 = vsel %vm1566, %v1551, 0
      %v1910 = vsel %vm1566, %v1552, 0
      %v1913 = vsel %vm1566, %v1553, 0
      %v1916 = vsel %vm1566, %v1554, 0
      %v1919 = vsel %vm1566, %v1555, 0
      %v1922 = vsel %vm1566, %v1556, 0
      %v1925 = vsel %vm1566, %v1557, 0
      %v1928 = vsel %vm1566, %v1558, 0
      %v1931 = vsel %vm1566, %v1559, 0
      %v1934 = vsel %vm1566, %v1560, 0
      %v1937 = vsel %vm1566, %v1561, 0
      %v1940 = vsel %vm1566, %v1562, 0
      %v1943 = vsel %vm1566, %v1563, 0
      %v1946 = vsel %vm1566, %v1564, 0
      %v1949 = vsel %vm1566, %v1565, 0
      %1951 = vmatprep.subr.mxu0 0.0
      %1952 = vmatpush1.msra.mxu0 0.0
      %1953 = vmatprep.subr.mxu0 0.0
      %1954 = vmatpush1.msra.mxu0 0.0
      %1955 = vmatprep.subr.mxu0 0.0
      %1956 = vmatpush1.msra.mxu0 0.0
      %1957 = vmatprep.subr.mxu0 0.0
      %1958 = vmatpush1.msra.mxu0 0.0
      %1959 = vmatprep.subr.mxu0 0.0
      %1960 = vmatpush1.msra.mxu0 0.0
      %1961 = vmatprep.subr.mxu0 0.0
      %1962 = vmatpush1.msra.mxu0 0.0
      %1963 = vmatprep.subr.mxu0 0.0
      %1964 = vmatpush1.msra.mxu0 0.0
      %1965 = vmatprep.subr.mxu0 0.0
      %1966 = vmatpush1.msra.mxu0 0.0
      %1967 = vmatprep.subr.mxu0 0.0
      %1968 = vmatpush1.msra.mxu0 0.0
      %1969 = vmatprep.subr.mxu0 0.0
      %1970 = vmatpush1.msra.mxu0 0.0
      %1971 = vmatprep.subr.mxu0 0.0
      %1972 = vmatpush1.msra.mxu0 0.0
      %1973 = vmatprep.subr.mxu0 0.0
      %1974 = vmatpush1.msra.mxu0 %v795
      %1975 = vmatprep.subr.mxu0 0.0
      %1976 = vmatpush1.msra.mxu0 %v794
      %1977 = vmatprep.subr.mxu0 0.0
      %1978 = vmatpush1.msra.mxu0 %v793
      %1979 = vmatprep.subr.mxu0 0.0
      %1980 = vmatpush1.msra.mxu0 %v792
      %1981 = vmatprep.subr.mxu0 0.0
      %1982 = vmatpush1.msra.mxu0 %v791
      %1983 = vmatprep.subr.mxu0 0.0
      %1984 = vmatpush2.msra.mxu0 0.0
      %1985 = vmatprep.subr.mxu0 0.0
      %1986 = vmatpush2.msra.mxu0 0.0
      %1987 = vmatprep.subr.mxu0 0.0
      %1988 = vmatpush2.msra.mxu0 0.0
      %1989 = vmatprep.subr.mxu0 0.0
      %1990 = vmatpush2.msra.mxu0 0.0
      %1991 = vmatprep.subr.mxu0 0.0
      %1992 = vmatpush2.msra.mxu0 0.0
      %1993 = vmatprep.subr.mxu0 0.0
      %1994 = vmatpush2.msra.mxu0 0.0
      %1995 = vmatprep.subr.mxu0 0.0
      %1996 = vmatpush2.msra.mxu0 0.0
      %1997 = vmatprep.subr.mxu0 0.0
      %1998 = vmatpush2.msra.mxu0 0.0
      %1999 = vmatprep.subr.mxu0 0.0
      %2000 = vmatpush2.msra.mxu0 0.0
      %2001 = vmatprep.subr.mxu0 0.0
      %2002 = vmatpush2.msra.mxu0 0.0
      %2003 = vmatprep.subr.mxu0 0.0
      %2004 = vmatpush2.msra.mxu0 0.0
      %2005 = vmatprep.subr.mxu0 0.0
      %2006 = vmatpush2.msra.mxu0 0.0
      %2007 = vmatprep.subr.mxu0 0.0
      %2008 = vmatpush2.msra.mxu0 0.0
      %2009 = vmatprep.subr.mxu0 0.0
      %2010 = vmatpush2.msra.mxu0 0.0
      %2011 = vmatprep.subr.mxu0 0.0
      %2012 = vmatpush2.msra.mxu0 0.0
      %2013 = vmatprep.subr.mxu0 0.0
      %2014 = vmatpush2.msra.mxu0 0.0
      %2015 = vmatprep.mubr.f32.mxu0 0.0
      %2016 = vmatmul.mubr.f32.gmra.mxu0 %v1568
      %v2017 = vpop.f32.mrf.mxu0
      %v2018 = vadd.f32 0.0, %v2017
      %v2019 = vpop.f32.mrf.mxu0
      %2020 = vmatprep.mubr.f32.mxu0 0.0
      %2021 = vmatmul.mubr.f32.gmra.mxu0 %v1571
      %v2022 = vpop.f32.mrf.mxu0
      %v2023 = vadd.f32 0.0, %v2022
      %v2024 = vpop.f32.mrf.mxu0
      %2025 = vmatprep.mubr.f32.mxu0 0.0
      %2026 = vmatmul.mubr.f32.gmra.mxu0 %v1574
      %v2027 = vpop.f32.mrf.mxu0
      %v2028 = vadd.f32 0.0, %v2027
      %v2029 = vpop.f32.mrf.mxu0
      %2030 = vmatprep.mubr.f32.mxu0 0.0
      %2031 = vmatmul.mubr.f32.gmra.mxu0 %v1577
      %v2032 = vpop.f32.mrf.mxu0
      %v2033 = vadd.f32 0.0, %v2032
      %v2034 = vpop.f32.mrf.mxu0
      %2035 = vmatprep.mubr.f32.mxu0 0.0
      %2036 = vmatmul.mubr.f32.gmra.mxu0 %v1580
      %v2037 = vpop.f32.mrf.mxu0
      %v2038 = vadd.f32 0.0, %v2037
      %v2039 = vpop.f32.mrf.mxu0
      %2040 = vmatprep.mubr.f32.mxu0 0.0
      %2041 = vmatmul.mubr.f32.gmra.mxu0 %v1583
      %v2042 = vpop.f32.mrf.mxu0
      %v2043 = vadd.f32 0.0, %v2042
      %v2044 = vpop.f32.mrf.mxu0
      %2045 = vmatprep.mubr.f32.mxu0 0.0
      %2046 = vmatmul.mubr.f32.gmra.mxu0 %v1586
      %v2047 = vpop.f32.mrf.mxu0
      %v2048 = vadd.f32 0.0, %v2047
      %v2049 = vpop.f32.mrf.mxu0
      %2050 = vmatprep.mubr.f32.mxu0 0.0
      %2051 = vmatmul.mubr.f32.gmra.mxu0 %v1589
      %v2052 = vpop.f32.mrf.mxu0
      %v2053 = vadd.f32 0.0, %v2052
      %v2054 = vpop.f32.mrf.mxu0
      %2055 = vmatprep.mubr.f32.mxu0 0.0
      %2056 = vmatmul.mubr.f32.gmra.mxu0 %v1592
      %v2057 = vpop.f32.mrf.mxu0
      %v2058 = vadd.f32 0.0, %v2057
      %v2059 = vpop.f32.mrf.mxu0
      %2060 = vmatprep.mubr.f32.mxu0 0.0
      %2061 = vmatmul.mubr.f32.gmra.mxu0 %v1595
      %v2062 = vpop.f32.mrf.mxu0
      %v2063 = vadd.f32 0.0, %v2062
      %v2064 = vpop.f32.mrf.mxu0
      %2065 = vmatprep.mubr.f32.mxu0 0.0
      %2066 = vmatmul.mubr.f32.gmra.mxu0 %v1598
      %v2067 = vpop.f32.mrf.mxu0
      %v2068 = vadd.f32 0.0, %v2067
      %v2069 = vpop.f32.mrf.mxu0
      %2070 = vmatprep.mubr.f32.mxu0 0.0
      %2071 = vmatmul.mubr.f32.gmra.mxu0 %v1601
      %v2072 = vpop.f32.mrf.mxu0
      %v2073 = vadd.f32 0.0, %v2072
      %v2074 = vpop.f32.mrf.mxu0
      %2075 = vmatprep.mubr.f32.mxu0 0.0
      %2076 = vmatmul.mubr.f32.gmra.mxu0 %v1604
      %v2077 = vpop.f32.mrf.mxu0
      %v2078 = vadd.f32 0.0, %v2077
      %v2079 = vpop.f32.mrf.mxu0
      %2080 = vmatprep.mubr.f32.mxu0 0.0
      %2081 = vmatmul.mubr.f32.gmra.mxu0 %v1607
      %v2082 = vpop.f32.mrf.mxu0
      %v2083 = vadd.f32 0.0, %v2082
      %v2084 = vpop.f32.mrf.mxu0
      %2085 = vmatprep.mubr.f32.mxu0 0.0
      %2086 = vmatmul.mubr.f32.gmra.mxu0 %v1610
      %v2087 = vpop.f32.mrf.mxu0
      %v2088 = vadd.f32 0.0, %v2087
      %v2089 = vpop.f32.mrf.mxu0
      %2090 = vmatprep.mubr.f32.mxu0 0.0
      %2091 = vmatmul.mubr.f32.gmra.mxu0 %v1613
      %v2092 = vpop.f32.mrf.mxu0
      %v2093 = vadd.f32 0.0, %v2092
      %v2094 = vpop.f32.mrf.mxu0
      %2095 = vmatprep.mubr.f32.mxu0 0.0
      %2096 = vmatmul.mubr.f32.gmra.mxu0 %v1616
      %v2097 = vpop.f32.mrf.mxu0
      %v2098 = vadd.f32 0.0, %v2097
      %v2099 = vpop.f32.mrf.mxu0
      %2100 = vmatprep.mubr.f32.mxu0 0.0
      %2101 = vmatmul.mubr.f32.gmra.mxu0 %v1619
      %v2102 = vpop.f32.mrf.mxu0
      %v2103 = vadd.f32 0.0, %v2102
      %v2104 = vpop.f32.mrf.mxu0
      %2105 = vmatprep.mubr.f32.mxu0 0.0
      %2106 = vmatmul.mubr.f32.gmra.mxu0 %v1622
      %v2107 = vpop.f32.mrf.mxu0
      %v2108 = vadd.f32 0.0, %v2107
      %v2109 = vpop.f32.mrf.mxu0
      %2110 = vmatprep.mubr.f32.mxu0 0.0
      %2111 = vmatmul.mubr.f32.gmra.mxu0 %v1625
      %v2112 = vpop.f32.mrf.mxu0
      %v2113 = vadd.f32 0.0, %v2112
      %v2114 = vpop.f32.mrf.mxu0
      %2115 = vmatprep.mubr.f32.mxu0 0.0
      %2116 = vmatmul.mubr.f32.gmra.mxu0 %v1628
      %v2117 = vpop.f32.mrf.mxu0
      %v2118 = vadd.f32 0.0, %v2117
      %v2119 = vpop.f32.mrf.mxu0
      %2120 = vmatprep.mubr.f32.mxu0 0.0
      %2121 = vmatmul.mubr.f32.gmra.mxu0 %v1631
      %v2122 = vpop.f32.mrf.mxu0
      %v2123 = vadd.f32 0.0, %v2122
      %v2124 = vpop.f32.mrf.mxu0
      %2125 = vmatprep.mubr.f32.mxu0 0.0
      %2126 = vmatmul.mubr.f32.gmra.mxu0 %v1634
      %v2127 = vpop.f32.mrf.mxu0
      %v2128 = vadd.f32 0.0, %v2127
      %v2129 = vpop.f32.mrf.mxu0
      %2130 = vmatprep.mubr.f32.mxu0 0.0
      %2131 = vmatmul.mubr.f32.gmra.mxu0 %v1637
      %v2132 = vpop.f32.mrf.mxu0
      %v2133 = vadd.f32 0.0, %v2132
      %v2134 = vpop.f32.mrf.mxu0
      %2135 = vmatprep.mubr.f32.mxu0 0.0
      %2136 = vmatmul.mubr.f32.gmra.mxu0 %v1640
      %v2137 = vpop.f32.mrf.mxu0
      %v2138 = vadd.f32 0.0, %v2137
      %v2139 = vpop.f32.mrf.mxu0
      %2140 = vmatprep.mubr.f32.mxu0 0.0
      %2141 = vmatmul.mubr.f32.gmra.mxu0 %v1643
      %v2142 = vpop.f32.mrf.mxu0
      %v2143 = vadd.f32 0.0, %v2142
      %v2144 = vpop.f32.mrf.mxu0
      %2145 = vmatprep.mubr.f32.mxu0 0.0
      %2146 = vmatmul.mubr.f32.gmra.mxu0 %v1646
      %v2147 = vpop.f32.mrf.mxu0
      %v2148 = vadd.f32 0.0, %v2147
      %v2149 = vpop.f32.mrf.mxu0
      %2150 = vmatprep.mubr.f32.mxu0 0.0
      %2151 = vmatmul.mubr.f32.gmra.mxu0 %v1649
      %v2152 = vpop.f32.mrf.mxu0
      %v2153 = vadd.f32 0.0, %v2152
      %v2154 = vpop.f32.mrf.mxu0
      %2155 = vmatprep.mubr.f32.mxu0 0.0
      %2156 = vmatmul.mubr.f32.gmra.mxu0 %v1652
      %v2157 = vpop.f32.mrf.mxu0
      %v2158 = vadd.f32 0.0, %v2157
      %v2159 = vpop.f32.mrf.mxu0
      %2160 = vmatprep.mubr.f32.mxu0 0.0
      %2161 = vmatmul.mubr.f32.gmra.mxu0 %v1655
      %v2162 = vpop.f32.mrf.mxu0
      %v2163 = vadd.f32 0.0, %v2162
      %v2164 = vpop.f32.mrf.mxu0
      %2165 = vmatprep.mubr.f32.mxu0 0.0
      %2166 = vmatmul.mubr.f32.gmra.mxu0 %v1658
      %v2167 = vpop.f32.mrf.mxu0
      %v2168 = vadd.f32 0.0, %v2167
      %v2169 = vpop.f32.mrf.mxu0
      %2170 = vmatprep.mubr.f32.mxu0 0.0
      %2171 = vmatmul.mubr.f32.gmra.mxu0 %v1661
      %v2172 = vpop.f32.mrf.mxu0
      %v2173 = vadd.f32 0.0, %v2172
      %v2174 = vpop.f32.mrf.mxu0
      %2175 = vmatprep.mubr.f32.mxu0 0.0
      %2176 = vmatmul.mubr.f32.gmra.mxu0 %v1664
      %v2177 = vpop.f32.mrf.mxu0
      %v2178 = vadd.f32 0.0, %v2177
      %v2179 = vpop.f32.mrf.mxu0
      %2180 = vmatprep.mubr.f32.mxu0 0.0
      %2181 = vmatmul.mubr.f32.gmra.mxu0 %v1667
      %v2182 = vpop.f32.mrf.mxu0
      %v2183 = vadd.f32 0.0, %v2182
      %v2184 = vpop.f32.mrf.mxu0
      %2185 = vmatprep.mubr.f32.mxu0 0.0
      %2186 = vmatmul.mubr.f32.gmra.mxu0 %v1670
      %v2187 = vpop.f32.mrf.mxu0
      %v2188 = vadd.f32 0.0, %v2187
      %v2189 = vpop.f32.mrf.mxu0
      %2190 = vmatprep.mubr.f32.mxu0 0.0
      %2191 = vmatmul.mubr.f32.gmra.mxu0 %v1673
      %v2192 = vpop.f32.mrf.mxu0
      %v2193 = vadd.f32 0.0, %v2192
      %v2194 = vpop.f32.mrf.mxu0
      %2195 = vmatprep.mubr.f32.mxu0 0.0
      %2196 = vmatmul.mubr.f32.gmra.mxu0 %v1676
      %v2197 = vpop.f32.mrf.mxu0
      %v2198 = vadd.f32 0.0, %v2197
      %v2199 = vpop.f32.mrf.mxu0
      %2200 = vmatprep.mubr.f32.mxu0 0.0
      %2201 = vmatmul.mubr.f32.gmra.mxu0 %v1679
      %v2202 = vpop.f32.mrf.mxu0
      %v2203 = vadd.f32 0.0, %v2202
      %v2204 = vpop.f32.mrf.mxu0
      %2205 = vmatprep.mubr.f32.mxu0 0.0
      %2206 = vmatmul.mubr.f32.gmra.mxu0 %v1682
      %v2207 = vpop.f32.mrf.mxu0
      %v2208 = vadd.f32 0.0, %v2207
      %v2209 = vpop.f32.mrf.mxu0
      %2210 = vmatprep.mubr.f32.mxu0 0.0
      %2211 = vmatmul.mubr.f32.gmra.mxu0 %v1685
      %v2212 = vpop.f32.mrf.mxu0
      %v2213 = vadd.f32 0.0, %v2212
      %v2214 = vpop.f32.mrf.mxu0
      %2215 = vmatprep.mubr.f32.mxu0 0.0
      %2216 = vmatmul.mubr.f32.gmra.mxu0 %v1688
      %v2217 = vpop.f32.mrf.mxu0
      %v2218 = vadd.f32 0.0, %v2217
      %v2219 = vpop.f32.mrf.mxu0
      %2220 = vmatprep.mubr.f32.mxu0 0.0
      %2221 = vmatmul.mubr.f32.gmra.mxu0 %v1691
      %v2222 = vpop.f32.mrf.mxu0
      %v2223 = vadd.f32 0.0, %v2222
      %v2224 = vpop.f32.mrf.mxu0
      %2225 = vmatprep.mubr.f32.mxu0 0.0
      %2226 = vmatmul.mubr.f32.gmra.mxu0 %v1694
      %v2227 = vpop.f32.mrf.mxu0
      %v2228 = vadd.f32 0.0, %v2227
      %v2229 = vpop.f32.mrf.mxu0
      %2230 = vmatprep.mubr.f32.mxu0 0.0
      %2231 = vmatmul.mubr.f32.gmra.mxu0 %v1697
      %v2232 = vpop.f32.mrf.mxu0
      %v2233 = vadd.f32 0.0, %v2232
      %v2234 = vpop.f32.mrf.mxu0
      %2235 = vmatprep.mubr.f32.mxu0 0.0
      %2236 = vmatmul.mubr.f32.gmra.mxu0 %v1700
      %v2237 = vpop.f32.mrf.mxu0
      %v2238 = vadd.f32 0.0, %v2237
      %v2239 = vpop.f32.mrf.mxu0
      %2240 = vmatprep.mubr.f32.mxu0 0.0
      %2241 = vmatmul.mubr.f32.gmra.mxu0 %v1703
      %v2242 = vpop.f32.mrf.mxu0
      %v2243 = vadd.f32 0.0, %v2242
      %v2244 = vpop.f32.mrf.mxu0
      %2245 = vmatprep.mubr.f32.mxu0 0.0
      %2246 = vmatmul.mubr.f32.gmra.mxu0 %v1706
      %v2247 = vpop.f32.mrf.mxu0
      %v2248 = vadd.f32 0.0, %v2247
      %v2249 = vpop.f32.mrf.mxu0
      %2250 = vmatprep.mubr.f32.mxu0 0.0
      %2251 = vmatmul.mubr.f32.gmra.mxu0 %v1709
      %v2252 = vpop.f32.mrf.mxu0
      %v2253 = vadd.f32 0.0, %v2252
      %v2254 = vpop.f32.mrf.mxu0
      %2255 = vmatprep.mubr.f32.mxu0 0.0
      %2256 = vmatmul.mubr.f32.gmra.mxu0 %v1712
      %v2257 = vpop.f32.mrf.mxu0
      %v2258 = vadd.f32 0.0, %v2257
      %v2259 = vpop.f32.mrf.mxu0
      %2260 = vmatprep.mubr.f32.mxu0 0.0
      %2261 = vmatmul.mubr.f32.gmra.mxu0 %v1715
      %v2262 = vpop.f32.mrf.mxu0
      %v2263 = vadd.f32 0.0, %v2262
      %v2264 = vpop.f32.mrf.mxu0
      %2265 = vmatprep.mubr.f32.mxu0 0.0
      %2266 = vmatmul.mubr.f32.gmra.mxu0 %v1718
      %v2267 = vpop.f32.mrf.mxu0
      %v2268 = vadd.f32 0.0, %v2267
      %v2269 = vpop.f32.mrf.mxu0
      %2270 = vmatprep.mubr.f32.mxu0 0.0
      %2271 = vmatmul.mubr.f32.gmra.mxu0 %v1721
      %v2272 = vpop.f32.mrf.mxu0
      %v2273 = vadd.f32 0.0, %v2272
      %v2274 = vpop.f32.mrf.mxu0
      %2275 = vmatprep.mubr.f32.mxu0 0.0
      %2276 = vmatmul.mubr.f32.gmra.mxu0 %v1724
      %v2277 = vpop.f32.mrf.mxu0
      %v2278 = vadd.f32 0.0, %v2277
      %v2279 = vpop.f32.mrf.mxu0
      %2280 = vmatprep.mubr.f32.mxu0 0.0
      %2281 = vmatmul.mubr.f32.gmra.mxu0 %v1727
      %v2282 = vpop.f32.mrf.mxu0
      %v2283 = vadd.f32 0.0, %v2282
      %v2284 = vpop.f32.mrf.mxu0
      %2285 = vmatprep.mubr.f32.mxu0 0.0
      %2286 = vmatmul.mubr.f32.gmra.mxu0 %v1730
      %v2287 = vpop.f32.mrf.mxu0
      %v2288 = vadd.f32 0.0, %v2287
      %v2289 = vpop.f32.mrf.mxu0
      %2290 = vmatprep.mubr.f32.mxu0 0.0
      %2291 = vmatmul.mubr.f32.gmra.mxu0 %v1733
      %v2292 = vpop.f32.mrf.mxu0
      %v2293 = vadd.f32 0.0, %v2292
      %v2294 = vpop.f32.mrf.mxu0
      %2295 = vmatprep.mubr.f32.mxu0 0.0
      %2296 = vmatmul.mubr.f32.gmra.mxu0 %v1736
      %v2297 = vpop.f32.mrf.mxu0
      %v2298 = vadd.f32 0.0, %v2297
      %v2299 = vpop.f32.mrf.mxu0
      %2300 = vmatprep.mubr.f32.mxu0 0.0
      %2301 = vmatmul.mubr.f32.gmra.mxu0 %v1739
      %v2302 = vpop.f32.mrf.mxu0
      %v2303 = vadd.f32 0.0, %v2302
      %v2304 = vpop.f32.mrf.mxu0
      %2305 = vmatprep.mubr.f32.mxu0 0.0
      %2306 = vmatmul.mubr.f32.gmra.mxu0 %v1742
      %v2307 = vpop.f32.mrf.mxu0
      %v2308 = vadd.f32 0.0, %v2307
      %v2309 = vpop.f32.mrf.mxu0
      %2310 = vmatprep.mubr.f32.mxu0 0.0
      %2311 = vmatmul.mubr.f32.gmra.mxu0 %v1745
      %v2312 = vpop.f32.mrf.mxu0
      %v2313 = vadd.f32 0.0, %v2312
      %v2314 = vpop.f32.mrf.mxu0
      %2315 = vmatprep.mubr.f32.mxu0 0.0
      %2316 = vmatmul.mubr.f32.gmra.mxu0 %v1748
      %v2317 = vpop.f32.mrf.mxu0
      %v2318 = vadd.f32 0.0, %v2317
      %v2319 = vpop.f32.mrf.mxu0
      %2320 = vmatprep.mubr.f32.mxu0 0.0
      %2321 = vmatmul.mubr.f32.gmra.mxu0 %v1751
      %v2322 = vpop.f32.mrf.mxu0
      %v2323 = vadd.f32 0.0, %v2322
      %v2324 = vpop.f32.mrf.mxu0
      %2325 = vmatprep.mubr.f32.mxu0 0.0
      %2326 = vmatmul.mubr.f32.gmra.mxu0 %v1754
      %v2327 = vpop.f32.mrf.mxu0
      %v2328 = vadd.f32 0.0, %v2327
      %v2329 = vpop.f32.mrf.mxu0
      %2330 = vmatprep.mubr.f32.mxu0 0.0
      %2331 = vmatmul.mubr.f32.gmra.mxu0 %v1757
      %v2332 = vpop.f32.mrf.mxu0
      %v2333 = vadd.f32 0.0, %v2332
      %v2334 = vpop.f32.mrf.mxu0
      %2335 = vmatprep.mubr.f32.mxu0 0.0
      %2336 = vmatmul.mubr.f32.gmra.mxu0 %v1760
      %v2337 = vpop.f32.mrf.mxu0
      %v2338 = vadd.f32 0.0, %v2337
      %v2339 = vpop.f32.mrf.mxu0
      %2340 = vmatprep.mubr.f32.mxu0 0.0
      %2341 = vmatmul.mubr.f32.gmra.mxu0 %v1763
      %v2342 = vpop.f32.mrf.mxu0
      %v2343 = vadd.f32 0.0, %v2342
      %v2344 = vpop.f32.mrf.mxu0
      %2345 = vmatprep.mubr.f32.mxu0 0.0
      %2346 = vmatmul.mubr.f32.gmra.mxu0 %v1766
      %v2347 = vpop.f32.mrf.mxu0
      %v2348 = vadd.f32 0.0, %v2347
      %v2349 = vpop.f32.mrf.mxu0
      %2350 = vmatprep.mubr.f32.mxu0 0.0
      %2351 = vmatmul.mubr.f32.gmra.mxu0 %v1769
      %v2352 = vpop.f32.mrf.mxu0
      %v2353 = vadd.f32 0.0, %v2352
      %v2354 = vpop.f32.mrf.mxu0
      %2355 = vmatprep.mubr.f32.mxu0 0.0
      %2356 = vmatmul.mubr.f32.gmra.mxu0 %v1772
      %v2357 = vpop.f32.mrf.mxu0
      %v2358 = vadd.f32 0.0, %v2357
      %v2359 = vpop.f32.mrf.mxu0
      %2360 = vmatprep.mubr.f32.mxu0 0.0
      %2361 = vmatmul.mubr.f32.gmra.mxu0 %v1775
      %v2362 = vpop.f32.mrf.mxu0
      %v2363 = vadd.f32 0.0, %v2362
      %v2364 = vpop.f32.mrf.mxu0
      %2365 = vmatprep.mubr.f32.mxu0 0.0
      %2366 = vmatmul.mubr.f32.gmra.mxu0 %v1778
      %v2367 = vpop.f32.mrf.mxu0
      %v2368 = vadd.f32 0.0, %v2367
      %v2369 = vpop.f32.mrf.mxu0
      %2370 = vmatprep.mubr.f32.mxu0 0.0
      %2371 = vmatmul.mubr.f32.gmra.mxu0 %v1781
      %v2372 = vpop.f32.mrf.mxu0
      %v2373 = vadd.f32 0.0, %v2372
      %v2374 = vpop.f32.mrf.mxu0
      %2375 = vmatprep.mubr.f32.mxu0 0.0
      %2376 = vmatmul.mubr.f32.gmra.mxu0 %v1784
      %v2377 = vpop.f32.mrf.mxu0
      %v2378 = vadd.f32 0.0, %v2377
      %v2379 = vpop.f32.mrf.mxu0
      %2380 = vmatprep.mubr.f32.mxu0 0.0
      %2381 = vmatmul.mubr.f32.gmra.mxu0 %v1787
      %v2382 = vpop.f32.mrf.mxu0
      %v2383 = vadd.f32 0.0, %v2382
      %v2384 = vpop.f32.mrf.mxu0
      %2385 = vmatprep.mubr.f32.mxu0 0.0
      %2386 = vmatmul.mubr.f32.gmra.mxu0 %v1790
      %v2387 = vpop.f32.mrf.mxu0
      %v2388 = vadd.f32 0.0, %v2387
      %v2389 = vpop.f32.mrf.mxu0
      %2390 = vmatprep.mubr.f32.mxu0 0.0
      %2391 = vmatmul.mubr.f32.gmra.mxu0 %v1793
      %v2392 = vpop.f32.mrf.mxu0
      %v2393 = vadd.f32 0.0, %v2392
      %v2394 = vpop.f32.mrf.mxu0
      %2395 = vmatprep.mubr.f32.mxu0 0.0
      %2396 = vmatmul.mubr.f32.gmra.mxu0 %v1796
      %v2397 = vpop.f32.mrf.mxu0
      %v2398 = vadd.f32 0.0, %v2397
      %v2399 = vpop.f32.mrf.mxu0
      %2400 = vmatprep.mubr.f32.mxu0 0.0
      %2401 = vmatmul.mubr.f32.gmra.mxu0 %v1799
      %v2402 = vpop.f32.mrf.mxu0
      %v2403 = vadd.f32 0.0, %v2402
      %v2404 = vpop.f32.mrf.mxu0
      %2405 = vmatprep.mubr.f32.mxu0 0.0
      %2406 = vmatmul.mubr.f32.gmra.mxu0 %v1802
      %v2407 = vpop.f32.mrf.mxu0
      %v2408 = vadd.f32 0.0, %v2407
      %v2409 = vpop.f32.mrf.mxu0
      %2410 = vmatprep.mubr.f32.mxu0 0.0
      %2411 = vmatmul.mubr.f32.gmra.mxu0 %v1805
      %v2412 = vpop.f32.mrf.mxu0
      %v2413 = vadd.f32 0.0, %v2412
      %v2414 = vpop.f32.mrf.mxu0
      %2415 = vmatprep.mubr.f32.mxu0 0.0
      %2416 = vmatmul.mubr.f32.gmra.mxu0 %v1808
      %v2417 = vpop.f32.mrf.mxu0
      %v2418 = vadd.f32 0.0, %v2417
      %v2419 = vpop.f32.mrf.mxu0
      %2420 = vmatprep.mubr.f32.mxu0 0.0
      %2421 = vmatmul.mubr.f32.gmra.mxu0 %v1811
      %v2422 = vpop.f32.mrf.mxu0
      %v2423 = vadd.f32 0.0, %v2422
      %v2424 = vpop.f32.mrf.mxu0
      %2425 = vmatprep.mubr.f32.mxu0 0.0
      %2426 = vmatmul.mubr.f32.gmra.mxu0 %v1814
      %v2427 = vpop.f32.mrf.mxu0
      %v2428 = vadd.f32 0.0, %v2427
      %v2429 = vpop.f32.mrf.mxu0
      %2430 = vmatprep.mubr.f32.mxu0 0.0
      %2431 = vmatmul.mubr.f32.gmra.mxu0 %v1817
      %v2432 = vpop.f32.mrf.mxu0
      %v2433 = vadd.f32 0.0, %v2432
      %v2434 = vpop.f32.mrf.mxu0
      %2435 = vmatprep.mubr.f32.mxu0 0.0
      %2436 = vmatmul.mubr.f32.gmra.mxu0 %v1820
      %v2437 = vpop.f32.mrf.mxu0
      %v2438 = vadd.f32 0.0, %v2437
      %v2439 = vpop.f32.mrf.mxu0
      %2440 = vmatprep.mubr.f32.mxu0 0.0
      %2441 = vmatmul.mubr.f32.gmra.mxu0 %v1823
      %v2442 = vpop.f32.mrf.mxu0
      %v2443 = vadd.f32 0.0, %v2442
      %v2444 = vpop.f32.mrf.mxu0
      %2445 = vmatprep.mubr.f32.mxu0 0.0
      %2446 = vmatmul.mubr.f32.gmra.mxu0 %v1826
      %v2447 = vpop.f32.mrf.mxu0
      %v2448 = vadd.f32 0.0, %v2447
      %v2449 = vpop.f32.mrf.mxu0
      %2450 = vmatprep.mubr.f32.mxu0 0.0
      %2451 = vmatmul.mubr.f32.gmra.mxu0 %v1829
      %v2452 = vpop.f32.mrf.mxu0
      %v2453 = vadd.f32 0.0, %v2452
      %v2454 = vpop.f32.mrf.mxu0
      %2455 = vmatprep.mubr.f32.mxu0 0.0
      %2456 = vmatmul.mubr.f32.gmra.mxu0 %v1832
      %v2457 = vpop.f32.mrf.mxu0
      %v2458 = vadd.f32 0.0, %v2457
      %v2459 = vpop.f32.mrf.mxu0
      %2460 = vmatprep.mubr.f32.mxu0 0.0
      %2461 = vmatmul.mubr.f32.gmra.mxu0 %v1835
      %v2462 = vpop.f32.mrf.mxu0
      %v2463 = vadd.f32 0.0, %v2462
      %v2464 = vpop.f32.mrf.mxu0
      %2465 = vmatprep.mubr.f32.mxu0 0.0
      %2466 = vmatmul.mubr.f32.gmra.mxu0 %v1838
      %v2467 = vpop.f32.mrf.mxu0
      %v2468 = vadd.f32 0.0, %v2467
      %v2469 = vpop.f32.mrf.mxu0
      %2470 = vmatprep.mubr.f32.mxu0 0.0
      %2471 = vmatmul.mubr.f32.gmra.mxu0 %v1841
      %v2472 = vpop.f32.mrf.mxu0
      %v2473 = vadd.f32 0.0, %v2472
      %v2474 = vpop.f32.mrf.mxu0
      %2475 = vmatprep.mubr.f32.mxu0 0.0
      %2476 = vmatmul.mubr.f32.gmra.mxu0 %v1844
      %v2477 = vpop.f32.mrf.mxu0
      %v2478 = vadd.f32 0.0, %v2477
      %v2479 = vpop.f32.mrf.mxu0
      %2480 = vmatprep.mubr.f32.mxu0 0.0
      %2481 = vmatmul.mubr.f32.gmra.mxu0 %v1847
      %v2482 = vpop.f32.mrf.mxu0
      %v2483 = vadd.f32 0.0, %v2482
      %v2484 = vpop.f32.mrf.mxu0
      %2485 = vmatprep.mubr.f32.mxu0 0.0
      %2486 = vmatmul.mubr.f32.gmra.mxu0 %v1850
      %v2487 = vpop.f32.mrf.mxu0
      %v2488 = vadd.f32 0.0, %v2487
      %v2489 = vpop.f32.mrf.mxu0
      %2490 = vmatprep.mubr.f32.mxu0 0.0
      %2491 = vmatmul.mubr.f32.gmra.mxu0 %v1853
      %v2492 = vpop.f32.mrf.mxu0
      %v2493 = vadd.f32 0.0, %v2492
      %v2494 = vpop.f32.mrf.mxu0
      %2495 = vmatprep.mubr.f32.mxu0 0.0
      %2496 = vmatmul.mubr.f32.gmra.mxu0 %v1856
      %v2497 = vpop.f32.mrf.mxu0
      %v2498 = vadd.f32 0.0, %v2497
      %v2499 = vpop.f32.mrf.mxu0
      %2500 = vmatprep.mubr.f32.mxu0 0.0
      %2501 = vmatmul.mubr.f32.gmra.mxu0 %v1859
      %v2502 = vpop.f32.mrf.mxu0
      %v2503 = vadd.f32 0.0, %v2502
      %v2504 = vpop.f32.mrf.mxu0
      %2505 = vmatprep.mubr.f32.mxu0 0.0
      %2506 = vmatmul.mubr.f32.gmra.mxu0 %v1862
      %v2507 = vpop.f32.mrf.mxu0
      %v2508 = vadd.f32 0.0, %v2507
      %v2509 = vpop.f32.mrf.mxu0
      %2510 = vmatprep.mubr.f32.mxu0 0.0
      %2511 = vmatmul.mubr.f32.gmra.mxu0 %v1865
      %v2512 = vpop.f32.mrf.mxu0
      %v2513 = vadd.f32 0.0, %v2512
      %v2514 = vpop.f32.mrf.mxu0
      %2515 = vmatprep.mubr.f32.mxu0 0.0
      %2516 = vmatmul.mubr.f32.gmra.mxu0 %v1868
      %v2517 = vpop.f32.mrf.mxu0
      %v2518 = vadd.f32 0.0, %v2517
      %v2519 = vpop.f32.mrf.mxu0
      %2520 = vmatprep.mubr.f32.mxu0 0.0
      %2521 = vmatmul.mubr.f32.gmra.mxu0 %v1871
      %v2522 = vpop.f32.mrf.mxu0
      %v2523 = vadd.f32 0.0, %v2522
      %v2524 = vpop.f32.mrf.mxu0
      %2525 = vmatprep.mubr.f32.mxu0 0.0
      %2526 = vmatmul.mubr.f32.gmra.mxu0 %v1874
      %v2527 = vpop.f32.mrf.mxu0
      %v2528 = vadd.f32 0.0, %v2527
      %v2529 = vpop.f32.mrf.mxu0
      %2530 = vmatprep.mubr.f32.mxu0 0.0
      %2531 = vmatmul.mubr.f32.gmra.mxu0 %v1877
      %v2532 = vpop.f32.mrf.mxu0
      %v2533 = vadd.f32 0.0, %v2532
      %v2534 = vpop.f32.mrf.mxu0
      %2535 = vmatprep.mubr.f32.mxu0 0.0
      %2536 = vmatmul.mubr.f32.gmra.mxu0 %v1880
      %v2537 = vpop.f32.mrf.mxu0
      %v2538 = vadd.f32 0.0, %v2537
      %v2539 = vpop.f32.mrf.mxu0
      %2540 = vmatprep.mubr.f32.mxu0 0.0
      %2541 = vmatmul.mubr.f32.gmra.mxu0 %v1883
      %v2542 = vpop.f32.mrf.mxu0
      %v2543 = vadd.f32 0.0, %v2542
      %v2544 = vpop.f32.mrf.mxu0
      %2545 = vmatprep.mubr.f32.mxu0 0.0
      %2546 = vmatmul.mubr.f32.gmra.mxu0 %v1886
      %v2547 = vpop.f32.mrf.mxu0
      %v2548 = vadd.f32 0.0, %v2547
      %v2549 = vpop.f32.mrf.mxu0
      %2550 = vmatprep.mubr.f32.mxu0 0.0
      %2551 = vmatmul.mubr.f32.gmra.mxu0 %v1889
      %v2552 = vpop.f32.mrf.mxu0
      %v2553 = vadd.f32 0.0, %v2552
      %v2554 = vpop.f32.mrf.mxu0
      %2555 = vmatprep.mubr.f32.mxu0 0.0
      %2556 = vmatmul.mubr.f32.gmra.mxu0 %v1892
      %v2557 = vpop.f32.mrf.mxu0
      %v2558 = vadd.f32 0.0, %v2557
      %v2559 = vpop.f32.mrf.mxu0
      %2560 = vmatprep.mubr.f32.mxu0 0.0
      %2561 = vmatmul.mubr.f32.gmra.mxu0 %v1895
      %v2562 = vpop.f32.mrf.mxu0
      %v2563 = vadd.f32 0.0, %v2562
      %v2564 = vpop.f32.mrf.mxu0
      %2565 = vmatprep.mubr.f32.mxu0 0.0
      %2566 = vmatmul.mubr.f32.gmra.mxu0 %v1898
      %v2567 = vpop.f32.mrf.mxu0
      %v2568 = vadd.f32 0.0, %v2567
      %v2569 = vpop.f32.mrf.mxu0
      %2570 = vmatprep.mubr.f32.mxu0 0.0
      %2571 = vmatmul.mubr.f32.gmra.mxu0 %v1901
      %v2572 = vpop.f32.mrf.mxu0
      %v2573 = vadd.f32 0.0, %v2572
      %v2574 = vpop.f32.mrf.mxu0
      %2575 = vmatprep.mubr.f32.mxu0 0.0
      %2576 = vmatmul.mubr.f32.gmra.mxu0 %v1904
      %v2577 = vpop.f32.mrf.mxu0
      %v2578 = vadd.f32 0.0, %v2577
      %v2579 = vpop.f32.mrf.mxu0
      %2580 = vmatprep.mubr.f32.mxu0 0.0
      %2581 = vmatmul.mubr.f32.gmra.mxu0 %v1907
      %v2582 = vpop.f32.mrf.mxu0
      %v2583 = vadd.f32 0.0, %v2582
      %v2584 = vpop.f32.mrf.mxu0
      %2585 = vmatprep.mubr.f32.mxu0 0.0
      %2586 = vmatmul.mubr.f32.gmra.mxu0 %v1910
      %v2587 = vpop.f32.mrf.mxu0
      %v2588 = vadd.f32 0.0, %v2587
      %v2589 = vpop.f32.mrf.mxu0
      %2590 = vmatprep.mubr.f32.mxu0 0.0
      %2591 = vmatmul.mubr.f32.gmra.mxu0 %v1913
      %v2592 = vpop.f32.mrf.mxu0
      %v2593 = vadd.f32 0.0, %v2592
      %v2594 = vpop.f32.mrf.mxu0
      %2595 = vmatprep.mubr.f32.mxu0 0.0
      %2596 = vmatmul.mubr.f32.gmra.mxu0 %v1916
      %v2597 = vpop.f32.mrf.mxu0
      %v2598 = vadd.f32 0.0, %v2597
      %v2599 = vpop.f32.mrf.mxu0
      %2600 = vmatprep.mubr.f32.mxu0 0.0
      %2601 = vmatmul.mubr.f32.gmra.mxu0 %v1919
      %v2602 = vpop.f32.mrf.mxu0
      %v2603 = vadd.f32 0.0, %v2602
      %v2604 = vpop.f32.mrf.mxu0
      %2605 = vmatprep.mubr.f32.mxu0 0.0
      %2606 = vmatmul.mubr.f32.gmra.mxu0 %v1922
      %v2607 = vpop.f32.mrf.mxu0
      %v2608 = vadd.f32 0.0, %v2607
      %v2609 = vpop.f32.mrf.mxu0
      %2610 = vmatprep.mubr.f32.mxu0 0.0
      %2611 = vmatmul.mubr.f32.gmra.mxu0 %v1925
      %v2612 = vpop.f32.mrf.mxu0
      %v2613 = vadd.f32 0.0, %v2612
      %v2614 = vpop.f32.mrf.mxu0
      %2615 = vmatprep.mubr.f32.mxu0 0.0
      %2616 = vmatmul.mubr.f32.gmra.mxu0 %v1928
      %v2617 = vpop.f32.mrf.mxu0
      %v2618 = vadd.f32 0.0, %v2617
      %v2619 = vpop.f32.mrf.mxu0
      %2620 = vmatprep.mubr.f32.mxu0 0.0
      %2621 = vmatmul.mubr.f32.gmra.mxu0 %v1931
      %v2622 = vpop.f32.mrf.mxu0
      %v2623 = vadd.f32 0.0, %v2622
      %v2624 = vpop.f32.mrf.mxu0
      %2625 = vmatprep.mubr.f32.mxu0 0.0
      %2626 = vmatmul.mubr.f32.gmra.mxu0 %v1934
      %v2627 = vpop.f32.mrf.mxu0
      %v2628 = vadd.f32 0.0, %v2627
      %v2629 = vpop.f32.mrf.mxu0
      %2630 = vmatprep.mubr.f32.mxu0 0.0
      %2631 = vmatmul.mubr.f32.gmra.mxu0 %v1937
      %v2632 = vpop.f32.mrf.mxu0
      %v2633 = vadd.f32 0.0, %v2632
      %v2634 = vpop.f32.mrf.mxu0
      %2635 = vmatprep.mubr.f32.mxu0 0.0
      %2636 = vmatmul.mubr.f32.gmra.mxu0 %v1940
      %v2637 = vpop.f32.mrf.mxu0
      %v2638 = vadd.f32 0.0, %v2637
      %v2639 = vpop.f32.mrf.mxu0
      %2640 = vmatprep.mubr.f32.mxu0 0.0
      %2641 = vmatmul.mubr.f32.gmra.mxu0 %v1943
      %v2642 = vpop.f32.mrf.mxu0
      %v2643 = vadd.f32 0.0, %v2642
      %v2644 = vpop.f32.mrf.mxu0
      %2645 = vmatprep.mubr.f32.mxu0 0.0
      %2646 = vmatmul.mubr.f32.gmra.mxu0 %v1946
      %v2647 = vpop.f32.mrf.mxu0
      %v2648 = vadd.f32 0.0, %v2647
      %v2649 = vpop.f32.mrf.mxu0
      %2650 = vmatprep.mubr.f32.mxu0 0.0
      %2651 = vmatmul.mubr.f32.gmra.mxu0 %v1949
      %v2652 = vpop.f32.mrf.mxu0
      %v2653 = vadd.f32 0.0, %v2652
      %v2654 = vpop.f32.mrf.mxu0
      %2655 = vdwg.mxu0
      %v2656 = vld [vmem:[%s4] sm:$0xff]
      %v2657 = vld [vmem:[%s4 + $0x8] sm:$0xff]
      %v2658 = vld [vmem:[%s4 + $0x10] sm:$0xff]
      %v2659 = vld [vmem:[%s4 + $0x18] sm:$0xff]
      %v2660 = vld [vmem:[%s5] sm:$0xff]
      %v2661 = vld [vmem:[%s5 + $0x8] sm:$0xff]
      %v2662 = vld [vmem:[%s5 + $0x10] sm:$0xff]
      %v2663 = vld [vmem:[%s5 + $0x18] sm:$0xff]
      %vm2664 = vcmask 261120
      %v2666 = vsel %vm2664, %v407, 0
      %v2669 = vsel %vm2664, %v408, 0
      %v2672 = vsel %vm2664, %v409, 0
      %v2675 = vsel %vm2664, %v410, 0
      %v2678 = vsel %vm2664, %v411, 0
      %v2681 = vsel %vm2664, %v412, 0
      %v2684 = vsel %vm2664, %v413, 0
      %v2687 = vsel %vm2664, %v414, 0
      %v2690 = vsel %vm2664, %v415, 0
      %v2693 = vsel %vm2664, %v416, 0
      %v2696 = vsel %vm2664, %v417, 0
      %v2699 = vsel %vm2664, %v418, 0
      %v2702 = vsel %vm2664, %v419, 0
      %v2705 = vsel %vm2664, %v420, 0
      %v2708 = vsel %vm2664, %v421, 0
      %v2711 = vsel %vm2664, %v422, 0
      %v2714 = vsel %vm2664, %v423, 0
      %v2717 = vsel %vm2664, %v424, 0
      %v2720 = vsel %vm2664, %v425, 0
      %v2723 = vsel %vm2664, %v426, 0
      %v2726 = vsel %vm2664, %v427, 0
      %v2729 = vsel %vm2664, %v428, 0
      %v2732 = vsel %vm2664, %v429, 0
      %v2735 = vsel %vm2664, %v430, 0
      %v2738 = vsel %vm2664, %v431, 0
      %v2741 = vsel %vm2664, %v432, 0
      %v2744 = vsel %vm2664, %v433, 0
      %v2747 = vsel %vm2664, %v434, 0
      %v2750 = vsel %vm2664, %v435, 0
      %v2753 = vsel %vm2664, %v436, 0
      %v2756 = vsel %vm2664, %v437, 0
      %v2759 = vsel %vm2664, %v438, 0
      %v2762 = vsel %vm2664, %v439, 0
      %v2765 = vsel %vm2664, %v440, 0
      %v2768 = vsel %vm2664, %v441, 0
      %v2771 = vsel %vm2664, %v442, 0
      %v2774 = vsel %vm2664, %v443, 0
      %v2777 = vsel %vm2664, %v444, 0
      %v2780 = vsel %vm2664, %v445, 0
      %v2783 = vsel %vm2664, %v446, 0
      %v2786 = vsel %vm2664, %v447, 0
      %v2789 = vsel %vm2664, %v448, 0
      %v2792 = vsel %vm2664, %v449, 0
      %v2795 = vsel %vm2664, %v450, 0
      %v2798 = vsel %vm2664, %v451, 0
      %v2801 = vsel %vm2664, %v452, 0
      %v2804 = vsel %vm2664, %v453, 0
      %v2807 = vsel %vm2664, %v454, 0
      %v2810 = vsel %vm2664, %v455, 0
      %v2813 = vsel %vm2664, %v456, 0
      %v2816 = vsel %vm2664, %v457, 0
      %v2819 = vsel %vm2664, %v458, 0
      %v2822 = vsel %vm2664, %v459, 0
      %v2825 = vsel %vm2664, %v460, 0
      %v2828 = vsel %vm2664, %v461, 0
      %v2831 = vsel %vm2664, %v462, 0
      %v2834 = vsel %vm2664, %v463, 0
      %v2837 = vsel %vm2664, %v464, 0
      %v2840 = vsel %vm2664, %v465, 0
      %v2843 = vsel %vm2664, %v466, 0
      %v2846 = vsel %vm2664, %v467, 0
      %v2849 = vsel %vm2664, %v468, 0
      %v2852 = vsel %vm2664, %v469, 0
      %v2855 = vsel %vm2664, %v470, 0
      %v2858 = vsel %vm2664, %v471, 0
      %v2861 = vsel %vm2664, %v472, 0
      %v2864 = vsel %vm2664, %v473, 0
      %v2867 = vsel %vm2664, %v474, 0
      %v2870 = vsel %vm2664, %v475, 0
      %v2873 = vsel %vm2664, %v476, 0
      %v2876 = vsel %vm2664, %v477, 0
      %v2879 = vsel %vm2664, %v478, 0
      %v2882 = vsel %vm2664, %v479, 0
      %v2885 = vsel %vm2664, %v480, 0
      %v2888 = vsel %vm2664, %v481, 0
      %v2891 = vsel %vm2664, %v482, 0
      %v2894 = vsel %vm2664, %v483, 0
      %v2897 = vsel %vm2664, %v484, 0
      %v2900 = vsel %vm2664, %v485, 0
      %v2903 = vsel %vm2664, %v486, 0
      %v2906 = vsel %vm2664, %v487, 0
      %v2909 = vsel %vm2664, %v488, 0
      %v2912 = vsel %vm2664, %v489, 0
      %v2915 = vsel %vm2664, %v490, 0
      %v2918 = vsel %vm2664, %v491, 0
      %v2921 = vsel %vm2664, %v492, 0
      %v2924 = vsel %vm2664, %v493, 0
      %v2927 = vsel %vm2664, %v494, 0
      %v2930 = vsel %vm2664, %v495, 0
      %v2933 = vsel %vm2664, %v496, 0
      %v2936 = vsel %vm2664, %v497, 0
      %v2939 = vsel %vm2664, %v498, 0
      %v2942 = vsel %vm2664, %v499, 0
      %v2945 = vsel %vm2664, %v500, 0
      %v2948 = vsel %vm2664, %v501, 0
      %v2951 = vsel %vm2664, %v502, 0
      %v2954 = vsel %vm2664, %v503, 0
      %v2957 = vsel %vm2664, %v504, 0
      %v2960 = vsel %vm2664, %v505, 0
      %v2963 = vsel %vm2664, %v506, 0
      %v2966 = vsel %vm2664, %v507, 0
      %v2969 = vsel %vm2664, %v508, 0
      %v2972 = vsel %vm2664, %v509, 0
      %v2975 = vsel %vm2664, %v510, 0
      %v2978 = vsel %vm2664, %v511, 0
      %v2981 = vsel %vm2664, %v512, 0
      %v2984 = vsel %vm2664, %v513, 0
      %v2987 = vsel %vm2664, %v514, 0
      %v2990 = vsel %vm2664, %v515, 0
      %v2993 = vsel %vm2664, %v516, 0
      %v2996 = vsel %vm2664, %v517, 0
      %v2999 = vsel %vm2664, %v518, 0
      %v3002 = vsel %vm2664, %v519, 0
      %v3005 = vsel %vm2664, %v520, 0
      %v3008 = vsel %vm2664, %v521, 0
      %v3011 = vsel %vm2664, %v522, 0
      %v3014 = vsel %vm2664, %v523, 0
      %v3017 = vsel %vm2664, %v524, 0
      %v3020 = vsel %vm2664, %v525, 0
      %v3023 = vsel %vm2664, %v526, 0
      %v3026 = vsel %vm2664, %v527, 0
      %v3029 = vsel %vm2664, %v528, 0
      %v3032 = vsel %vm2664, %v529, 0
      %v3035 = vsel %vm2664, %v530, 0
      %v3038 = vsel %vm2664, %v531, 0
      %v3041 = vsel %vm2664, %v532, 0
      %v3044 = vsel %vm2664, %v533, 0
      %v3047 = vsel %vm2664, %v534, 0
      %3049 = vmatprep.subr.mxu0 0.0
      %3050 = vmatpush1.msra.mxu0 0.0
      %3051 = vmatprep.subr.mxu0 0.0
      %3052 = vmatpush1.msra.mxu0 0.0
      %3053 = vmatprep.subr.mxu0 0.0
      %3054 = vmatpush1.msra.mxu0 0.0
      %3055 = vmatprep.subr.mxu0 0.0
      %3056 = vmatpush1.msra.mxu0 0.0
      %3057 = vmatprep.subr.mxu0 0.0
      %3058 = vmatpush1.msra.mxu0 0.0
      %3059 = vmatprep.subr.mxu0 0.0
      %3060 = vmatpush1.msra.mxu0 0.0
      %3061 = vmatprep.subr.mxu0 0.0
      %3062 = vmatpush1.msra.mxu0 0.0
      %3063 = vmatprep.subr.mxu0 0.0
      %3064 = vmatpush1.msra.mxu0 0.0
      %3065 = vmatprep.subr.mxu0 0.0
      %3066 = vmatpush1.msra.mxu0 0.0
      %3067 = vmatprep.subr.mxu0 0.0
      %3068 = vmatpush1.msra.mxu0 0.0
      %3069 = vmatprep.subr.mxu0 0.0
      %3070 = vmatpush1.msra.mxu0 0.0
      %3071 = vmatprep.subr.mxu0 0.0
      %3072 = vmatpush1.msra.mxu0 0.0
      %3073 = vmatprep.subr.mxu0 0.0
      %3074 = vmatpush1.msra.mxu0 %v2663
      %3075 = vmatprep.subr.mxu0 0.0
      %3076 = vmatpush1.msra.mxu0 %v2662
      %3077 = vmatprep.subr.mxu0 0.0
      %3078 = vmatpush1.msra.mxu0 %v2661
      %3079 = vmatprep.subr.mxu0 0.0
      %3080 = vmatpush1.msra.mxu0 %v2660
      %3081 = vmatprep.subr.mxu0 0.0
      %3082 = vmatpush2.msra.mxu0 0.0
      %3083 = vmatprep.subr.mxu0 0.0
      %3084 = vmatpush2.msra.mxu0 0.0
      %3085 = vmatprep.subr.mxu0 0.0
      %3086 = vmatpush2.msra.mxu0 0.0
      %3087 = vmatprep.subr.mxu0 0.0
      %3088 = vmatpush2.msra.mxu0 0.0
      %3089 = vmatprep.subr.mxu0 0.0
      %3090 = vmatpush2.msra.mxu0 0.0
      %3091 = vmatprep.subr.mxu0 0.0
      %3092 = vmatpush2.msra.mxu0 0.0
      %3093 = vmatprep.subr.mxu0 0.0
      %3094 = vmatpush2.msra.mxu0 0.0
      %3095 = vmatprep.subr.mxu0 0.0
      %3096 = vmatpush2.msra.mxu0 0.0
      %3097 = vmatprep.subr.mxu0 0.0
      %3098 = vmatpush2.msra.mxu0 0.0
      %3099 = vmatprep.subr.mxu0 0.0
      %3100 = vmatpush2.msra.mxu0 0.0
      %3101 = vmatprep.subr.mxu0 0.0
      %3102 = vmatpush2.msra.mxu0 0.0
      %3103 = vmatprep.subr.mxu0 0.0
      %3104 = vmatpush2.msra.mxu0 0.0
      %3105 = vmatprep.subr.mxu0 0.0
      %3106 = vmatpush2.msra.mxu0 0.0
      %3107 = vmatprep.subr.mxu0 0.0
      %3108 = vmatpush2.msra.mxu0 0.0
      %3109 = vmatprep.subr.mxu0 0.0
      %3110 = vmatpush2.msra.mxu0 0.0
      %3111 = vmatprep.subr.mxu0 0.0
      %3112 = vmatpush2.msra.mxu0 0.0
      %3113 = vmatprep.mubr.f32.mxu0 0.0
      %3114 = vmatmul.mubr.f32.gmra.mxu0 %v2666
      %v3115 = vpop.f32.mrf.mxu0
      %v3116 = vadd.f32 0.0, %v3115
      %v3117 = vpop.f32.mrf.mxu0
      %3118 = vmatprep.mubr.f32.mxu0 0.0
      %3119 = vmatmul.mubr.f32.gmra.mxu0 %v2669
      %v3120 = vpop.f32.mrf.mxu0
      %v3121 = vadd.f32 0.0, %v3120
      %v3122 = vpop.f32.mrf.mxu0
      %3123 = vmatprep.mubr.f32.mxu0 0.0
      %3124 = vmatmul.mubr.f32.gmra.mxu0 %v2672
      %v3125 = vpop.f32.mrf.mxu0
      %v3126 = vadd.f32 0.0, %v3125
      %v3127 = vpop.f32.mrf.mxu0
      %3128 = vmatprep.mubr.f32.mxu0 0.0
      %3129 = vmatmul.mubr.f32.gmra.mxu0 %v2675
      %v3130 = vpop.f32.mrf.mxu0
      %v3131 = vadd.f32 0.0, %v3130
      %v3132 = vpop.f32.mrf.mxu0
      %3133 = vmatprep.mubr.f32.mxu0 0.0
      %3134 = vmatmul.mubr.f32.gmra.mxu0 %v2678
      %v3135 = vpop.f32.mrf.mxu0
      %v3136 = vadd.f32 0.0, %v3135
      %v3137 = vpop.f32.mrf.mxu0
      %3138 = vmatprep.mubr.f32.mxu0 0.0
      %3139 = vmatmul.mubr.f32.gmra.mxu0 %v2681
      %v3140 = vpop.f32.mrf.mxu0
      %v3141 = vadd.f32 0.0, %v3140
      %v3142 = vpop.f32.mrf.mxu0
      %3143 = vmatprep.mubr.f32.mxu0 0.0
      %3144 = vmatmul.mubr.f32.gmra.mxu0 %v2684
      %v3145 = vpop.f32.mrf.mxu0
      %v3146 = vadd.f32 0.0, %v3145
      %v3147 = vpop.f32.mrf.mxu0
      %3148 = vmatprep.mubr.f32.mxu0 0.0
      %3149 = vmatmul.mubr.f32.gmra.mxu0 %v2687
      %v3150 = vpop.f32.mrf.mxu0
      %v3151 = vadd.f32 0.0, %v3150
      %v3152 = vpop.f32.mrf.mxu0
      %3153 = vmatprep.mubr.f32.mxu0 0.0
      %3154 = vmatmul.mubr.f32.gmra.mxu0 %v2690
      %v3155 = vpop.f32.mrf.mxu0
      %v3156 = vadd.f32 0.0, %v3155
      %v3157 = vpop.f32.mrf.mxu0
      %3158 = vmatprep.mubr.f32.mxu0 0.0
      %3159 = vmatmul.mubr.f32.gmra.mxu0 %v2693
      %v3160 = vpop.f32.mrf.mxu0
      %v3161 = vadd.f32 0.0, %v3160
      %v3162 = vpop.f32.mrf.mxu0
      %3163 = vmatprep.mubr.f32.mxu0 0.0
      %3164 = vmatmul.mubr.f32.gmra.mxu0 %v2696
      %v3165 = vpop.f32.mrf.mxu0
      %v3166 = vadd.f32 0.0, %v3165
      %v3167 = vpop.f32.mrf.mxu0
      %3168 = vmatprep.mubr.f32.mxu0 0.0
      %3169 = vmatmul.mubr.f32.gmra.mxu0 %v2699
      %v3170 = vpop.f32.mrf.mxu0
      %v3171 = vadd.f32 0.0, %v3170
      %v3172 = vpop.f32.mrf.mxu0
      %3173 = vmatprep.mubr.f32.mxu0 0.0
      %3174 = vmatmul.mubr.f32.gmra.mxu0 %v2702
      %v3175 = vpop.f32.mrf.mxu0
      %v3176 = vadd.f32 0.0, %v3175
      %v3177 = vpop.f32.mrf.mxu0
      %3178 = vmatprep.mubr.f32.mxu0 0.0
      %3179 = vmatmul.mubr.f32.gmra.mxu0 %v2705
      %v3180 = vpop.f32.mrf.mxu0
      %v3181 = vadd.f32 0.0, %v3180
      %v3182 = vpop.f32.mrf.mxu0
      %3183 = vmatprep.mubr.f32.mxu0 0.0
      %3184 = vmatmul.mubr.f32.gmra.mxu0 %v2708
      %v3185 = vpop.f32.mrf.mxu0
      %v3186 = vadd.f32 0.0, %v3185
      %v3187 = vpop.f32.mrf.mxu0
      %3188 = vmatprep.mubr.f32.mxu0 0.0
      %3189 = vmatmul.mubr.f32.gmra.mxu0 %v2711
      %v3190 = vpop.f32.mrf.mxu0
      %v3191 = vadd.f32 0.0, %v3190
      %v3192 = vpop.f32.mrf.mxu0
      %3193 = vmatprep.mubr.f32.mxu0 0.0
      %3194 = vmatmul.mubr.f32.gmra.mxu0 %v2714
      %v3195 = vpop.f32.mrf.mxu0
      %v3196 = vadd.f32 0.0, %v3195
      %v3197 = vpop.f32.mrf.mxu0
      %3198 = vmatprep.mubr.f32.mxu0 0.0
      %3199 = vmatmul.mubr.f32.gmra.mxu0 %v2717
      %v3200 = vpop.f32.mrf.mxu0
      %v3201 = vadd.f32 0.0, %v3200
      %v3202 = vpop.f32.mrf.mxu0
      %3203 = vmatprep.mubr.f32.mxu0 0.0
      %3204 = vmatmul.mubr.f32.gmra.mxu0 %v2720
      %v3205 = vpop.f32.mrf.mxu0
      %v3206 = vadd.f32 0.0, %v3205
      %v3207 = vpop.f32.mrf.mxu0
      %3208 = vmatprep.mubr.f32.mxu0 0.0
      %3209 = vmatmul.mubr.f32.gmra.mxu0 %v2723
      %v3210 = vpop.f32.mrf.mxu0
      %v3211 = vadd.f32 0.0, %v3210
      %v3212 = vpop.f32.mrf.mxu0
      %3213 = vmatprep.mubr.f32.mxu0 0.0
      %3214 = vmatmul.mubr.f32.gmra.mxu0 %v2726
      %v3215 = vpop.f32.mrf.mxu0
      %v3216 = vadd.f32 0.0, %v3215
      %v3217 = vpop.f32.mrf.mxu0
      %3218 = vmatprep.mubr.f32.mxu0 0.0
      %3219 = vmatmul.mubr.f32.gmra.mxu0 %v2729
      %v3220 = vpop.f32.mrf.mxu0
      %v3221 = vadd.f32 0.0, %v3220
      %v3222 = vpop.f32.mrf.mxu0
      %3223 = vmatprep.mubr.f32.mxu0 0.0
      %3224 = vmatmul.mubr.f32.gmra.mxu0 %v2732
      %v3225 = vpop.f32.mrf.mxu0
      %v3226 = vadd.f32 0.0, %v3225
      %v3227 = vpop.f32.mrf.mxu0
      %3228 = vmatprep.mubr.f32.mxu0 0.0
      %3229 = vmatmul.mubr.f32.gmra.mxu0 %v2735
      %v3230 = vpop.f32.mrf.mxu0
      %v3231 = vadd.f32 0.0, %v3230
      %v3232 = vpop.f32.mrf.mxu0
      %3233 = vmatprep.mubr.f32.mxu0 0.0
      %3234 = vmatmul.mubr.f32.gmra.mxu0 %v2738
      %v3235 = vpop.f32.mrf.mxu0
      %v3236 = vadd.f32 0.0, %v3235
      %v3237 = vpop.f32.mrf.mxu0
      %3238 = vmatprep.mubr.f32.mxu0 0.0
      %3239 = vmatmul.mubr.f32.gmra.mxu0 %v2741
      %v3240 = vpop.f32.mrf.mxu0
      %v3241 = vadd.f32 0.0, %v3240
      %v3242 = vpop.f32.mrf.mxu0
      %3243 = vmatprep.mubr.f32.mxu0 0.0
      %3244 = vmatmul.mubr.f32.gmra.mxu0 %v2744
      %v3245 = vpop.f32.mrf.mxu0
      %v3246 = vadd.f32 0.0, %v3245
      %v3247 = vpop.f32.mrf.mxu0
      %3248 = vmatprep.mubr.f32.mxu0 0.0
      %3249 = vmatmul.mubr.f32.gmra.mxu0 %v2747
      %v3250 = vpop.f32.mrf.mxu0
      %v3251 = vadd.f32 0.0, %v3250
      %v3252 = vpop.f32.mrf.mxu0
      %3253 = vmatprep.mubr.f32.mxu0 0.0
      %3254 = vmatmul.mubr.f32.gmra.mxu0 %v2750
      %v3255 = vpop.f32.mrf.mxu0
      %v3256 = vadd.f32 0.0, %v3255
      %v3257 = vpop.f32.mrf.mxu0
      %3258 = vmatprep.mubr.f32.mxu0 0.0
      %3259 = vmatmul.mubr.f32.gmra.mxu0 %v2753
      %v3260 = vpop.f32.mrf.mxu0
      %v3261 = vadd.f32 0.0, %v3260
      %v3262 = vpop.f32.mrf.mxu0
      %3263 = vmatprep.mubr.f32.mxu0 0.0
      %3264 = vmatmul.mubr.f32.gmra.mxu0 %v2756
      %v3265 = vpop.f32.mrf.mxu0
      %v3266 = vadd.f32 0.0, %v3265
      %v3267 = vpop.f32.mrf.mxu0
      %3268 = vmatprep.mubr.f32.mxu0 0.0
      %3269 = vmatmul.mubr.f32.gmra.mxu0 %v2759
      %v3270 = vpop.f32.mrf.mxu0
      %v3271 = vadd.f32 0.0, %v3270
      %v3272 = vpop.f32.mrf.mxu0
      %3273 = vmatprep.mubr.f32.mxu0 0.0
      %3274 = vmatmul.mubr.f32.gmra.mxu0 %v2762
      %v3275 = vpop.f32.mrf.mxu0
      %v3276 = vadd.f32 0.0, %v3275
      %v3277 = vpop.f32.mrf.mxu0
      %3278 = vmatprep.mubr.f32.mxu0 0.0
      %3279 = vmatmul.mubr.f32.gmra.mxu0 %v2765
      %v3280 = vpop.f32.mrf.mxu0
      %v3281 = vadd.f32 0.0, %v3280
      %v3282 = vpop.f32.mrf.mxu0
      %3283 = vmatprep.mubr.f32.mxu0 0.0
      %3284 = vmatmul.mubr.f32.gmra.mxu0 %v2768
      %v3285 = vpop.f32.mrf.mxu0
      %v3286 = vadd.f32 0.0, %v3285
      %v3287 = vpop.f32.mrf.mxu0
      %3288 = vmatprep.mubr.f32.mxu0 0.0
      %3289 = vmatmul.mubr.f32.gmra.mxu0 %v2771
      %v3290 = vpop.f32.mrf.mxu0
      %v3291 = vadd.f32 0.0, %v3290
      %v3292 = vpop.f32.mrf.mxu0
      %3293 = vmatprep.mubr.f32.mxu0 0.0
      %3294 = vmatmul.mubr.f32.gmra.mxu0 %v2774
      %v3295 = vpop.f32.mrf.mxu0
      %v3296 = vadd.f32 0.0, %v3295
      %v3297 = vpop.f32.mrf.mxu0
      %3298 = vmatprep.mubr.f32.mxu0 0.0
      %3299 = vmatmul.mubr.f32.gmra.mxu0 %v2777
      %v3300 = vpop.f32.mrf.mxu0
      %v3301 = vadd.f32 0.0, %v3300
      %v3302 = vpop.f32.mrf.mxu0
      %3303 = vmatprep.mubr.f32.mxu0 0.0
      %3304 = vmatmul.mubr.f32.gmra.mxu0 %v2780
      %v3305 = vpop.f32.mrf.mxu0
      %v3306 = vadd.f32 0.0, %v3305
      %v3307 = vpop.f32.mrf.mxu0
      %3308 = vmatprep.mubr.f32.mxu0 0.0
      %3309 = vmatmul.mubr.f32.gmra.mxu0 %v2783
      %v3310 = vpop.f32.mrf.mxu0
      %v3311 = vadd.f32 0.0, %v3310
      %v3312 = vpop.f32.mrf.mxu0
      %3313 = vmatprep.mubr.f32.mxu0 0.0
      %3314 = vmatmul.mubr.f32.gmra.mxu0 %v2786
      %v3315 = vpop.f32.mrf.mxu0
      %v3316 = vadd.f32 0.0, %v3315
      %v3317 = vpop.f32.mrf.mxu0
      %3318 = vmatprep.mubr.f32.mxu0 0.0
      %3319 = vmatmul.mubr.f32.gmra.mxu0 %v2789
      %v3320 = vpop.f32.mrf.mxu0
      %v3321 = vadd.f32 0.0, %v3320
      %v3322 = vpop.f32.mrf.mxu0
      %3323 = vmatprep.mubr.f32.mxu0 0.0
      %3324 = vmatmul.mubr.f32.gmra.mxu0 %v2792
      %v3325 = vpop.f32.mrf.mxu0
      %v3326 = vadd.f32 0.0, %v3325
      %v3327 = vpop.f32.mrf.mxu0
      %3328 = vmatprep.mubr.f32.mxu0 0.0
      %3329 = vmatmul.mubr.f32.gmra.mxu0 %v2795
      %v3330 = vpop.f32.mrf.mxu0
      %v3331 = vadd.f32 0.0, %v3330
      %v3332 = vpop.f32.mrf.mxu0
      %3333 = vmatprep.mubr.f32.mxu0 0.0
      %3334 = vmatmul.mubr.f32.gmra.mxu0 %v2798
      %v3335 = vpop.f32.mrf.mxu0
      %v3336 = vadd.f32 0.0, %v3335
      %v3337 = vpop.f32.mrf.mxu0
      %3338 = vmatprep.mubr.f32.mxu0 0.0
      %3339 = vmatmul.mubr.f32.gmra.mxu0 %v2801
      %v3340 = vpop.f32.mrf.mxu0
      %v3341 = vadd.f32 0.0, %v3340
      %v3342 = vpop.f32.mrf.mxu0
      %3343 = vmatprep.mubr.f32.mxu0 0.0
      %3344 = vmatmul.mubr.f32.gmra.mxu0 %v2804
      %v3345 = vpop.f32.mrf.mxu0
      %v3346 = vadd.f32 0.0, %v3345
      %v3347 = vpop.f32.mrf.mxu0
      %3348 = vmatprep.mubr.f32.mxu0 0.0
      %3349 = vmatmul.mubr.f32.gmra.mxu0 %v2807
      %v3350 = vpop.f32.mrf.mxu0
      %v3351 = vadd.f32 0.0, %v3350
      %v3352 = vpop.f32.mrf.mxu0
      %3353 = vmatprep.mubr.f32.mxu0 0.0
      %3354 = vmatmul.mubr.f32.gmra.mxu0 %v2810
      %v3355 = vpop.f32.mrf.mxu0
      %v3356 = vadd.f32 0.0, %v3355
      %v3357 = vpop.f32.mrf.mxu0
      %3358 = vmatprep.mubr.f32.mxu0 0.0
      %3359 = vmatmul.mubr.f32.gmra.mxu0 %v2813
      %v3360 = vpop.f32.mrf.mxu0
      %v3361 = vadd.f32 0.0, %v3360
      %v3362 = vpop.f32.mrf.mxu0
      %3363 = vmatprep.mubr.f32.mxu0 0.0
      %3364 = vmatmul.mubr.f32.gmra.mxu0 %v2816
      %v3365 = vpop.f32.mrf.mxu0
      %v3366 = vadd.f32 0.0, %v3365
      %v3367 = vpop.f32.mrf.mxu0
      %3368 = vmatprep.mubr.f32.mxu0 0.0
      %3369 = vmatmul.mubr.f32.gmra.mxu0 %v2819
      %v3370 = vpop.f32.mrf.mxu0
      %v3371 = vadd.f32 0.0, %v3370
      %v3372 = vpop.f32.mrf.mxu0
      %3373 = vmatprep.mubr.f32.mxu0 0.0
      %3374 = vmatmul.mubr.f32.gmra.mxu0 %v2822
      %v3375 = vpop.f32.mrf.mxu0
      %v3376 = vadd.f32 0.0, %v3375
      %v3377 = vpop.f32.mrf.mxu0
      %3378 = vmatprep.mubr.f32.mxu0 0.0
      %3379 = vmatmul.mubr.f32.gmra.mxu0 %v2825
      %v3380 = vpop.f32.mrf.mxu0
      %v3381 = vadd.f32 0.0, %v3380
      %v3382 = vpop.f32.mrf.mxu0
      %3383 = vmatprep.mubr.f32.mxu0 0.0
      %3384 = vmatmul.mubr.f32.gmra.mxu0 %v2828
      %v3385 = vpop.f32.mrf.mxu0
      %v3386 = vadd.f32 0.0, %v3385
      %v3387 = vpop.f32.mrf.mxu0
      %3388 = vmatprep.mubr.f32.mxu0 0.0
      %3389 = vmatmul.mubr.f32.gmra.mxu0 %v2831
      %v3390 = vpop.f32.mrf.mxu0
      %v3391 = vadd.f32 0.0, %v3390
      %v3392 = vpop.f32.mrf.mxu0
      %3393 = vmatprep.mubr.f32.mxu0 0.0
      %3394 = vmatmul.mubr.f32.gmra.mxu0 %v2834
      %v3395 = vpop.f32.mrf.mxu0
      %v3396 = vadd.f32 0.0, %v3395
      %v3397 = vpop.f32.mrf.mxu0
      %3398 = vmatprep.mubr.f32.mxu0 0.0
      %3399 = vmatmul.mubr.f32.gmra.mxu0 %v2837
      %v3400 = vpop.f32.mrf.mxu0
      %v3401 = vadd.f32 0.0, %v3400
      %v3402 = vpop.f32.mrf.mxu0
      %3403 = vmatprep.mubr.f32.mxu0 0.0
      %3404 = vmatmul.mubr.f32.gmra.mxu0 %v2840
      %v3405 = vpop.f32.mrf.mxu0
      %v3406 = vadd.f32 0.0, %v3405
      %v3407 = vpop.f32.mrf.mxu0
      %3408 = vmatprep.mubr.f32.mxu0 0.0
      %3409 = vmatmul.mubr.f32.gmra.mxu0 %v2843
      %v3410 = vpop.f32.mrf.mxu0
      %v3411 = vadd.f32 0.0, %v3410
      %v3412 = vpop.f32.mrf.mxu0
      %3413 = vmatprep.mubr.f32.mxu0 0.0
      %3414 = vmatmul.mubr.f32.gmra.mxu0 %v2846
      %v3415 = vpop.f32.mrf.mxu0
      %v3416 = vadd.f32 0.0, %v3415
      %v3417 = vpop.f32.mrf.mxu0
      %3418 = vmatprep.mubr.f32.mxu0 0.0
      %3419 = vmatmul.mubr.f32.gmra.mxu0 %v2849
      %v3420 = vpop.f32.mrf.mxu0
      %v3421 = vadd.f32 0.0, %v3420
      %v3422 = vpop.f32.mrf.mxu0
      %3423 = vmatprep.mubr.f32.mxu0 0.0
      %3424 = vmatmul.mubr.f32.gmra.mxu0 %v2852
      %v3425 = vpop.f32.mrf.mxu0
      %v3426 = vadd.f32 0.0, %v3425
      %v3427 = vpop.f32.mrf.mxu0
      %3428 = vmatprep.mubr.f32.mxu0 0.0
      %3429 = vmatmul.mubr.f32.gmra.mxu0 %v2855
      %v3430 = vpop.f32.mrf.mxu0
      %v3431 = vadd.f32 0.0, %v3430
      %v3432 = vpop.f32.mrf.mxu0
      %3433 = vmatprep.mubr.f32.mxu0 0.0
      %3434 = vmatmul.mubr.f32.gmra.mxu0 %v2858
      %v3435 = vpop.f32.mrf.mxu0
      %v3436 = vadd.f32 0.0, %v3435
      %v3437 = vpop.f32.mrf.mxu0
      %3438 = vmatprep.mubr.f32.mxu0 0.0
      %3439 = vmatmul.mubr.f32.gmra.mxu0 %v2861
      %v3440 = vpop.f32.mrf.mxu0
      %v3441 = vadd.f32 0.0, %v3440
      %v3442 = vpop.f32.mrf.mxu0
      %3443 = vmatprep.mubr.f32.mxu0 0.0
      %3444 = vmatmul.mubr.f32.gmra.mxu0 %v2864
      %v3445 = vpop.f32.mrf.mxu0
      %v3446 = vadd.f32 0.0, %v3445
      %v3447 = vpop.f32.mrf.mxu0
      %3448 = vmatprep.mubr.f32.mxu0 0.0
      %3449 = vmatmul.mubr.f32.gmra.mxu0 %v2867
      %v3450 = vpop.f32.mrf.mxu0
      %v3451 = vadd.f32 0.0, %v3450
      %v3452 = vpop.f32.mrf.mxu0
      %3453 = vmatprep.mubr.f32.mxu0 0.0
      %3454 = vmatmul.mubr.f32.gmra.mxu0 %v2870
      %v3455 = vpop.f32.mrf.mxu0
      %v3456 = vadd.f32 0.0, %v3455
      %v3457 = vpop.f32.mrf.mxu0
      %3458 = vmatprep.mubr.f32.mxu0 0.0
      %3459 = vmatmul.mubr.f32.gmra.mxu0 %v2873
      %v3460 = vpop.f32.mrf.mxu0
      %v3461 = vadd.f32 0.0, %v3460
      %v3462 = vpop.f32.mrf.mxu0
      %3463 = vmatprep.mubr.f32.mxu0 0.0
      %3464 = vmatmul.mubr.f32.gmra.mxu0 %v2876
      %v3465 = vpop.f32.mrf.mxu0
      %v3466 = vadd.f32 0.0, %v3465
      %v3467 = vpop.f32.mrf.mxu0
      %3468 = vmatprep.mubr.f32.mxu0 0.0
      %3469 = vmatmul.mubr.f32.gmra.mxu0 %v2879
      %v3470 = vpop.f32.mrf.mxu0
      %v3471 = vadd.f32 0.0, %v3470
      %v3472 = vpop.f32.mrf.mxu0
      %3473 = vmatprep.mubr.f32.mxu0 0.0
      %3474 = vmatmul.mubr.f32.gmra.mxu0 %v2882
      %v3475 = vpop.f32.mrf.mxu0
      %v3476 = vadd.f32 0.0, %v3475
      %v3477 = vpop.f32.mrf.mxu0
      %3478 = vmatprep.mubr.f32.mxu0 0.0
      %3479 = vmatmul.mubr.f32.gmra.mxu0 %v2885
      %v3480 = vpop.f32.mrf.mxu0
      %v3481 = vadd.f32 0.0, %v3480
      %v3482 = vpop.f32.mrf.mxu0
      %3483 = vmatprep.mubr.f32.mxu0 0.0
      %3484 = vmatmul.mubr.f32.gmra.mxu0 %v2888
      %v3485 = vpop.f32.mrf.mxu0
      %v3486 = vadd.f32 0.0, %v3485
      %v3487 = vpop.f32.mrf.mxu0
      %3488 = vmatprep.mubr.f32.mxu0 0.0
      %3489 = vmatmul.mubr.f32.gmra.mxu0 %v2891
      %v3490 = vpop.f32.mrf.mxu0
      %v3491 = vadd.f32 0.0, %v3490
      %v3492 = vpop.f32.mrf.mxu0
      %3493 = vmatprep.mubr.f32.mxu0 0.0
      %3494 = vmatmul.mubr.f32.gmra.mxu0 %v2894
      %v3495 = vpop.f32.mrf.mxu0
      %v3496 = vadd.f32 0.0, %v3495
      %v3497 = vpop.f32.mrf.mxu0
      %3498 = vmatprep.mubr.f32.mxu0 0.0
      %3499 = vmatmul.mubr.f32.gmra.mxu0 %v2897
      %v3500 = vpop.f32.mrf.mxu0
      %v3501 = vadd.f32 0.0, %v3500
      %v3502 = vpop.f32.mrf.mxu0
      %3503 = vmatprep.mubr.f32.mxu0 0.0
      %3504 = vmatmul.mubr.f32.gmra.mxu0 %v2900
      %v3505 = vpop.f32.mrf.mxu0
      %v3506 = vadd.f32 0.0, %v3505
      %v3507 = vpop.f32.mrf.mxu0
      %3508 = vmatprep.mubr.f32.mxu0 0.0
      %3509 = vmatmul.mubr.f32.gmra.mxu0 %v2903
      %v3510 = vpop.f32.mrf.mxu0
      %v3511 = vadd.f32 0.0, %v3510
      %v3512 = vpop.f32.mrf.mxu0
      %3513 = vmatprep.mubr.f32.mxu0 0.0
      %3514 = vmatmul.mubr.f32.gmra.mxu0 %v2906
      %v3515 = vpop.f32.mrf.mxu0
      %v3516 = vadd.f32 0.0, %v3515
      %v3517 = vpop.f32.mrf.mxu0
      %3518 = vmatprep.mubr.f32.mxu0 0.0
      %3519 = vmatmul.mubr.f32.gmra.mxu0 %v2909
      %v3520 = vpop.f32.mrf.mxu0
      %v3521 = vadd.f32 0.0, %v3520
      %v3522 = vpop.f32.mrf.mxu0
      %3523 = vmatprep.mubr.f32.mxu0 0.0
      %3524 = vmatmul.mubr.f32.gmra.mxu0 %v2912
      %v3525 = vpop.f32.mrf.mxu0
      %v3526 = vadd.f32 0.0, %v3525
      %v3527 = vpop.f32.mrf.mxu0
      %3528 = vmatprep.mubr.f32.mxu0 0.0
      %3529 = vmatmul.mubr.f32.gmra.mxu0 %v2915
      %v3530 = vpop.f32.mrf.mxu0
      %v3531 = vadd.f32 0.0, %v3530
      %v3532 = vpop.f32.mrf.mxu0
      %3533 = vmatprep.mubr.f32.mxu0 0.0
      %3534 = vmatmul.mubr.f32.gmra.mxu0 %v2918
      %v3535 = vpop.f32.mrf.mxu0
      %v3536 = vadd.f32 0.0, %v3535
      %v3537 = vpop.f32.mrf.mxu0
      %3538 = vmatprep.mubr.f32.mxu0 0.0
      %3539 = vmatmul.mubr.f32.gmra.mxu0 %v2921
      %v3540 = vpop.f32.mrf.mxu0
      %v3541 = vadd.f32 0.0, %v3540
      %v3542 = vpop.f32.mrf.mxu0
      %3543 = vmatprep.mubr.f32.mxu0 0.0
      %3544 = vmatmul.mubr.f32.gmra.mxu0 %v2924
      %v3545 = vpop.f32.mrf.mxu0
      %v3546 = vadd.f32 0.0, %v3545
      %v3547 = vpop.f32.mrf.mxu0
      %3548 = vmatprep.mubr.f32.mxu0 0.0
      %3549 = vmatmul.mubr.f32.gmra.mxu0 %v2927
      %v3550 = vpop.f32.mrf.mxu0
      %v3551 = vadd.f32 0.0, %v3550
      %v3552 = vpop.f32.mrf.mxu0
      %3553 = vmatprep.mubr.f32.mxu0 0.0
      %3554 = vmatmul.mubr.f32.gmra.mxu0 %v2930
      %v3555 = vpop.f32.mrf.mxu0
      %v3556 = vadd.f32 0.0, %v3555
      %v3557 = vpop.f32.mrf.mxu0
      %3558 = vmatprep.mubr.f32.mxu0 0.0
      %3559 = vmatmul.mubr.f32.gmra.mxu0 %v2933
      %v3560 = vpop.f32.mrf.mxu0
      %v3561 = vadd.f32 0.0, %v3560
      %v3562 = vpop.f32.mrf.mxu0
      %3563 = vmatprep.mubr.f32.mxu0 0.0
      %3564 = vmatmul.mubr.f32.gmra.mxu0 %v2936
      %v3565 = vpop.f32.mrf.mxu0
      %v3566 = vadd.f32 0.0, %v3565
      %v3567 = vpop.f32.mrf.mxu0
      %3568 = vmatprep.mubr.f32.mxu0 0.0
      %3569 = vmatmul.mubr.f32.gmra.mxu0 %v2939
      %v3570 = vpop.f32.mrf.mxu0
      %v3571 = vadd.f32 0.0, %v3570
      %v3572 = vpop.f32.mrf.mxu0
      %3573 = vmatprep.mubr.f32.mxu0 0.0
      %3574 = vmatmul.mubr.f32.gmra.mxu0 %v2942
      %v3575 = vpop.f32.mrf.mxu0
      %v3576 = vadd.f32 0.0, %v3575
      %v3577 = vpop.f32.mrf.mxu0
      %3578 = vmatprep.mubr.f32.mxu0 0.0
      %3579 = vmatmul.mubr.f32.gmra.mxu0 %v2945
      %v3580 = vpop.f32.mrf.mxu0
      %v3581 = vadd.f32 0.0, %v3580
      %v3582 = vpop.f32.mrf.mxu0
      %3583 = vmatprep.mubr.f32.mxu0 0.0
      %3584 = vmatmul.mubr.f32.gmra.mxu0 %v2948
      %v3585 = vpop.f32.mrf.mxu0
      %v3586 = vadd.f32 0.0, %v3585
      %v3587 = vpop.f32.mrf.mxu0
      %3588 = vmatprep.mubr.f32.mxu0 0.0
      %3589 = vmatmul.mubr.f32.gmra.mxu0 %v2951
      %v3590 = vpop.f32.mrf.mxu0
      %v3591 = vadd.f32 0.0, %v3590
      %v3592 = vpop.f32.mrf.mxu0
      %3593 = vmatprep.mubr.f32.mxu0 0.0
      %3594 = vmatmul.mubr.f32.gmra.mxu0 %v2954
      %v3595 = vpop.f32.mrf.mxu0
      %v3596 = vadd.f32 0.0, %v3595
      %v3597 = vpop.f32.mrf.mxu0
      %3598 = vmatprep.mubr.f32.mxu0 0.0
      %3599 = vmatmul.mubr.f32.gmra.mxu0 %v2957
      %v3600 = vpop.f32.mrf.mxu0
      %v3601 = vadd.f32 0.0, %v3600
      %v3602 = vpop.f32.mrf.mxu0
      %3603 = vmatprep.mubr.f32.mxu0 0.0
      %3604 = vmatmul.mubr.f32.gmra.mxu0 %v2960
      %v3605 = vpop.f32.mrf.mxu0
      %v3606 = vadd.f32 0.0, %v3605
      %v3607 = vpop.f32.mrf.mxu0
      %3608 = vmatprep.mubr.f32.mxu0 0.0
      %3609 = vmatmul.mubr.f32.gmra.mxu0 %v2963
      %v3610 = vpop.f32.mrf.mxu0
      %v3611 = vadd.f32 0.0, %v3610
      %v3612 = vpop.f32.mrf.mxu0
      %3613 = vmatprep.mubr.f32.mxu0 0.0
      %3614 = vmatmul.mubr.f32.gmra.mxu0 %v2966
      %v3615 = vpop.f32.mrf.mxu0
      %v3616 = vadd.f32 0.0, %v3615
      %v3617 = vpop.f32.mrf.mxu0
      %3618 = vmatprep.mubr.f32.mxu0 0.0
      %3619 = vmatmul.mubr.f32.gmra.mxu0 %v2969
      %v3620 = vpop.f32.mrf.mxu0
      %v3621 = vadd.f32 0.0, %v3620
      %v3622 = vpop.f32.mrf.mxu0
      %3623 = vmatprep.mubr.f32.mxu0 0.0
      %3624 = vmatmul.mubr.f32.gmra.mxu0 %v2972
      %v3625 = vpop.f32.mrf.mxu0
      %v3626 = vadd.f32 0.0, %v3625
      %v3627 = vpop.f32.mrf.mxu0
      %3628 = vmatprep.mubr.f32.mxu0 0.0
      %3629 = vmatmul.mubr.f32.gmra.mxu0 %v2975
      %v3630 = vpop.f32.mrf.mxu0
      %v3631 = vadd.f32 0.0, %v3630
      %v3632 = vpop.f32.mrf.mxu0
      %3633 = vmatprep.mubr.f32.mxu0 0.0
      %3634 = vmatmul.mubr.f32.gmra.mxu0 %v2978
      %v3635 = vpop.f32.mrf.mxu0
      %v3636 = vadd.f32 0.0, %v3635
      %v3637 = vpop.f32.mrf.mxu0
      %3638 = vmatprep.mubr.f32.mxu0 0.0
      %3639 = vmatmul.mubr.f32.gmra.mxu0 %v2981
      %v3640 = vpop.f32.mrf.mxu0
      %v3641 = vadd.f32 0.0, %v3640
      %v3642 = vpop.f32.mrf.mxu0
      %3643 = vmatprep.mubr.f32.mxu0 0.0
      %3644 = vmatmul.mubr.f32.gmra.mxu0 %v2984
      %v3645 = vpop.f32.mrf.mxu0
      %v3646 = vadd.f32 0.0, %v3645
      %v3647 = vpop.f32.mrf.mxu0
      %3648 = vmatprep.mubr.f32.mxu0 0.0
      %3649 = vmatmul.mubr.f32.gmra.mxu0 %v2987
      %v3650 = vpop.f32.mrf.mxu0
      %v3651 = vadd.f32 0.0, %v3650
      %v3652 = vpop.f32.mrf.mxu0
      %3653 = vmatprep.mubr.f32.mxu0 0.0
      %3654 = vmatmul.mubr.f32.gmra.mxu0 %v2990
      %v3655 = vpop.f32.mrf.mxu0
      %v3656 = vadd.f32 0.0, %v3655
      %v3657 = vpop.f32.mrf.mxu0
      %3658 = vmatprep.mubr.f32.mxu0 0.0
      %3659 = vmatmul.mubr.f32.gmra.mxu0 %v2993
      %v3660 = vpop.f32.mrf.mxu0
      %v3661 = vadd.f32 0.0, %v3660
      %v3662 = vpop.f32.mrf.mxu0
      %3663 = vmatprep.mubr.f32.mxu0 0.0
      %3664 = vmatmul.mubr.f32.gmra.mxu0 %v2996
      %v3665 = vpop.f32.mrf.mxu0
      %v3666 = vadd.f32 0.0, %v3665
      %v3667 = vpop.f32.mrf.mxu0
      %3668 = vmatprep.mubr.f32.mxu0 0.0
      %3669 = vmatmul.mubr.f32.gmra.mxu0 %v2999
      %v3670 = vpop.f32.mrf.mxu0
      %v3671 = vadd.f32 0.0, %v3670
      %v3672 = vpop.f32.mrf.mxu0
      %3673 = vmatprep.mubr.f32.mxu0 0.0
      %3674 = vmatmul.mubr.f32.gmra.mxu0 %v3002
      %v3675 = vpop.f32.mrf.mxu0
      %v3676 = vadd.f32 0.0, %v3675
      %v3677 = vpop.f32.mrf.mxu0
      %3678 = vmatprep.mubr.f32.mxu0 0.0
      %3679 = vmatmul.mubr.f32.gmra.mxu0 %v3005
      %v3680 = vpop.f32.mrf.mxu0
      %v3681 = vadd.f32 0.0, %v3680
      %v3682 = vpop.f32.mrf.mxu0
      %3683 = vmatprep.mubr.f32.mxu0 0.0
      %3684 = vmatmul.mubr.f32.gmra.mxu0 %v3008
      %v3685 = vpop.f32.mrf.mxu0
      %v3686 = vadd.f32 0.0, %v3685
      %v3687 = vpop.f32.mrf.mxu0
      %3688 = vmatprep.mubr.f32.mxu0 0.0
      %3689 = vmatmul.mubr.f32.gmra.mxu0 %v3011
      %v3690 = vpop.f32.mrf.mxu0
      %v3691 = vadd.f32 0.0, %v3690
      %v3692 = vpop.f32.mrf.mxu0
      %3693 = vmatprep.mubr.f32.mxu0 0.0
      %3694 = vmatmul.mubr.f32.gmra.mxu0 %v3014
      %v3695 = vpop.f32.mrf.mxu0
      %v3696 = vadd.f32 0.0, %v3695
      %v3697 = vpop.f32.mrf.mxu0
      %3698 = vmatprep.mubr.f32.mxu0 0.0
      %3699 = vmatmul.mubr.f32.gmra.mxu0 %v3017
      %v3700 = vpop.f32.mrf.mxu0
      %v3701 = vadd.f32 0.0, %v3700
      %v3702 = vpop.f32.mrf.mxu0
      %3703 = vmatprep.mubr.f32.mxu0 0.0
      %3704 = vmatmul.mubr.f32.gmra.mxu0 %v3020
      %v3705 = vpop.f32.mrf.mxu0
      %v3706 = vadd.f32 0.0, %v3705
      %v3707 = vpop.f32.mrf.mxu0
      %3708 = vmatprep.mubr.f32.mxu0 0.0
      %3709 = vmatmul.mubr.f32.gmra.mxu0 %v3023
      %v3710 = vpop.f32.mrf.mxu0
      %v3711 = vadd.f32 0.0, %v3710
      %v3712 = vpop.f32.mrf.mxu0
      %3713 = vmatprep.mubr.f32.mxu0 0.0
      %3714 = vmatmul.mubr.f32.gmra.mxu0 %v3026
      %v3715 = vpop.f32.mrf.mxu0
      %v3716 = vadd.f32 0.0, %v3715
      %v3717 = vpop.f32.mrf.mxu0
      %3718 = vmatprep.mubr.f32.mxu0 0.0
      %3719 = vmatmul.mubr.f32.gmra.mxu0 %v3029
      %v3720 = vpop.f32.mrf.mxu0
      %v3721 = vadd.f32 0.0, %v3720
      %v3722 = vpop.f32.mrf.mxu0
      %3723 = vmatprep.mubr.f32.mxu0 0.0
      %3724 = vmatmul.mubr.f32.gmra.mxu0 %v3032
      %v3725 = vpop.f32.mrf.mxu0
      %v3726 = vadd.f32 0.0, %v3725
      %v3727 = vpop.f32.mrf.mxu0
      %3728 = vmatprep.mubr.f32.mxu0 0.0
      %3729 = vmatmul.mubr.f32.gmra.mxu0 %v3035
      %v3730 = vpop.f32.mrf.mxu0
      %v3731 = vadd.f32 0.0, %v3730
      %v3732 = vpop.f32.mrf.mxu0
      %3733 = vmatprep.mubr.f32.mxu0 0.0
      %3734 = vmatmul.mubr.f32.gmra.mxu0 %v3038
      %v3735 = vpop.f32.mrf.mxu0
      %v3736 = vadd.f32 0.0, %v3735
      %v3737 = vpop.f32.mrf.mxu0
      %3738 = vmatprep.mubr.f32.mxu0 0.0
      %3739 = vmatmul.mubr.f32.gmra.mxu0 %v3041
      %v3740 = vpop.f32.mrf.mxu0
      %v3741 = vadd.f32 0.0, %v3740
      %v3742 = vpop.f32.mrf.mxu0
      %3743 = vmatprep.mubr.f32.mxu0 0.0
      %3744 = vmatmul.mubr.f32.gmra.mxu0 %v3044
      %v3745 = vpop.f32.mrf.mxu0
      %v3746 = vadd.f32 0.0, %v3745
      %v3747 = vpop.f32.mrf.mxu0
      %3748 = vmatprep.mubr.f32.mxu0 0.0
      %3749 = vmatmul.mubr.f32.gmra.mxu0 %v3047
      %v3750 = vpop.f32.mrf.mxu0
      %v3751 = vadd.f32 0.0, %v3750
      %v3752 = vpop.f32.mrf.mxu0
      %3753 = vdwg.mxu0
      %v3755 = vsel %vm2664, %v2018, 0
      %v3758 = vsel %vm2664, %v2023, 0
      %v3761 = vsel %vm2664, %v2028, 0
      %v3764 = vsel %vm2664, %v2033, 0
      %v3767 = vsel %vm2664, %v2038, 0
      %v3770 = vsel %vm2664, %v2043, 0
      %v3773 = vsel %vm2664, %v2048, 0
      %v3776 = vsel %vm2664, %v2053, 0
      %v3779 = vsel %vm2664, %v2058, 0
      %v3782 = vsel %vm2664, %v2063, 0
      %v3785 = vsel %vm2664, %v2068, 0
      %v3788 = vsel %vm2664, %v2073, 0
      %v3791 = vsel %vm2664, %v2078, 0
      %v3794 = vsel %vm2664, %v2083, 0
      %v3797 = vsel %vm2664, %v2088, 0
      %v3800 = vsel %vm2664, %v2093, 0
      %v3803 = vsel %vm2664, %v2098, 0
      %v3806 = vsel %vm2664, %v2103, 0
      %v3809 = vsel %vm2664, %v2108, 0
      %v3812 = vsel %vm2664, %v2113, 0
      %v3815 = vsel %vm2664, %v2118, 0
      %v3818 = vsel %vm2664, %v2123, 0
      %v3821 = vsel %vm2664, %v2128, 0
      %v3824 = vsel %vm2664, %v2133, 0
      %v3827 = vsel %vm2664, %v2138, 0
      %v3830 = vsel %vm2664, %v2143, 0
      %v3833 = vsel %vm2664, %v2148, 0
      %v3836 = vsel %vm2664, %v2153, 0
      %v3839 = vsel %vm2664, %v2158, 0
      %v3842 = vsel %vm2664, %v2163, 0
      %v3845 = vsel %vm2664, %v2168, 0
      %v3848 = vsel %vm2664, %v2173, 0
      %v3851 = vsel %vm2664, %v2178, 0
      %v3854 = vsel %vm2664, %v2183, 0
      %v3857 = vsel %vm2664, %v2188, 0
      %v3860 = vsel %vm2664, %v2193, 0
      %v3863 = vsel %vm2664, %v2198, 0
      %v3866 = vsel %vm2664, %v2203, 0
      %v3869 = vsel %vm2664, %v2208, 0
      %v3872 = vsel %vm2664, %v2213, 0
      %v3875 = vsel %vm2664, %v2218, 0
      %v3878 = vsel %vm2664, %v2223, 0
      %v3881 = vsel %vm2664, %v2228, 0
      %v3884 = vsel %vm2664, %v2233, 0
      %v3887 = vsel %vm2664, %v2238, 0
      %v3890 = vsel %vm2664, %v2243, 0
      %v3893 = vsel %vm2664, %v2248, 0
      %v3896 = vsel %vm2664, %v2253, 0
      %v3899 = vsel %vm2664, %v2258, 0
      %v3902 = vsel %vm2664, %v2263, 0
      %v3905 = vsel %vm2664, %v2268, 0
      %v3908 = vsel %vm2664, %v2273, 0
      %v3911 = vsel %vm2664, %v2278, 0
      %v3914 = vsel %vm2664, %v2283, 0
      %v3917 = vsel %vm2664, %v2288, 0
      %v3920 = vsel %vm2664, %v2293, 0
      %v3923 = vsel %vm2664, %v2298, 0
      %v3926 = vsel %vm2664, %v2303, 0
      %v3929 = vsel %vm2664, %v2308, 0
      %v3932 = vsel %vm2664, %v2313, 0
      %v3935 = vsel %vm2664, %v2318, 0
      %v3938 = vsel %vm2664, %v2323, 0
      %v3941 = vsel %vm2664, %v2328, 0
      %v3944 = vsel %vm2664, %v2333, 0
      %v3947 = vsel %vm2664, %v2338, 0
      %v3950 = vsel %vm2664, %v2343, 0
      %v3953 = vsel %vm2664, %v2348, 0
      %v3956 = vsel %vm2664, %v2353, 0
      %v3959 = vsel %vm2664, %v2358, 0
      %v3962 = vsel %vm2664, %v2363, 0
      %v3965 = vsel %vm2664, %v2368, 0
      %v3968 = vsel %vm2664, %v2373, 0
      %v3971 = vsel %vm2664, %v2378, 0
      %v3974 = vsel %vm2664, %v2383, 0
      %v3977 = vsel %vm2664, %v2388, 0
      %v3980 = vsel %vm2664, %v2393, 0
      %v3983 = vsel %vm2664, %v2398, 0
      %v3986 = vsel %vm2664, %v2403, 0
      %v3989 = vsel %vm2664, %v2408, 0
      %v3992 = vsel %vm2664, %v2413, 0
      %v3995 = vsel %vm2664, %v2418, 0
      %v3998 = vsel %vm2664, %v2423, 0
      %v4001 = vsel %vm2664, %v2428, 0
      %v4004 = vsel %vm2664, %v2433, 0
      %v4007 = vsel %vm2664, %v2438, 0
      %v4010 = vsel %vm2664, %v2443, 0
      %v4013 = vsel %vm2664, %v2448, 0
      %v4016 = vsel %vm2664, %v2453, 0
      %v4019 = vsel %vm2664, %v2458, 0
      %v4022 = vsel %vm2664, %v2463, 0
      %v4025 = vsel %vm2664, %v2468, 0
      %v4028 = vsel %vm2664, %v2473, 0
      %v4031 = vsel %vm2664, %v2478, 0
      %v4034 = vsel %vm2664, %v2483, 0
      %v4037 = vsel %vm2664, %v2488, 0
      %v4040 = vsel %vm2664, %v2493, 0
      %v4043 = vsel %vm2664, %v2498, 0
      %v4046 = vsel %vm2664, %v2503, 0
      %v4049 = vsel %vm2664, %v2508, 0
      %v4052 = vsel %vm2664, %v2513, 0
      %v4055 = vsel %vm2664, %v2518, 0
      %v4058 = vsel %vm2664, %v2523, 0
      %v4061 = vsel %vm2664, %v2528, 0
      %v4064 = vsel %vm2664, %v2533, 0
      %v4067 = vsel %vm2664, %v2538, 0
      %v4070 = vsel %vm2664, %v2543, 0
      %v4073 = vsel %vm2664, %v2548, 0
      %v4076 = vsel %vm2664, %v2553, 0
      %v4079 = vsel %vm2664, %v2558, 0
      %v4082 = vsel %vm2664, %v2563, 0
      %v4085 = vsel %vm2664, %v2568, 0
      %v4088 = vsel %vm2664, %v2573, 0
      %v4091 = vsel %vm2664, %v2578, 0
      %v4094 = vsel %vm2664, %v2583, 0
      %v4097 = vsel %vm2664, %v2588, 0
      %v4100 = vsel %vm2664, %v2593, 0
      %v4103 = vsel %vm2664, %v2598, 0
      %v4106 = vsel %vm2664, %v2603, 0
      %v4109 = vsel %vm2664, %v2608, 0
      %v4112 = vsel %vm2664, %v2613, 0
      %v4115 = vsel %vm2664, %v2618, 0
      %v4118 = vsel %vm2664, %v2623, 0
      %v4121 = vsel %vm2664, %v2628, 0
      %v4124 = vsel %vm2664, %v2633, 0
      %v4127 = vsel %vm2664, %v2638, 0
      %v4130 = vsel %vm2664, %v2643, 0
      %v4133 = vsel %vm2664, %v2648, 0
      %v4136 = vsel %vm2664, %v2653, 0
      %4138 = vmatprep.subr.mxu0 0.0
      %4139 = vmatpush1.msra.mxu0 0.0
      %4140 = vmatprep.subr.mxu0 0.0
      %4141 = vmatpush1.msra.mxu0 0.0
      %4142 = vmatprep.subr.mxu0 0.0
      %4143 = vmatpush1.msra.mxu0 0.0
      %4144 = vmatprep.subr.mxu0 0.0
      %4145 = vmatpush1.msra.mxu0 0.0
      %4146 = vmatprep.subr.mxu0 0.0
      %4147 = vmatpush1.msra.mxu0 0.0
      %4148 = vmatprep.subr.mxu0 0.0
      %4149 = vmatpush1.msra.mxu0 0.0
      %4150 = vmatprep.subr.mxu0 0.0
      %4151 = vmatpush1.msra.mxu0 0.0
      %4152 = vmatprep.subr.mxu0 0.0
      %4153 = vmatpush1.msra.mxu0 0.0
      %4154 = vmatprep.subr.mxu0 0.0
      %4155 = vmatpush1.msra.mxu0 0.0
      %4156 = vmatprep.subr.mxu0 0.0
      %4157 = vmatpush1.msra.mxu0 0.0
      %4158 = vmatprep.subr.mxu0 0.0
      %4159 = vmatpush1.msra.mxu0 0.0
      %4160 = vmatprep.subr.mxu0 0.0
      %4161 = vmatpush1.msra.mxu0 0.0
      %4162 = vmatprep.subr.mxu0 0.0
      %4163 = vmatpush1.msra.mxu0 %v2659
      %4164 = vmatprep.subr.mxu0 0.0
      %4165 = vmatpush1.msra.mxu0 %v2658
      %4166 = vmatprep.subr.mxu0 0.0
      %4167 = vmatpush1.msra.mxu0 %v2657
      %4168 = vmatprep.subr.mxu0 0.0
      %4169 = vmatpush1.msra.mxu0 %v2656
      %4170 = vmatprep.subr.mxu0 0.0
      %4171 = vmatpush2.msra.mxu0 0.0
      %4172 = vmatprep.subr.mxu0 0.0
      %4173 = vmatpush2.msra.mxu0 0.0
      %4174 = vmatprep.subr.mxu0 0.0
      %4175 = vmatpush2.msra.mxu0 0.0
      %4176 = vmatprep.subr.mxu0 0.0
      %4177 = vmatpush2.msra.mxu0 0.0
      %4178 = vmatprep.subr.mxu0 0.0
      %4179 = vmatpush2.msra.mxu0 0.0
      %4180 = vmatprep.subr.mxu0 0.0
      %4181 = vmatpush2.msra.mxu0 0.0
      %4182 = vmatprep.subr.mxu0 0.0
      %4183 = vmatpush2.msra.mxu0 0.0
      %4184 = vmatprep.subr.mxu0 0.0
      %4185 = vmatpush2.msra.mxu0 0.0
      %4186 = vmatprep.subr.mxu0 0.0
      %4187 = vmatpush2.msra.mxu0 0.0
      %4188 = vmatprep.subr.mxu0 0.0
      %4189 = vmatpush2.msra.mxu0 0.0
      %4190 = vmatprep.subr.mxu0 0.0
      %4191 = vmatpush2.msra.mxu0 0.0
      %4192 = vmatprep.subr.mxu0 0.0
      %4193 = vmatpush2.msra.mxu0 0.0
      %4194 = vmatprep.subr.mxu0 0.0
      %4195 = vmatpush2.msra.mxu0 0.0
      %4196 = vmatprep.subr.mxu0 0.0
      %4197 = vmatpush2.msra.mxu0 0.0
      %4198 = vmatprep.subr.mxu0 0.0
      %4199 = vmatpush2.msra.mxu0 0.0
      %4200 = vmatprep.subr.mxu0 0.0
      %4201 = vmatpush2.msra.mxu0 0.0
      %4202 = vmatprep.mubr.f32.mxu0 0.0
      %4203 = vmatmul.mubr.f32.gmra.mxu0 %v3755
      %v4204 = vpop.f32.mrf.mxu0
      %v4205 = vadd.f32 %v3116, %v4204
      %v4206 = vpop.f32.mrf.mxu0
      %4207 = vmatprep.mubr.f32.mxu0 0.0
      %4208 = vmatmul.mubr.f32.gmra.mxu0 %v3758
      %v4209 = vpop.f32.mrf.mxu0
      %v4210 = vadd.f32 %v3121, %v4209
      %v4211 = vpop.f32.mrf.mxu0
      %4212 = vmatprep.mubr.f32.mxu0 0.0
      %4213 = vmatmul.mubr.f32.gmra.mxu0 %v3761
      %v4214 = vpop.f32.mrf.mxu0
      %v4215 = vadd.f32 %v3126, %v4214
      %v4216 = vpop.f32.mrf.mxu0
      %4217 = vmatprep.mubr.f32.mxu0 0.0
      %4218 = vmatmul.mubr.f32.gmra.mxu0 %v3764
      %v4219 = vpop.f32.mrf.mxu0
      %v4220 = vadd.f32 %v3131, %v4219
      %v4221 = vpop.f32.mrf.mxu0
      %4222 = vmatprep.mubr.f32.mxu0 0.0
      %4223 = vmatmul.mubr.f32.gmra.mxu0 %v3767
      %v4224 = vpop.f32.mrf.mxu0
      %v4225 = vadd.f32 %v3136, %v4224
      %v4226 = vpop.f32.mrf.mxu0
      %4227 = vmatprep.mubr.f32.mxu0 0.0
      %4228 = vmatmul.mubr.f32.gmra.mxu0 %v3770
      %v4229 = vpop.f32.mrf.mxu0
      %v4230 = vadd.f32 %v3141, %v4229
      %v4231 = vpop.f32.mrf.mxu0
      %4232 = vmatprep.mubr.f32.mxu0 0.0
      %4233 = vmatmul.mubr.f32.gmra.mxu0 %v3773
      %v4234 = vpop.f32.mrf.mxu0
      %v4235 = vadd.f32 %v3146, %v4234
      %v4236 = vpop.f32.mrf.mxu0
      %4237 = vmatprep.mubr.f32.mxu0 0.0
      %4238 = vmatmul.mubr.f32.gmra.mxu0 %v3776
      %v4239 = vpop.f32.mrf.mxu0
      %v4240 = vadd.f32 %v3151, %v4239
      %v4241 = vpop.f32.mrf.mxu0
      %4242 = vmatprep.mubr.f32.mxu0 0.0
      %4243 = vmatmul.mubr.f32.gmra.mxu0 %v3779
      %v4244 = vpop.f32.mrf.mxu0
      %v4245 = vadd.f32 %v3156, %v4244
      %v4246 = vpop.f32.mrf.mxu0
      %4247 = vmatprep.mubr.f32.mxu0 0.0
      %4248 = vmatmul.mubr.f32.gmra.mxu0 %v3782
      %v4249 = vpop.f32.mrf.mxu0
      %v4250 = vadd.f32 %v3161, %v4249
      %v4251 = vpop.f32.mrf.mxu0
      %4252 = vmatprep.mubr.f32.mxu0 0.0
      %4253 = vmatmul.mubr.f32.gmra.mxu0 %v3785
      %v4254 = vpop.f32.mrf.mxu0
      %v4255 = vadd.f32 %v3166, %v4254
      %v4256 = vpop.f32.mrf.mxu0
      %4257 = vmatprep.mubr.f32.mxu0 0.0
      %4258 = vmatmul.mubr.f32.gmra.mxu0 %v3788
      %v4259 = vpop.f32.mrf.mxu0
      %v4260 = vadd.f32 %v3171, %v4259
      %v4261 = vpop.f32.mrf.mxu0
      %4262 = vmatprep.mubr.f32.mxu0 0.0
      %4263 = vmatmul.mubr.f32.gmra.mxu0 %v3791
      %v4264 = vpop.f32.mrf.mxu0
      %v4265 = vadd.f32 %v3176, %v4264
      %v4266 = vpop.f32.mrf.mxu0
      %4267 = vmatprep.mubr.f32.mxu0 0.0
      %4268 = vmatmul.mubr.f32.gmra.mxu0 %v3794
      %v4269 = vpop.f32.mrf.mxu0
      %v4270 = vadd.f32 %v3181, %v4269
      %v4271 = vpop.f32.mrf.mxu0
      %4272 = vmatprep.mubr.f32.mxu0 0.0
      %4273 = vmatmul.mubr.f32.gmra.mxu0 %v3797
      %v4274 = vpop.f32.mrf.mxu0
      %v4275 = vadd.f32 %v3186, %v4274
      %v4276 = vpop.f32.mrf.mxu0
      %4277 = vmatprep.mubr.f32.mxu0 0.0
      %4278 = vmatmul.mubr.f32.gmra.mxu0 %v3800
      %v4279 = vpop.f32.mrf.mxu0
      %v4280 = vadd.f32 %v3191, %v4279
      %v4281 = vpop.f32.mrf.mxu0
      %4282 = vmatprep.mubr.f32.mxu0 0.0
      %4283 = vmatmul.mubr.f32.gmra.mxu0 %v3803
      %v4284 = vpop.f32.mrf.mxu0
      %v4285 = vadd.f32 %v3196, %v4284
      %v4286 = vpop.f32.mrf.mxu0
      %4287 = vmatprep.mubr.f32.mxu0 0.0
      %4288 = vmatmul.mubr.f32.gmra.mxu0 %v3806
      %v4289 = vpop.f32.mrf.mxu0
      %v4290 = vadd.f32 %v3201, %v4289
      %v4291 = vpop.f32.mrf.mxu0
      %4292 = vmatprep.mubr.f32.mxu0 0.0
      %4293 = vmatmul.mubr.f32.gmra.mxu0 %v3809
      %v4294 = vpop.f32.mrf.mxu0
      %v4295 = vadd.f32 %v3206, %v4294
      %v4296 = vpop.f32.mrf.mxu0
      %4297 = vmatprep.mubr.f32.mxu0 0.0
      %4298 = vmatmul.mubr.f32.gmra.mxu0 %v3812
      %v4299 = vpop.f32.mrf.mxu0
      %v4300 = vadd.f32 %v3211, %v4299
      %v4301 = vpop.f32.mrf.mxu0
      %4302 = vmatprep.mubr.f32.mxu0 0.0
      %4303 = vmatmul.mubr.f32.gmra.mxu0 %v3815
      %v4304 = vpop.f32.mrf.mxu0
      %v4305 = vadd.f32 %v3216, %v4304
      %v4306 = vpop.f32.mrf.mxu0
      %4307 = vmatprep.mubr.f32.mxu0 0.0
      %4308 = vmatmul.mubr.f32.gmra.mxu0 %v3818
      %v4309 = vpop.f32.mrf.mxu0
      %v4310 = vadd.f32 %v3221, %v4309
      %v4311 = vpop.f32.mrf.mxu0
      %4312 = vmatprep.mubr.f32.mxu0 0.0
      %4313 = vmatmul.mubr.f32.gmra.mxu0 %v3821
      %v4314 = vpop.f32.mrf.mxu0
      %v4315 = vadd.f32 %v3226, %v4314
      %v4316 = vpop.f32.mrf.mxu0
      %4317 = vmatprep.mubr.f32.mxu0 0.0
      %4318 = vmatmul.mubr.f32.gmra.mxu0 %v3824
      %v4319 = vpop.f32.mrf.mxu0
      %v4320 = vadd.f32 %v3231, %v4319
      %v4321 = vpop.f32.mrf.mxu0
      %4322 = vmatprep.mubr.f32.mxu0 0.0
      %4323 = vmatmul.mubr.f32.gmra.mxu0 %v3827
      %v4324 = vpop.f32.mrf.mxu0
      %v4325 = vadd.f32 %v3236, %v4324
      %v4326 = vpop.f32.mrf.mxu0
      %4327 = vmatprep.mubr.f32.mxu0 0.0
      %4328 = vmatmul.mubr.f32.gmra.mxu0 %v3830
      %v4329 = vpop.f32.mrf.mxu0
      %v4330 = vadd.f32 %v3241, %v4329
      %v4331 = vpop.f32.mrf.mxu0
      %4332 = vmatprep.mubr.f32.mxu0 0.0
      %4333 = vmatmul.mubr.f32.gmra.mxu0 %v3833
      %v4334 = vpop.f32.mrf.mxu0
      %v4335 = vadd.f32 %v3246, %v4334
      %v4336 = vpop.f32.mrf.mxu0
      %4337 = vmatprep.mubr.f32.mxu0 0.0
      %4338 = vmatmul.mubr.f32.gmra.mxu0 %v3836
      %v4339 = vpop.f32.mrf.mxu0
      %v4340 = vadd.f32 %v3251, %v4339
      %v4341 = vpop.f32.mrf.mxu0
      %4342 = vmatprep.mubr.f32.mxu0 0.0
      %4343 = vmatmul.mubr.f32.gmra.mxu0 %v3839
      %v4344 = vpop.f32.mrf.mxu0
      %v4345 = vadd.f32 %v3256, %v4344
      %v4346 = vpop.f32.mrf.mxu0
      %4347 = vmatprep.mubr.f32.mxu0 0.0
      %4348 = vmatmul.mubr.f32.gmra.mxu0 %v3842
      %v4349 = vpop.f32.mrf.mxu0
      %v4350 = vadd.f32 %v3261, %v4349
      %v4351 = vpop.f32.mrf.mxu0
      %4352 = vmatprep.mubr.f32.mxu0 0.0
      %4353 = vmatmul.mubr.f32.gmra.mxu0 %v3845
      %v4354 = vpop.f32.mrf.mxu0
      %v4355 = vadd.f32 %v3266, %v4354
      %v4356 = vpop.f32.mrf.mxu0
      %4357 = vmatprep.mubr.f32.mxu0 0.0
      %4358 = vmatmul.mubr.f32.gmra.mxu0 %v3848
      %v4359 = vpop.f32.mrf.mxu0
      %v4360 = vadd.f32 %v3271, %v4359
      %v4361 = vpop.f32.mrf.mxu0
      %4362 = vmatprep.mubr.f32.mxu0 0.0
      %4363 = vmatmul.mubr.f32.gmra.mxu0 %v3851
      %v4364 = vpop.f32.mrf.mxu0
      %v4365 = vadd.f32 %v3276, %v4364
      %v4366 = vpop.f32.mrf.mxu0
      %4367 = vmatprep.mubr.f32.mxu0 0.0
      %4368 = vmatmul.mubr.f32.gmra.mxu0 %v3854
      %v4369 = vpop.f32.mrf.mxu0
      %v4370 = vadd.f32 %v3281, %v4369
      %v4371 = vpop.f32.mrf.mxu0
      %4372 = vmatprep.mubr.f32.mxu0 0.0
      %4373 = vmatmul.mubr.f32.gmra.mxu0 %v3857
      %v4374 = vpop.f32.mrf.mxu0
      %v4375 = vadd.f32 %v3286, %v4374
      %v4376 = vpop.f32.mrf.mxu0
      %4377 = vmatprep.mubr.f32.mxu0 0.0
      %4378 = vmatmul.mubr.f32.gmra.mxu0 %v3860
      %v4379 = vpop.f32.mrf.mxu0
      %v4380 = vadd.f32 %v3291, %v4379
      %v4381 = vpop.f32.mrf.mxu0
      %4382 = vmatprep.mubr.f32.mxu0 0.0
      %4383 = vmatmul.mubr.f32.gmra.mxu0 %v3863
      %v4384 = vpop.f32.mrf.mxu0
      %v4385 = vadd.f32 %v3296, %v4384
      %v4386 = vpop.f32.mrf.mxu0
      %4387 = vmatprep.mubr.f32.mxu0 0.0
      %4388 = vmatmul.mubr.f32.gmra.mxu0 %v3866
      %v4389 = vpop.f32.mrf.mxu0
      %v4390 = vadd.f32 %v3301, %v4389
      %v4391 = vpop.f32.mrf.mxu0
      %4392 = vmatprep.mubr.f32.mxu0 0.0
      %4393 = vmatmul.mubr.f32.gmra.mxu0 %v3869
      %v4394 = vpop.f32.mrf.mxu0
      %v4395 = vadd.f32 %v3306, %v4394
      %v4396 = vpop.f32.mrf.mxu0
      %4397 = vmatprep.mubr.f32.mxu0 0.0
      %4398 = vmatmul.mubr.f32.gmra.mxu0 %v3872
      %v4399 = vpop.f32.mrf.mxu0
      %v4400 = vadd.f32 %v3311, %v4399
      %v4401 = vpop.f32.mrf.mxu0
      %4402 = vmatprep.mubr.f32.mxu0 0.0
      %4403 = vmatmul.mubr.f32.gmra.mxu0 %v3875
      %v4404 = vpop.f32.mrf.mxu0
      %v4405 = vadd.f32 %v3316, %v4404
      %v4406 = vpop.f32.mrf.mxu0
      %4407 = vmatprep.mubr.f32.mxu0 0.0
      %4408 = vmatmul.mubr.f32.gmra.mxu0 %v3878
      %v4409 = vpop.f32.mrf.mxu0
      %v4410 = vadd.f32 %v3321, %v4409
      %v4411 = vpop.f32.mrf.mxu0
      %4412 = vmatprep.mubr.f32.mxu0 0.0
      %4413 = vmatmul.mubr.f32.gmra.mxu0 %v3881
      %v4414 = vpop.f32.mrf.mxu0
      %v4415 = vadd.f32 %v3326, %v4414
      %v4416 = vpop.f32.mrf.mxu0
      %4417 = vmatprep.mubr.f32.mxu0 0.0
      %4418 = vmatmul.mubr.f32.gmra.mxu0 %v3884
      %v4419 = vpop.f32.mrf.mxu0
      %v4420 = vadd.f32 %v3331, %v4419
      %v4421 = vpop.f32.mrf.mxu0
      %4422 = vmatprep.mubr.f32.mxu0 0.0
      %4423 = vmatmul.mubr.f32.gmra.mxu0 %v3887
      %v4424 = vpop.f32.mrf.mxu0
      %v4425 = vadd.f32 %v3336, %v4424
      %v4426 = vpop.f32.mrf.mxu0
      %4427 = vmatprep.mubr.f32.mxu0 0.0
      %4428 = vmatmul.mubr.f32.gmra.mxu0 %v3890
      %v4429 = vpop.f32.mrf.mxu0
      %v4430 = vadd.f32 %v3341, %v4429
      %v4431 = vpop.f32.mrf.mxu0
      %4432 = vmatprep.mubr.f32.mxu0 0.0
      %4433 = vmatmul.mubr.f32.gmra.mxu0 %v3893
      %v4434 = vpop.f32.mrf.mxu0
      %v4435 = vadd.f32 %v3346, %v4434
      %v4436 = vpop.f32.mrf.mxu0
      %4437 = vmatprep.mubr.f32.mxu0 0.0
      %4438 = vmatmul.mubr.f32.gmra.mxu0 %v3896
      %v4439 = vpop.f32.mrf.mxu0
      %v4440 = vadd.f32 %v3351, %v4439
      %v4441 = vpop.f32.mrf.mxu0
      %4442 = vmatprep.mubr.f32.mxu0 0.0
      %4443 = vmatmul.mubr.f32.gmra.mxu0 %v3899
      %v4444 = vpop.f32.mrf.mxu0
      %v4445 = vadd.f32 %v3356, %v4444
      %v4446 = vpop.f32.mrf.mxu0
      %4447 = vmatprep.mubr.f32.mxu0 0.0
      %4448 = vmatmul.mubr.f32.gmra.mxu0 %v3902
      %v4449 = vpop.f32.mrf.mxu0
      %v4450 = vadd.f32 %v3361, %v4449
      %v4451 = vpop.f32.mrf.mxu0
      %4452 = vmatprep.mubr.f32.mxu0 0.0
      %4453 = vmatmul.mubr.f32.gmra.mxu0 %v3905
      %v4454 = vpop.f32.mrf.mxu0
      %v4455 = vadd.f32 %v3366, %v4454
      %v4456 = vpop.f32.mrf.mxu0
      %4457 = vmatprep.mubr.f32.mxu0 0.0
      %4458 = vmatmul.mubr.f32.gmra.mxu0 %v3908
      %v4459 = vpop.f32.mrf.mxu0
      %v4460 = vadd.f32 %v3371, %v4459
      %v4461 = vpop.f32.mrf.mxu0
      %4462 = vmatprep.mubr.f32.mxu0 0.0
      %4463 = vmatmul.mubr.f32.gmra.mxu0 %v3911
      %v4464 = vpop.f32.mrf.mxu0
      %v4465 = vadd.f32 %v3376, %v4464
      %v4466 = vpop.f32.mrf.mxu0
      %4467 = vmatprep.mubr.f32.mxu0 0.0
      %4468 = vmatmul.mubr.f32.gmra.mxu0 %v3914
      %v4469 = vpop.f32.mrf.mxu0
      %v4470 = vadd.f32 %v3381, %v4469
      %v4471 = vpop.f32.mrf.mxu0
      %4472 = vmatprep.mubr.f32.mxu0 0.0
      %4473 = vmatmul.mubr.f32.gmra.mxu0 %v3917
      %v4474 = vpop.f32.mrf.mxu0
      %v4475 = vadd.f32 %v3386, %v4474
      %v4476 = vpop.f32.mrf.mxu0
      %4477 = vmatprep.mubr.f32.mxu0 0.0
      %4478 = vmatmul.mubr.f32.gmra.mxu0 %v3920
      %v4479 = vpop.f32.mrf.mxu0
      %v4480 = vadd.f32 %v3391, %v4479
      %v4481 = vpop.f32.mrf.mxu0
      %4482 = vmatprep.mubr.f32.mxu0 0.0
      %4483 = vmatmul.mubr.f32.gmra.mxu0 %v3923
      %v4484 = vpop.f32.mrf.mxu0
      %v4485 = vadd.f32 %v3396, %v4484
      %v4486 = vpop.f32.mrf.mxu0
      %4487 = vmatprep.mubr.f32.mxu0 0.0
      %4488 = vmatmul.mubr.f32.gmra.mxu0 %v3926
      %v4489 = vpop.f32.mrf.mxu0
      %v4490 = vadd.f32 %v3401, %v4489
      %v4491 = vpop.f32.mrf.mxu0
      %4492 = vmatprep.mubr.f32.mxu0 0.0
      %4493 = vmatmul.mubr.f32.gmra.mxu0 %v3929
      %v4494 = vpop.f32.mrf.mxu0
      %v4495 = vadd.f32 %v3406, %v4494
      %v4496 = vpop.f32.mrf.mxu0
      %4497 = vmatprep.mubr.f32.mxu0 0.0
      %4498 = vmatmul.mubr.f32.gmra.mxu0 %v3932
      %v4499 = vpop.f32.mrf.mxu0
      %v4500 = vadd.f32 %v3411, %v4499
      %v4501 = vpop.f32.mrf.mxu0
      %4502 = vmatprep.mubr.f32.mxu0 0.0
      %4503 = vmatmul.mubr.f32.gmra.mxu0 %v3935
      %v4504 = vpop.f32.mrf.mxu0
      %v4505 = vadd.f32 %v3416, %v4504
      %v4506 = vpop.f32.mrf.mxu0
      %4507 = vmatprep.mubr.f32.mxu0 0.0
      %4508 = vmatmul.mubr.f32.gmra.mxu0 %v3938
      %v4509 = vpop.f32.mrf.mxu0
      %v4510 = vadd.f32 %v3421, %v4509
      %v4511 = vpop.f32.mrf.mxu0
      %4512 = vmatprep.mubr.f32.mxu0 0.0
      %4513 = vmatmul.mubr.f32.gmra.mxu0 %v3941
      %v4514 = vpop.f32.mrf.mxu0
      %v4515 = vadd.f32 %v3426, %v4514
      %v4516 = vpop.f32.mrf.mxu0
      %4517 = vmatprep.mubr.f32.mxu0 0.0
      %4518 = vmatmul.mubr.f32.gmra.mxu0 %v3944
      %v4519 = vpop.f32.mrf.mxu0
      %v4520 = vadd.f32 %v3431, %v4519
      %v4521 = vpop.f32.mrf.mxu0
      %4522 = vmatprep.mubr.f32.mxu0 0.0
      %4523 = vmatmul.mubr.f32.gmra.mxu0 %v3947
      %v4524 = vpop.f32.mrf.mxu0
      %v4525 = vadd.f32 %v3436, %v4524
      %v4526 = vpop.f32.mrf.mxu0
      %4527 = vmatprep.mubr.f32.mxu0 0.0
      %4528 = vmatmul.mubr.f32.gmra.mxu0 %v3950
      %v4529 = vpop.f32.mrf.mxu0
      %v4530 = vadd.f32 %v3441, %v4529
      %v4531 = vpop.f32.mrf.mxu0
      %4532 = vmatprep.mubr.f32.mxu0 0.0
      %4533 = vmatmul.mubr.f32.gmra.mxu0 %v3953
      %v4534 = vpop.f32.mrf.mxu0
      %v4535 = vadd.f32 %v3446, %v4534
      %v4536 = vpop.f32.mrf.mxu0
      %4537 = vmatprep.mubr.f32.mxu0 0.0
      %4538 = vmatmul.mubr.f32.gmra.mxu0 %v3956
      %v4539 = vpop.f32.mrf.mxu0
      %v4540 = vadd.f32 %v3451, %v4539
      %v4541 = vpop.f32.mrf.mxu0
      %4542 = vmatprep.mubr.f32.mxu0 0.0
      %4543 = vmatmul.mubr.f32.gmra.mxu0 %v3959
      %v4544 = vpop.f32.mrf.mxu0
      %v4545 = vadd.f32 %v3456, %v4544
      %v4546 = vpop.f32.mrf.mxu0
      %4547 = vmatprep.mubr.f32.mxu0 0.0
      %4548 = vmatmul.mubr.f32.gmra.mxu0 %v3962
      %v4549 = vpop.f32.mrf.mxu0
      %v4550 = vadd.f32 %v3461, %v4549
      %v4551 = vpop.f32.mrf.mxu0
      %4552 = vmatprep.mubr.f32.mxu0 0.0
      %4553 = vmatmul.mubr.f32.gmra.mxu0 %v3965
      %v4554 = vpop.f32.mrf.mxu0
      %v4555 = vadd.f32 %v3466, %v4554
      %v4556 = vpop.f32.mrf.mxu0
      %4557 = vmatprep.mubr.f32.mxu0 0.0
      %4558 = vmatmul.mubr.f32.gmra.mxu0 %v3968
      %v4559 = vpop.f32.mrf.mxu0
      %v4560 = vadd.f32 %v3471, %v4559
      %v4561 = vpop.f32.mrf.mxu0
      %4562 = vmatprep.mubr.f32.mxu0 0.0
      %4563 = vmatmul.mubr.f32.gmra.mxu0 %v3971
      %v4564 = vpop.f32.mrf.mxu0
      %v4565 = vadd.f32 %v3476, %v4564
      %v4566 = vpop.f32.mrf.mxu0
      %4567 = vmatprep.mubr.f32.mxu0 0.0
      %4568 = vmatmul.mubr.f32.gmra.mxu0 %v3974
      %v4569 = vpop.f32.mrf.mxu0
      %v4570 = vadd.f32 %v3481, %v4569
      %v4571 = vpop.f32.mrf.mxu0
      %4572 = vmatprep.mubr.f32.mxu0 0.0
      %4573 = vmatmul.mubr.f32.gmra.mxu0 %v3977
      %v4574 = vpop.f32.mrf.mxu0
      %v4575 = vadd.f32 %v3486, %v4574
      %v4576 = vpop.f32.mrf.mxu0
      %4577 = vmatprep.mubr.f32.mxu0 0.0
      %4578 = vmatmul.mubr.f32.gmra.mxu0 %v3980
      %v4579 = vpop.f32.mrf.mxu0
      %v4580 = vadd.f32 %v3491, %v4579
      %v4581 = vpop.f32.mrf.mxu0
      %4582 = vmatprep.mubr.f32.mxu0 0.0
      %4583 = vmatmul.mubr.f32.gmra.mxu0 %v3983
      %v4584 = vpop.f32.mrf.mxu0
      %v4585 = vadd.f32 %v3496, %v4584
      %v4586 = vpop.f32.mrf.mxu0
      %4587 = vmatprep.mubr.f32.mxu0 0.0
      %4588 = vmatmul.mubr.f32.gmra.mxu0 %v3986
      %v4589 = vpop.f32.mrf.mxu0
      %v4590 = vadd.f32 %v3501, %v4589
      %v4591 = vpop.f32.mrf.mxu0
      %4592 = vmatprep.mubr.f32.mxu0 0.0
      %4593 = vmatmul.mubr.f32.gmra.mxu0 %v3989
      %v4594 = vpop.f32.mrf.mxu0
      %v4595 = vadd.f32 %v3506, %v4594
      %v4596 = vpop.f32.mrf.mxu0
      %4597 = vmatprep.mubr.f32.mxu0 0.0
      %4598 = vmatmul.mubr.f32.gmra.mxu0 %v3992
      %v4599 = vpop.f32.mrf.mxu0
      %v4600 = vadd.f32 %v3511, %v4599
      %v4601 = vpop.f32.mrf.mxu0
      %4602 = vmatprep.mubr.f32.mxu0 0.0
      %4603 = vmatmul.mubr.f32.gmra.mxu0 %v3995
      %v4604 = vpop.f32.mrf.mxu0
      %v4605 = vadd.f32 %v3516, %v4604
      %v4606 = vpop.f32.mrf.mxu0
      %4607 = vmatprep.mubr.f32.mxu0 0.0
      %4608 = vmatmul.mubr.f32.gmra.mxu0 %v3998
      %v4609 = vpop.f32.mrf.mxu0
      %v4610 = vadd.f32 %v3521, %v4609
      %v4611 = vpop.f32.mrf.mxu0
      %4612 = vmatprep.mubr.f32.mxu0 0.0
      %4613 = vmatmul.mubr.f32.gmra.mxu0 %v4001
      %v4614 = vpop.f32.mrf.mxu0
      %v4615 = vadd.f32 %v3526, %v4614
      %v4616 = vpop.f32.mrf.mxu0
      %4617 = vmatprep.mubr.f32.mxu0 0.0
      %4618 = vmatmul.mubr.f32.gmra.mxu0 %v4004
      %v4619 = vpop.f32.mrf.mxu0
      %v4620 = vadd.f32 %v3531, %v4619
      %v4621 = vpop.f32.mrf.mxu0
      %4622 = vmatprep.mubr.f32.mxu0 0.0
      %4623 = vmatmul.mubr.f32.gmra.mxu0 %v4007
      %v4624 = vpop.f32.mrf.mxu0
      %v4625 = vadd.f32 %v3536, %v4624
      %v4626 = vpop.f32.mrf.mxu0
      %4627 = vmatprep.mubr.f32.mxu0 0.0
      %4628 = vmatmul.mubr.f32.gmra.mxu0 %v4010
      %v4629 = vpop.f32.mrf.mxu0
      %v4630 = vadd.f32 %v3541, %v4629
      %v4631 = vpop.f32.mrf.mxu0
      %4632 = vmatprep.mubr.f32.mxu0 0.0
      %4633 = vmatmul.mubr.f32.gmra.mxu0 %v4013
      %v4634 = vpop.f32.mrf.mxu0
      %v4635 = vadd.f32 %v3546, %v4634
      %v4636 = vpop.f32.mrf.mxu0
      %4637 = vmatprep.mubr.f32.mxu0 0.0
      %4638 = vmatmul.mubr.f32.gmra.mxu0 %v4016
      %v4639 = vpop.f32.mrf.mxu0
      %v4640 = vadd.f32 %v3551, %v4639
      %v4641 = vpop.f32.mrf.mxu0
      %4642 = vmatprep.mubr.f32.mxu0 0.0
      %4643 = vmatmul.mubr.f32.gmra.mxu0 %v4019
      %v4644 = vpop.f32.mrf.mxu0
      %v4645 = vadd.f32 %v3556, %v4644
      %v4646 = vpop.f32.mrf.mxu0
      %4647 = vmatprep.mubr.f32.mxu0 0.0
      %4648 = vmatmul.mubr.f32.gmra.mxu0 %v4022
      %v4649 = vpop.f32.mrf.mxu0
      %v4650 = vadd.f32 %v3561, %v4649
      %v4651 = vpop.f32.mrf.mxu0
      %4652 = vmatprep.mubr.f32.mxu0 0.0
      %4653 = vmatmul.mubr.f32.gmra.mxu0 %v4025
      %v4654 = vpop.f32.mrf.mxu0
      %v4655 = vadd.f32 %v3566, %v4654
      %v4656 = vpop.f32.mrf.mxu0
      %4657 = vmatprep.mubr.f32.mxu0 0.0
      %4658 = vmatmul.mubr.f32.gmra.mxu0 %v4028
      %v4659 = vpop.f32.mrf.mxu0
      %v4660 = vadd.f32 %v3571, %v4659
      %v4661 = vpop.f32.mrf.mxu0
      %4662 = vmatprep.mubr.f32.mxu0 0.0
      %4663 = vmatmul.mubr.f32.gmra.mxu0 %v4031
      %v4664 = vpop.f32.mrf.mxu0
      %v4665 = vadd.f32 %v3576, %v4664
      %v4666 = vpop.f32.mrf.mxu0
      %4667 = vmatprep.mubr.f32.mxu0 0.0
      %4668 = vmatmul.mubr.f32.gmra.mxu0 %v4034
      %v4669 = vpop.f32.mrf.mxu0
      %v4670 = vadd.f32 %v3581, %v4669
      %v4671 = vpop.f32.mrf.mxu0
      %4672 = vmatprep.mubr.f32.mxu0 0.0
      %4673 = vmatmul.mubr.f32.gmra.mxu0 %v4037
      %v4674 = vpop.f32.mrf.mxu0
      %v4675 = vadd.f32 %v3586, %v4674
      %v4676 = vpop.f32.mrf.mxu0
      %4677 = vmatprep.mubr.f32.mxu0 0.0
      %4678 = vmatmul.mubr.f32.gmra.mxu0 %v4040
      %v4679 = vpop.f32.mrf.mxu0
      %v4680 = vadd.f32 %v3591, %v4679
      %v4681 = vpop.f32.mrf.mxu0
      %4682 = vmatprep.mubr.f32.mxu0 0.0
      %4683 = vmatmul.mubr.f32.gmra.mxu0 %v4043
      %v4684 = vpop.f32.mrf.mxu0
      %v4685 = vadd.f32 %v3596, %v4684
      %v4686 = vpop.f32.mrf.mxu0
      %4687 = vmatprep.mubr.f32.mxu0 0.0
      %4688 = vmatmul.mubr.f32.gmra.mxu0 %v4046
      %v4689 = vpop.f32.mrf.mxu0
      %v4690 = vadd.f32 %v3601, %v4689
      %v4691 = vpop.f32.mrf.mxu0
      %4692 = vmatprep.mubr.f32.mxu0 0.0
      %4693 = vmatmul.mubr.f32.gmra.mxu0 %v4049
      %v4694 = vpop.f32.mrf.mxu0
      %v4695 = vadd.f32 %v3606, %v4694
      %v4696 = vpop.f32.mrf.mxu0
      %4697 = vmatprep.mubr.f32.mxu0 0.0
      %4698 = vmatmul.mubr.f32.gmra.mxu0 %v4052
      %v4699 = vpop.f32.mrf.mxu0
      %v4700 = vadd.f32 %v3611, %v4699
      %v4701 = vpop.f32.mrf.mxu0
      %4702 = vmatprep.mubr.f32.mxu0 0.0
      %4703 = vmatmul.mubr.f32.gmra.mxu0 %v4055
      %v4704 = vpop.f32.mrf.mxu0
      %v4705 = vadd.f32 %v3616, %v4704
      %v4706 = vpop.f32.mrf.mxu0
      %4707 = vmatprep.mubr.f32.mxu0 0.0
      %4708 = vmatmul.mubr.f32.gmra.mxu0 %v4058
      %v4709 = vpop.f32.mrf.mxu0
      %v4710 = vadd.f32 %v3621, %v4709
      %v4711 = vpop.f32.mrf.mxu0
      %4712 = vmatprep.mubr.f32.mxu0 0.0
      %4713 = vmatmul.mubr.f32.gmra.mxu0 %v4061
      %v4714 = vpop.f32.mrf.mxu0
      %v4715 = vadd.f32 %v3626, %v4714
      %v4716 = vpop.f32.mrf.mxu0
      %4717 = vmatprep.mubr.f32.mxu0 0.0
      %4718 = vmatmul.mubr.f32.gmra.mxu0 %v4064
      %v4719 = vpop.f32.mrf.mxu0
      %v4720 = vadd.f32 %v3631, %v4719
      %v4721 = vpop.f32.mrf.mxu0
      %4722 = vmatprep.mubr.f32.mxu0 0.0
      %4723 = vmatmul.mubr.f32.gmra.mxu0 %v4067
      %v4724 = vpop.f32.mrf.mxu0
      %v4725 = vadd.f32 %v3636, %v4724
      %v4726 = vpop.f32.mrf.mxu0
      %4727 = vmatprep.mubr.f32.mxu0 0.0
      %4728 = vmatmul.mubr.f32.gmra.mxu0 %v4070
      %v4729 = vpop.f32.mrf.mxu0
      %v4730 = vadd.f32 %v3641, %v4729
      %v4731 = vpop.f32.mrf.mxu0
      %4732 = vmatprep.mubr.f32.mxu0 0.0
      %4733 = vmatmul.mubr.f32.gmra.mxu0 %v4073
      %v4734 = vpop.f32.mrf.mxu0
      %v4735 = vadd.f32 %v3646, %v4734
      %v4736 = vpop.f32.mrf.mxu0
      %4737 = vmatprep.mubr.f32.mxu0 0.0
      %4738 = vmatmul.mubr.f32.gmra.mxu0 %v4076
      %v4739 = vpop.f32.mrf.mxu0
      %v4740 = vadd.f32 %v3651, %v4739
      %v4741 = vpop.f32.mrf.mxu0
      %4742 = vmatprep.mubr.f32.mxu0 0.0
      %4743 = vmatmul.mubr.f32.gmra.mxu0 %v4079
      %v4744 = vpop.f32.mrf.mxu0
      %v4745 = vadd.f32 %v3656, %v4744
      %v4746 = vpop.f32.mrf.mxu0
      %4747 = vmatprep.mubr.f32.mxu0 0.0
      %4748 = vmatmul.mubr.f32.gmra.mxu0 %v4082
      %v4749 = vpop.f32.mrf.mxu0
      %v4750 = vadd.f32 %v3661, %v4749
      %v4751 = vpop.f32.mrf.mxu0
      %4752 = vmatprep.mubr.f32.mxu0 0.0
      %4753 = vmatmul.mubr.f32.gmra.mxu0 %v4085
      %v4754 = vpop.f32.mrf.mxu0
      %v4755 = vadd.f32 %v3666, %v4754
      %v4756 = vpop.f32.mrf.mxu0
      %4757 = vmatprep.mubr.f32.mxu0 0.0
      %4758 = vmatmul.mubr.f32.gmra.mxu0 %v4088
      %v4759 = vpop.f32.mrf.mxu0
      %v4760 = vadd.f32 %v3671, %v4759
      %v4761 = vpop.f32.mrf.mxu0
      %4762 = vmatprep.mubr.f32.mxu0 0.0
      %4763 = vmatmul.mubr.f32.gmra.mxu0 %v4091
      %v4764 = vpop.f32.mrf.mxu0
      %v4765 = vadd.f32 %v3676, %v4764
      %v4766 = vpop.f32.mrf.mxu0
      %4767 = vmatprep.mubr.f32.mxu0 0.0
      %4768 = vmatmul.mubr.f32.gmra.mxu0 %v4094
      %v4769 = vpop.f32.mrf.mxu0
      %v4770 = vadd.f32 %v3681, %v4769
      %v4771 = vpop.f32.mrf.mxu0
      %4772 = vmatprep.mubr.f32.mxu0 0.0
      %4773 = vmatmul.mubr.f32.gmra.mxu0 %v4097
      %v4774 = vpop.f32.mrf.mxu0
      %v4775 = vadd.f32 %v3686, %v4774
      %v4776 = vpop.f32.mrf.mxu0
      %4777 = vmatprep.mubr.f32.mxu0 0.0
      %4778 = vmatmul.mubr.f32.gmra.mxu0 %v4100
      %v4779 = vpop.f32.mrf.mxu0
      %v4780 = vadd.f32 %v3691, %v4779
      %v4781 = vpop.f32.mrf.mxu0
      %4782 = vmatprep.mubr.f32.mxu0 0.0
      %4783 = vmatmul.mubr.f32.gmra.mxu0 %v4103
      %v4784 = vpop.f32.mrf.mxu0
      %v4785 = vadd.f32 %v3696, %v4784
      %v4786 = vpop.f32.mrf.mxu0
      %4787 = vmatprep.mubr.f32.mxu0 0.0
      %4788 = vmatmul.mubr.f32.gmra.mxu0 %v4106
      %v4789 = vpop.f32.mrf.mxu0
      %v4790 = vadd.f32 %v3701, %v4789
      %v4791 = vpop.f32.mrf.mxu0
      %4792 = vmatprep.mubr.f32.mxu0 0.0
      %4793 = vmatmul.mubr.f32.gmra.mxu0 %v4109
      %v4794 = vpop.f32.mrf.mxu0
      %v4795 = vadd.f32 %v3706, %v4794
      %v4796 = vpop.f32.mrf.mxu0
      %4797 = vmatprep.mubr.f32.mxu0 0.0
      %4798 = vmatmul.mubr.f32.gmra.mxu0 %v4112
      %v4799 = vpop.f32.mrf.mxu0
      %v4800 = vadd.f32 %v3711, %v4799
      %v4801 = vpop.f32.mrf.mxu0
      %4802 = vmatprep.mubr.f32.mxu0 0.0
      %4803 = vmatmul.mubr.f32.gmra.mxu0 %v4115
      %v4804 = vpop.f32.mrf.mxu0
      %v4805 = vadd.f32 %v3716, %v4804
      %v4806 = vpop.f32.mrf.mxu0
      %4807 = vmatprep.mubr.f32.mxu0 0.0
      %4808 = vmatmul.mubr.f32.gmra.mxu0 %v4118
      %v4809 = vpop.f32.mrf.mxu0
      %v4810 = vadd.f32 %v3721, %v4809
      %v4811 = vpop.f32.mrf.mxu0
      %4812 = vmatprep.mubr.f32.mxu0 0.0
      %4813 = vmatmul.mubr.f32.gmra.mxu0 %v4121
      %v4814 = vpop.f32.mrf.mxu0
      %v4815 = vadd.f32 %v3726, %v4814
      %v4816 = vpop.f32.mrf.mxu0
      %4817 = vmatprep.mubr.f32.mxu0 0.0
      %4818 = vmatmul.mubr.f32.gmra.mxu0 %v4124
      %v4819 = vpop.f32.mrf.mxu0
      %v4820 = vadd.f32 %v3731, %v4819
      %v4821 = vpop.f32.mrf.mxu0
      %4822 = vmatprep.mubr.f32.mxu0 0.0
      %4823 = vmatmul.mubr.f32.gmra.mxu0 %v4127
      %v4824 = vpop.f32.mrf.mxu0
      %v4825 = vadd.f32 %v3736, %v4824
      %v4826 = vpop.f32.mrf.mxu0
      %4827 = vmatprep.mubr.f32.mxu0 0.0
      %4828 = vmatmul.mubr.f32.gmra.mxu0 %v4130
      %v4829 = vpop.f32.mrf.mxu0
      %v4830 = vadd.f32 %v3741, %v4829
      %v4831 = vpop.f32.mrf.mxu0
      %4832 = vmatprep.mubr.f32.mxu0 0.0
      %4833 = vmatmul.mubr.f32.gmra.mxu0 %v4133
      %v4834 = vpop.f32.mrf.mxu0
      %v4835 = vadd.f32 %v3746, %v4834
      %v4836 = vpop.f32.mrf.mxu0
      %4837 = vmatprep.mubr.f32.mxu0 0.0
      %4838 = vmatmul.mubr.f32.gmra.mxu0 %v4136
      %v4839 = vpop.f32.mrf.mxu0
      %v4840 = vadd.f32 %v3751, %v4839
      %v4841 = vpop.f32.mrf.mxu0
      %4842 = vdwg.mxu0
      %v4843 = vld [vmem:[%s6] sm:$0x1]
      %4845 = vset.pattern.permute.xlu0 0
      %4846 = vperm.xlu0 %4845, %v663
      %v4847 = vpop.permute.xlu0 %4846
      %4850 = vset.pattern.permute.xlu0 0
      %4851 = vperm.xlu0 %4850, %v664
      %v4852 = vpop.permute.xlu0 %4851
      %4855 = vset.pattern.permute.xlu0 0
      %4856 = vperm.xlu0 %4855, %v665
      %v4857 = vpop.permute.xlu0 %4856
      %4860 = vset.pattern.permute.xlu0 0
      %4861 = vperm.xlu0 %4860, %v666
      %v4862 = vpop.permute.xlu0 %4861
      %4865 = vset.pattern.permute.xlu0 0
      %4866 = vperm.xlu0 %4865, %v667
      %v4867 = vpop.permute.xlu0 %4866
      %4870 = vset.pattern.permute.xlu0 0
      %4871 = vperm.xlu0 %4870, %v668
      %v4872 = vpop.permute.xlu0 %4871
      %4875 = vset.pattern.permute.xlu0 0
      %4876 = vperm.xlu0 %4875, %v669
      %v4877 = vpop.permute.xlu0 %4876
      %4880 = vset.pattern.permute.xlu0 0
      %4881 = vperm.xlu0 %4880, %v670
      %v4882 = vpop.permute.xlu0 %4881
      %4885 = vset.pattern.permute.xlu0 0
      %4886 = vperm.xlu0 %4885, %v671
      %v4887 = vpop.permute.xlu0 %4886
      %4890 = vset.pattern.permute.xlu0 0
      %4891 = vperm.xlu0 %4890, %v672
      %v4892 = vpop.permute.xlu0 %4891
      %4895 = vset.pattern.permute.xlu0 0
      %4896 = vperm.xlu0 %4895, %v673
      %v4897 = vpop.permute.xlu0 %4896
      %4900 = vset.pattern.permute.xlu0 0
      %4901 = vperm.xlu0 %4900, %v674
      %v4902 = vpop.permute.xlu0 %4901
      %4905 = vset.pattern.permute.xlu0 0
      %4906 = vperm.xlu0 %4905, %v675
      %v4907 = vpop.permute.xlu0 %4906
      %4910 = vset.pattern.permute.xlu0 0
      %4911 = vperm.xlu0 %4910, %v676
      %v4912 = vpop.permute.xlu0 %4911
      %4915 = vset.pattern.permute.xlu0 0
      %4916 = vperm.xlu0 %4915, %v677
      %v4917 = vpop.permute.xlu0 %4916
      %4920 = vset.pattern.permute.xlu0 0
      %4921 = vperm.xlu0 %4920, %v678
      %v4922 = vpop.permute.xlu0 %4921
      %4925 = vset.pattern.permute.xlu0 0
      %4926 = vperm.xlu0 %4925, %v679
      %v4927 = vpop.permute.xlu0 %4926
      %4930 = vset.pattern.permute.xlu0 0
      %4931 = vperm.xlu0 %4930, %v680
      %v4932 = vpop.permute.xlu0 %4931
      %4935 = vset.pattern.permute.xlu0 0
      %4936 = vperm.xlu0 %4935, %v681
      %v4937 = vpop.permute.xlu0 %4936
      %4940 = vset.pattern.permute.xlu0 0
      %4941 = vperm.xlu0 %4940, %v682
      %v4942 = vpop.permute.xlu0 %4941
      %4945 = vset.pattern.permute.xlu0 0
      %4946 = vperm.xlu0 %4945, %v683
      %v4947 = vpop.permute.xlu0 %4946
      %4950 = vset.pattern.permute.xlu0 0
      %4951 = vperm.xlu0 %4950, %v684
      %v4952 = vpop.permute.xlu0 %4951
      %4955 = vset.pattern.permute.xlu0 0
      %4956 = vperm.xlu0 %4955, %v685
      %v4957 = vpop.permute.xlu0 %4956
      %4960 = vset.pattern.permute.xlu0 0
      %4961 = vperm.xlu0 %4960, %v686
      %v4962 = vpop.permute.xlu0 %4961
      %4965 = vset.pattern.permute.xlu0 0
      %4966 = vperm.xlu0 %4965, %v687
      %v4967 = vpop.permute.xlu0 %4966
      %4970 = vset.pattern.permute.xlu0 0
      %4971 = vperm.xlu0 %4970, %v688
      %v4972 = vpop.permute.xlu0 %4971
      %4975 = vset.pattern.permute.xlu0 0
      %4976 = vperm.xlu0 %4975, %v689
      %v4977 = vpop.permute.xlu0 %4976
      %4980 = vset.pattern.permute.xlu0 0
      %4981 = vperm.xlu0 %4980, %v690
      %v4982 = vpop.permute.xlu0 %4981
      %4985 = vset.pattern.permute.xlu0 0
      %4986 = vperm.xlu0 %4985, %v691
      %v4987 = vpop.permute.xlu0 %4986
      %4990 = vset.pattern.permute.xlu0 0
      %4991 = vperm.xlu0 %4990, %v692
      %v4992 = vpop.permute.xlu0 %4991
      %4995 = vset.pattern.permute.xlu0 0
      %4996 = vperm.xlu0 %4995, %v693
      %v4997 = vpop.permute.xlu0 %4996
      %5000 = vset.pattern.permute.xlu0 0
      %5001 = vperm.xlu0 %5000, %v694
      %v5002 = vpop.permute.xlu0 %5001
      %5005 = vset.pattern.permute.xlu0 0
      %5006 = vperm.xlu0 %5005, %v695
      %v5007 = vpop.permute.xlu0 %5006
      %5010 = vset.pattern.permute.xlu0 0
      %5011 = vperm.xlu0 %5010, %v696
      %v5012 = vpop.permute.xlu0 %5011
      %5015 = vset.pattern.permute.xlu0 0
      %5016 = vperm.xlu0 %5015, %v697
      %v5017 = vpop.permute.xlu0 %5016
      %5020 = vset.pattern.permute.xlu0 0
      %5021 = vperm.xlu0 %5020, %v698
      %v5022 = vpop.permute.xlu0 %5021
      %5025 = vset.pattern.permute.xlu0 0
      %5026 = vperm.xlu0 %5025, %v699
      %v5027 = vpop.permute.xlu0 %5026
      %5030 = vset.pattern.permute.xlu0 0
      %5031 = vperm.xlu0 %5030, %v700
      %v5032 = vpop.permute.xlu0 %5031
      %5035 = vset.pattern.permute.xlu0 0
      %5036 = vperm.xlu0 %5035, %v701
      %v5037 = vpop.permute.xlu0 %5036
      %5040 = vset.pattern.permute.xlu0 0
      %5041 = vperm.xlu0 %5040, %v702
      %v5042 = vpop.permute.xlu0 %5041
      %5045 = vset.pattern.permute.xlu0 0
      %5046 = vperm.xlu0 %5045, %v703
      %v5047 = vpop.permute.xlu0 %5046
      %5050 = vset.pattern.permute.xlu0 0
      %5051 = vperm.xlu0 %5050, %v704
      %v5052 = vpop.permute.xlu0 %5051
      %5055 = vset.pattern.permute.xlu0 0
      %5056 = vperm.xlu0 %5055, %v705
      %v5057 = vpop.permute.xlu0 %5056
      %5060 = vset.pattern.permute.xlu0 0
      %5061 = vperm.xlu0 %5060, %v706
      %v5062 = vpop.permute.xlu0 %5061
      %5065 = vset.pattern.permute.xlu0 0
      %5066 = vperm.xlu0 %5065, %v707
      %v5067 = vpop.permute.xlu0 %5066
      %5070 = vset.pattern.permute.xlu0 0
      %5071 = vperm.xlu0 %5070, %v708
      %v5072 = vpop.permute.xlu0 %5071
      %5075 = vset.pattern.permute.xlu0 0
      %5076 = vperm.xlu0 %5075, %v709
      %v5077 = vpop.permute.xlu0 %5076
      %5080 = vset.pattern.permute.xlu0 0
      %5081 = vperm.xlu0 %5080, %v710
      %v5082 = vpop.permute.xlu0 %5081
      %5085 = vset.pattern.permute.xlu0 0
      %5086 = vperm.xlu0 %5085, %v711
      %v5087 = vpop.permute.xlu0 %5086
      %5090 = vset.pattern.permute.xlu0 0
      %5091 = vperm.xlu0 %5090, %v712
      %v5092 = vpop.permute.xlu0 %5091
      %5095 = vset.pattern.permute.xlu0 0
      %5096 = vperm.xlu0 %5095, %v713
      %v5097 = vpop.permute.xlu0 %5096
      %5100 = vset.pattern.permute.xlu0 0
      %5101 = vperm.xlu0 %5100, %v714
      %v5102 = vpop.permute.xlu0 %5101
      %5105 = vset.pattern.permute.xlu0 0
      %5106 = vperm.xlu0 %5105, %v715
      %v5107 = vpop.permute.xlu0 %5106
      %5110 = vset.pattern.permute.xlu0 0
      %5111 = vperm.xlu0 %5110, %v716
      %v5112 = vpop.permute.xlu0 %5111
      %5115 = vset.pattern.permute.xlu0 0
      %5116 = vperm.xlu0 %5115, %v717
      %v5117 = vpop.permute.xlu0 %5116
      %5120 = vset.pattern.permute.xlu0 0
      %5121 = vperm.xlu0 %5120, %v718
      %v5122 = vpop.permute.xlu0 %5121
      %5125 = vset.pattern.permute.xlu0 0
      %5126 = vperm.xlu0 %5125, %v719
      %v5127 = vpop.permute.xlu0 %5126
      %5130 = vset.pattern.permute.xlu0 0
      %5131 = vperm.xlu0 %5130, %v720
      %v5132 = vpop.permute.xlu0 %5131
      %5135 = vset.pattern.permute.xlu0 0
      %5136 = vperm.xlu0 %5135, %v721
      %v5137 = vpop.permute.xlu0 %5136
      %5140 = vset.pattern.permute.xlu0 0
      %5141 = vperm.xlu0 %5140, %v722
      %v5142 = vpop.permute.xlu0 %5141
      %5145 = vset.pattern.permute.xlu0 0
      %5146 = vperm.xlu0 %5145, %v723
      %v5147 = vpop.permute.xlu0 %5146
      %5150 = vset.pattern.permute.xlu0 0
      %5151 = vperm.xlu0 %5150, %v724
      %v5152 = vpop.permute.xlu0 %5151
      %5155 = vset.pattern.permute.xlu0 0
      %5156 = vperm.xlu0 %5155, %v725
      %v5157 = vpop.permute.xlu0 %5156
      %5160 = vset.pattern.permute.xlu0 0
      %5161 = vperm.xlu0 %5160, %v726
      %v5162 = vpop.permute.xlu0 %5161
      %5165 = vset.pattern.permute.xlu0 0
      %5166 = vperm.xlu0 %5165, %v727
      %v5167 = vpop.permute.xlu0 %5166
      %5170 = vset.pattern.permute.xlu0 0
      %5171 = vperm.xlu0 %5170, %v728
      %v5172 = vpop.permute.xlu0 %5171
      %5175 = vset.pattern.permute.xlu0 0
      %5176 = vperm.xlu0 %5175, %v729
      %v5177 = vpop.permute.xlu0 %5176
      %5180 = vset.pattern.permute.xlu0 0
      %5181 = vperm.xlu0 %5180, %v730
      %v5182 = vpop.permute.xlu0 %5181
      %5185 = vset.pattern.permute.xlu0 0
      %5186 = vperm.xlu0 %5185, %v731
      %v5187 = vpop.permute.xlu0 %5186
      %5190 = vset.pattern.permute.xlu0 0
      %5191 = vperm.xlu0 %5190, %v732
      %v5192 = vpop.permute.xlu0 %5191
      %5195 = vset.pattern.permute.xlu0 0
      %5196 = vperm.xlu0 %5195, %v733
      %v5197 = vpop.permute.xlu0 %5196
      %5200 = vset.pattern.permute.xlu0 0
      %5201 = vperm.xlu0 %5200, %v734
      %v5202 = vpop.permute.xlu0 %5201
      %5205 = vset.pattern.permute.xlu0 0
      %5206 = vperm.xlu0 %5205, %v735
      %v5207 = vpop.permute.xlu0 %5206
      %5210 = vset.pattern.permute.xlu0 0
      %5211 = vperm.xlu0 %5210, %v736
      %v5212 = vpop.permute.xlu0 %5211
      %5215 = vset.pattern.permute.xlu0 0
      %5216 = vperm.xlu0 %5215, %v737
      %v5217 = vpop.permute.xlu0 %5216
      %5220 = vset.pattern.permute.xlu0 0
      %5221 = vperm.xlu0 %5220, %v738
      %v5222 = vpop.permute.xlu0 %5221
      %5225 = vset.pattern.permute.xlu0 0
      %5226 = vperm.xlu0 %5225, %v739
      %v5227 = vpop.permute.xlu0 %5226
      %5230 = vset.pattern.permute.xlu0 0
      %5231 = vperm.xlu0 %5230, %v740
      %v5232 = vpop.permute.xlu0 %5231
      %5235 = vset.pattern.permute.xlu0 0
      %5236 = vperm.xlu0 %5235, %v741
      %v5237 = vpop.permute.xlu0 %5236
      %5240 = vset.pattern.permute.xlu0 0
      %5241 = vperm.xlu0 %5240, %v742
      %v5242 = vpop.permute.xlu0 %5241
      %5245 = vset.pattern.permute.xlu0 0
      %5246 = vperm.xlu0 %5245, %v743
      %v5247 = vpop.permute.xlu0 %5246
      %5250 = vset.pattern.permute.xlu0 0
      %5251 = vperm.xlu0 %5250, %v744
      %v5252 = vpop.permute.xlu0 %5251
      %5255 = vset.pattern.permute.xlu0 0
      %5256 = vperm.xlu0 %5255, %v745
      %v5257 = vpop.permute.xlu0 %5256
      %5260 = vset.pattern.permute.xlu0 0
      %5261 = vperm.xlu0 %5260, %v746
      %v5262 = vpop.permute.xlu0 %5261
      %5265 = vset.pattern.permute.xlu0 0
      %5266 = vperm.xlu0 %5265, %v747
      %v5267 = vpop.permute.xlu0 %5266
      %5270 = vset.pattern.permute.xlu0 0
      %5271 = vperm.xlu0 %5270, %v748
      %v5272 = vpop.permute.xlu0 %5271
      %5275 = vset.pattern.permute.xlu0 0
      %5276 = vperm.xlu0 %5275, %v749
      %v5277 = vpop.permute.xlu0 %5276
      %5280 = vset.pattern.permute.xlu0 0
      %5281 = vperm.xlu0 %5280, %v750
      %v5282 = vpop.permute.xlu0 %5281
      %5285 = vset.pattern.permute.xlu0 0
      %5286 = vperm.xlu0 %5285, %v751
      %v5287 = vpop.permute.xlu0 %5286
      %5290 = vset.pattern.permute.xlu0 0
      %5291 = vperm.xlu0 %5290, %v752
      %v5292 = vpop.permute.xlu0 %5291
      %5295 = vset.pattern.permute.xlu0 0
      %5296 = vperm.xlu0 %5295, %v753
      %v5297 = vpop.permute.xlu0 %5296
      %5300 = vset.pattern.permute.xlu0 0
      %5301 = vperm.xlu0 %5300, %v754
      %v5302 = vpop.permute.xlu0 %5301
      %5305 = vset.pattern.permute.xlu0 0
      %5306 = vperm.xlu0 %5305, %v755
      %v5307 = vpop.permute.xlu0 %5306
      %5310 = vset.pattern.permute.xlu0 0
      %5311 = vperm.xlu0 %5310, %v756
      %v5312 = vpop.permute.xlu0 %5311
      %5315 = vset.pattern.permute.xlu0 0
      %5316 = vperm.xlu0 %5315, %v757
      %v5317 = vpop.permute.xlu0 %5316
      %5320 = vset.pattern.permute.xlu0 0
      %5321 = vperm.xlu0 %5320, %v758
      %v5322 = vpop.permute.xlu0 %5321
      %5325 = vset.pattern.permute.xlu0 0
      %5326 = vperm.xlu0 %5325, %v759
      %v5327 = vpop.permute.xlu0 %5326
      %5330 = vset.pattern.permute.xlu0 0
      %5331 = vperm.xlu0 %5330, %v760
      %v5332 = vpop.permute.xlu0 %5331
      %5335 = vset.pattern.permute.xlu0 0
      %5336 = vperm.xlu0 %5335, %v761
      %v5337 = vpop.permute.xlu0 %5336
      %5340 = vset.pattern.permute.xlu0 0
      %5341 = vperm.xlu0 %5340, %v762
      %v5342 = vpop.permute.xlu0 %5341
      %5345 = vset.pattern.permute.xlu0 0
      %5346 = vperm.xlu0 %5345, %v763
      %v5347 = vpop.permute.xlu0 %5346
      %5350 = vset.pattern.permute.xlu0 0
      %5351 = vperm.xlu0 %5350, %v764
      %v5352 = vpop.permute.xlu0 %5351
      %5355 = vset.pattern.permute.xlu0 0
      %5356 = vperm.xlu0 %5355, %v765
      %v5357 = vpop.permute.xlu0 %5356
      %5360 = vset.pattern.permute.xlu0 0
      %5361 = vperm.xlu0 %5360, %v766
      %v5362 = vpop.permute.xlu0 %5361
      %5365 = vset.pattern.permute.xlu0 0
      %5366 = vperm.xlu0 %5365, %v767
      %v5367 = vpop.permute.xlu0 %5366
      %5370 = vset.pattern.permute.xlu0 0
      %5371 = vperm.xlu0 %5370, %v768
      %v5372 = vpop.permute.xlu0 %5371
      %5375 = vset.pattern.permute.xlu0 0
      %5376 = vperm.xlu0 %5375, %v769
      %v5377 = vpop.permute.xlu0 %5376
      %5380 = vset.pattern.permute.xlu0 0
      %5381 = vperm.xlu0 %5380, %v770
      %v5382 = vpop.permute.xlu0 %5381
      %5385 = vset.pattern.permute.xlu0 0
      %5386 = vperm.xlu0 %5385, %v771
      %v5387 = vpop.permute.xlu0 %5386
      %5390 = vset.pattern.permute.xlu0 0
      %5391 = vperm.xlu0 %5390, %v772
      %v5392 = vpop.permute.xlu0 %5391
      %5395 = vset.pattern.permute.xlu0 0
      %5396 = vperm.xlu0 %5395, %v773
      %v5397 = vpop.permute.xlu0 %5396
      %5400 = vset.pattern.permute.xlu0 0
      %5401 = vperm.xlu0 %5400, %v774
      %v5402 = vpop.permute.xlu0 %5401
      %5405 = vset.pattern.permute.xlu0 0
      %5406 = vperm.xlu0 %5405, %v775
      %v5407 = vpop.permute.xlu0 %5406
      %5410 = vset.pattern.permute.xlu0 0
      %5411 = vperm.xlu0 %5410, %v776
      %v5412 = vpop.permute.xlu0 %5411
      %5415 = vset.pattern.permute.xlu0 0
      %5416 = vperm.xlu0 %5415, %v777
      %v5417 = vpop.permute.xlu0 %5416
      %5420 = vset.pattern.permute.xlu0 0
      %5421 = vperm.xlu0 %5420, %v778
      %v5422 = vpop.permute.xlu0 %5421
      %5425 = vset.pattern.permute.xlu0 0
      %5426 = vperm.xlu0 %5425, %v779
      %v5427 = vpop.permute.xlu0 %5426
      %5430 = vset.pattern.permute.xlu0 0
      %5431 = vperm.xlu0 %5430, %v780
      %v5432 = vpop.permute.xlu0 %5431
      %5435 = vset.pattern.permute.xlu0 0
      %5436 = vperm.xlu0 %5435, %v781
      %v5437 = vpop.permute.xlu0 %5436
      %5440 = vset.pattern.permute.xlu0 0
      %5441 = vperm.xlu0 %5440, %v782
      %v5442 = vpop.permute.xlu0 %5441
      %5445 = vset.pattern.permute.xlu0 0
      %5446 = vperm.xlu0 %5445, %v783
      %v5447 = vpop.permute.xlu0 %5446
      %5450 = vset.pattern.permute.xlu0 0
      %5451 = vperm.xlu0 %5450, %v784
      %v5452 = vpop.permute.xlu0 %5451
      %5455 = vset.pattern.permute.xlu0 0
      %5456 = vperm.xlu0 %5455, %v785
      %v5457 = vpop.permute.xlu0 %5456
      %5460 = vset.pattern.permute.xlu0 0
      %5461 = vperm.xlu0 %5460, %v786
      %v5462 = vpop.permute.xlu0 %5461
      %5465 = vset.pattern.permute.xlu0 0
      %5466 = vperm.xlu0 %5465, %v787
      %v5467 = vpop.permute.xlu0 %5466
      %5470 = vset.pattern.permute.xlu0 0
      %5471 = vperm.xlu0 %5470, %v788
      %v5472 = vpop.permute.xlu0 %5471
      %5475 = vset.pattern.permute.xlu0 0
      %5476 = vperm.xlu0 %5475, %v789
      %v5477 = vpop.permute.xlu0 %5476
      %5480 = vset.pattern.permute.xlu0 0
      %5481 = vperm.xlu0 %5480, %v790
      %v5482 = vpop.permute.xlu0 %5481
      %v5485 = vlaneseq
      %v5486 = vshrl.u32 %v5485, 7
      %v5487 = vsub.s32 0, %v5486
      %v5488 = vrot.slane %v4843, %v5487
      %v5490 = vmul.f32 %v4847, %v5488
      %v5491 = vmul.f32 %v4852, %v5488
      %v5492 = vmul.f32 %v4857, %v5488
      %v5493 = vmul.f32 %v4862, %v5488
      %v5494 = vmul.f32 %v4867, %v5488
      %v5495 = vmul.f32 %v4872, %v5488
      %v5496 = vmul.f32 %v4877, %v5488
      %v5497 = vmul.f32 %v4882, %v5488
      %v5498 = vmul.f32 %v4887, %v5488
      %v5499 = vmul.f32 %v4892, %v5488
      %v5500 = vmul.f32 %v4897, %v5488
      %v5501 = vmul.f32 %v4902, %v5488
      %v5502 = vmul.f32 %v4907, %v5488
      %v5503 = vmul.f32 %v4912, %v5488
      %v5504 = vmul.f32 %v4917, %v5488
      %v5505 = vmul.f32 %v4922, %v5488
      %v5506 = vmul.f32 %v4927, %v5488
      %v5507 = vmul.f32 %v4932, %v5488
      %v5508 = vmul.f32 %v4937, %v5488
      %v5509 = vmul.f32 %v4942, %v5488
      %v5510 = vmul.f32 %v4947, %v5488
      %v5511 = vmul.f32 %v4952, %v5488
      %v5512 = vmul.f32 %v4957, %v5488
      %v5513 = vmul.f32 %v4962, %v5488
      %v5514 = vmul.f32 %v4967, %v5488
      %v5515 = vmul.f32 %v4972, %v5488
      %v5516 = vmul.f32 %v4977, %v5488
      %v5517 = vmul.f32 %v4982, %v5488
      %v5518 = vmul.f32 %v4987, %v5488
      %v5519 = vmul.f32 %v4992, %v5488
      %v5520 = vmul.f32 %v4997, %v5488
      %v5521 = vmul.f32 %v5002, %v5488
      %v5522 = vmul.f32 %v5007, %v5488
      %v5523 = vmul.f32 %v5012, %v5488
      %v5524 = vmul.f32 %v5017, %v5488
      %v5525 = vmul.f32 %v5022, %v5488
      %v5526 = vmul.f32 %v5027, %v5488
      %v5527 = vmul.f32 %v5032, %v5488
      %v5528 = vmul.f32 %v5037, %v5488
      %v5529 = vmul.f32 %v5042, %v5488
      %v5530 = vmul.f32 %v5047, %v5488
      %v5531 = vmul.f32 %v5052, %v5488
      %v5532 = vmul.f32 %v5057, %v5488
      %v5533 = vmul.f32 %v5062, %v5488
      %v5534 = vmul.f32 %v5067, %v5488
      %v5535 = vmul.f32 %v5072, %v5488
      %v5536 = vmul.f32 %v5077, %v5488
      %v5537 = vmul.f32 %v5082, %v5488
      %v5538 = vmul.f32 %v5087, %v5488
      %v5539 = vmul.f32 %v5092, %v5488
      %v5540 = vmul.f32 %v5097, %v5488
      %v5541 = vmul.f32 %v5102, %v5488
      %v5542 = vmul.f32 %v5107, %v5488
      %v5543 = vmul.f32 %v5112, %v5488
      %v5544 = vmul.f32 %v5117, %v5488
      %v5545 = vmul.f32 %v5122, %v5488
      %v5546 = vmul.f32 %v5127, %v5488
      %v5547 = vmul.f32 %v5132, %v5488
      %v5548 = vmul.f32 %v5137, %v5488
      %v5549 = vmul.f32 %v5142, %v5488
      %v5550 = vmul.f32 %v5147, %v5488
      %v5551 = vmul.f32 %v5152, %v5488
      %v5552 = vmul.f32 %v5157, %v5488
      %v5553 = vmul.f32 %v5162, %v5488
      %v5554 = vmul.f32 %v5167, %v5488
      %v5555 = vmul.f32 %v5172, %v5488
      %v5556 = vmul.f32 %v5177, %v5488
      %v5557 = vmul.f32 %v5182, %v5488
      %v5558 = vmul.f32 %v5187, %v5488
      %v5559 = vmul.f32 %v5192, %v5488
      %v5560 = vmul.f32 %v5197, %v5488
      %v5561 = vmul.f32 %v5202, %v5488
      %v5562 = vmul.f32 %v5207, %v5488
      %v5563 = vmul.f32 %v5212, %v5488
      %v5564 = vmul.f32 %v5217, %v5488
      %v5565 = vmul.f32 %v5222, %v5488
      %v5566 = vmul.f32 %v5227, %v5488
      %v5567 = vmul.f32 %v5232, %v5488
      %v5568 = vmul.f32 %v5237, %v5488
      %v5569 = vmul.f32 %v5242, %v5488
      %v5570 = vmul.f32 %v5247, %v5488
      %v5571 = vmul.f32 %v5252, %v5488
      %v5572 = vmul.f32 %v5257, %v5488
      %v5573 = vmul.f32 %v5262, %v5488
      %v5574 = vmul.f32 %v5267, %v5488
      %v5575 = vmul.f32 %v5272, %v5488
      %v5576 = vmul.f32 %v5277, %v5488
      %v5577 = vmul.f32 %v5282, %v5488
      %v5578 = vmul.f32 %v5287, %v5488
      %v5579 = vmul.f32 %v5292, %v5488
      %v5580 = vmul.f32 %v5297, %v5488
      %v5581 = vmul.f32 %v5302, %v5488
      %v5582 = vmul.f32 %v5307, %v5488
      %v5583 = vmul.f32 %v5312, %v5488
      %v5584 = vmul.f32 %v5317, %v5488
      %v5585 = vmul.f32 %v5322, %v5488
      %v5586 = vmul.f32 %v5327, %v5488
      %v5587 = vmul.f32 %v5332, %v5488
      %v5588 = vmul.f32 %v5337, %v5488
      %v5589 = vmul.f32 %v5342, %v5488
      %v5590 = vmul.f32 %v5347, %v5488
      %v5591 = vmul.f32 %v5352, %v5488
      %v5592 = vmul.f32 %v5357, %v5488
      %v5593 = vmul.f32 %v5362, %v5488
      %v5594 = vmul.f32 %v5367, %v5488
      %v5595 = vmul.f32 %v5372, %v5488
      %v5596 = vmul.f32 %v5377, %v5488
      %v5597 = vmul.f32 %v5382, %v5488
      %v5598 = vmul.f32 %v5387, %v5488
      %v5599 = vmul.f32 %v5392, %v5488
      %v5600 = vmul.f32 %v5397, %v5488
      %v5601 = vmul.f32 %v5402, %v5488
      %v5602 = vmul.f32 %v5407, %v5488
      %v5603 = vmul.f32 %v5412, %v5488
      %v5604 = vmul.f32 %v5417, %v5488
      %v5605 = vmul.f32 %v5422, %v5488
      %v5606 = vmul.f32 %v5427, %v5488
      %v5607 = vmul.f32 %v5432, %v5488
      %v5608 = vmul.f32 %v5437, %v5488
      %v5609 = vmul.f32 %v5442, %v5488
      %v5610 = vmul.f32 %v5447, %v5488
      %v5611 = vmul.f32 %v5452, %v5488
      %v5612 = vmul.f32 %v5457, %v5488
      %v5613 = vmul.f32 %v5462, %v5488
      %v5614 = vmul.f32 %v5467, %v5488
      %v5615 = vmul.f32 %v5472, %v5488
      %v5616 = vmul.f32 %v5477, %v5488
      %v5617 = vmul.f32 %v5482, %v5488
      %v5618 = vadd.f32 %v4205, %v5490
      %v5619 = vadd.f32 %v4210, %v5491
      %v5620 = vadd.f32 %v4215, %v5492
      %v5621 = vadd.f32 %v4220, %v5493
      %v5622 = vadd.f32 %v4225, %v5494
      %v5623 = vadd.f32 %v4230, %v5495
      %v5624 = vadd.f32 %v4235, %v5496
      %v5625 = vadd.f32 %v4240, %v5497
      %v5626 = vadd.f32 %v4245, %v5498
      %v5627 = vadd.f32 %v4250, %v5499
      %v5628 = vadd.f32 %v4255, %v5500
      %v5629 = vadd.f32 %v4260, %v5501
      %v5630 = vadd.f32 %v4265, %v5502
      %v5631 = vadd.f32 %v4270, %v5503
      %v5632 = vadd.f32 %v4275, %v5504
      %v5633 = vadd.f32 %v4280, %v5505
      %v5634 = vadd.f32 %v4285, %v5506
      %v5635 = vadd.f32 %v4290, %v5507
      %v5636 = vadd.f32 %v4295, %v5508
      %v5637 = vadd.f32 %v4300, %v5509
      %v5638 = vadd.f32 %v4305, %v5510
      %v5639 = vadd.f32 %v4310, %v5511
      %v5640 = vadd.f32 %v4315, %v5512
      %v5641 = vadd.f32 %v4320, %v5513
      %v5642 = vadd.f32 %v4325, %v5514
      %v5643 = vadd.f32 %v4330, %v5515
      %v5644 = vadd.f32 %v4335, %v5516
      %v5645 = vadd.f32 %v4340, %v5517
      %v5646 = vadd.f32 %v4345, %v5518
      %v5647 = vadd.f32 %v4350, %v5519
      %v5648 = vadd.f32 %v4355, %v5520
      %v5649 = vadd.f32 %v4360, %v5521
      %v5650 = vadd.f32 %v4365, %v5522
      %v5651 = vadd.f32 %v4370, %v5523
      %v5652 = vadd.f32 %v4375, %v5524
      %v5653 = vadd.f32 %v4380, %v5525
      %v5654 = vadd.f32 %v4385, %v5526
      %v5655 = vadd.f32 %v4390, %v5527
      %v5656 = vadd.f32 %v4395, %v5528
      %v5657 = vadd.f32 %v4400, %v5529
      %v5658 = vadd.f32 %v4405, %v5530
      %v5659 = vadd.f32 %v4410, %v5531
      %v5660 = vadd.f32 %v4415, %v5532
      %v5661 = vadd.f32 %v4420, %v5533
      %v5662 = vadd.f32 %v4425, %v5534
      %v5663 = vadd.f32 %v4430, %v5535
      %v5664 = vadd.f32 %v4435, %v5536
      %v5665 = vadd.f32 %v4440, %v5537
      %v5666 = vadd.f32 %v4445, %v5538
      %v5667 = vadd.f32 %v4450, %v5539
      %v5668 = vadd.f32 %v4455, %v5540
      %v5669 = vadd.f32 %v4460, %v5541
      %v5670 = vadd.f32 %v4465, %v5542
      %v5671 = vadd.f32 %v4470, %v5543
      %v5672 = vadd.f32 %v4475, %v5544
      %v5673 = vadd.f32 %v4480, %v5545
      %v5674 = vadd.f32 %v4485, %v5546
      %v5675 = vadd.f32 %v4490, %v5547
      %v5676 = vadd.f32 %v4495, %v5548
      %v5677 = vadd.f32 %v4500, %v5549
      %v5678 = vadd.f32 %v4505, %v5550
      %v5679 = vadd.f32 %v4510, %v5551
      %v5680 = vadd.f32 %v4515, %v5552
      %v5681 = vadd.f32 %v4520, %v5553
      %v5682 = vadd.f32 %v4525, %v5554
      %v5683 = vadd.f32 %v4530, %v5555
      %v5684 = vadd.f32 %v4535, %v5556
      %v5685 = vadd.f32 %v4540, %v5557
      %v5686 = vadd.f32 %v4545, %v5558
      %v5687 = vadd.f32 %v4550, %v5559
      %v5688 = vadd.f32 %v4555, %v5560
      %v5689 = vadd.f32 %v4560, %v5561
      %v5690 = vadd.f32 %v4565, %v5562
      %v5691 = vadd.f32 %v4570, %v5563
      %v5692 = vadd.f32 %v4575, %v5564
      %v5693 = vadd.f32 %v4580, %v5565
      %v5694 = vadd.f32 %v4585, %v5566
      %v5695 = vadd.f32 %v4590, %v5567
      %v5696 = vadd.f32 %v4595, %v5568
      %v5697 = vadd.f32 %v4600, %v5569
      %v5698 = vadd.f32 %v4605, %v5570
      %v5699 = vadd.f32 %v4610, %v5571
      %v5700 = vadd.f32 %v4615, %v5572
      %v5701 = vadd.f32 %v4620, %v5573
      %v5702 = vadd.f32 %v4625, %v5574
      %v5703 = vadd.f32 %v4630, %v5575
      %v5704 = vadd.f32 %v4635, %v5576
      %v5705 = vadd.f32 %v4640, %v5577
      %v5706 = vadd.f32 %v4645, %v5578
      %v5707 = vadd.f32 %v4650, %v5579
      %v5708 = vadd.f32 %v4655, %v5580
      %v5709 = vadd.f32 %v4660, %v5581
      %v5710 = vadd.f32 %v4665, %v5582
      %v5711 = vadd.f32 %v4670, %v5583
      %v5712 = vadd.f32 %v4675, %v5584
      %v5713 = vadd.f32 %v4680, %v5585
      %v5714 = vadd.f32 %v4685, %v5586
      %v5715 = vadd.f32 %v4690, %v5587
      %v5716 = vadd.f32 %v4695, %v5588
      %v5717 = vadd.f32 %v4700, %v5589
      %v5718 = vadd.f32 %v4705, %v5590
      %v5719 = vadd.f32 %v4710, %v5591
      %v5720 = vadd.f32 %v4715, %v5592
      %v5721 = vadd.f32 %v4720, %v5593
      %v5722 = vadd.f32 %v4725, %v5594
      %v5723 = vadd.f32 %v4730, %v5595
      %v5724 = vadd.f32 %v4735, %v5596
      %v5725 = vadd.f32 %v4740, %v5597
      %v5726 = vadd.f32 %v4745, %v5598
      %v5727 = vadd.f32 %v4750, %v5599
      %v5728 = vadd.f32 %v4755, %v5600
      %v5729 = vadd.f32 %v4760, %v5601
      %v5730 = vadd.f32 %v4765, %v5602
      %v5731 = vadd.f32 %v4770, %v5603
      %v5732 = vadd.f32 %v4775, %v5604
      %v5733 = vadd.f32 %v4780, %v5605
      %v5734 = vadd.f32 %v4785, %v5606
      %v5735 = vadd.f32 %v4790, %v5607
      %v5736 = vadd.f32 %v4795, %v5608
      %v5737 = vadd.f32 %v4800, %v5609
      %v5738 = vadd.f32 %v4805, %v5610
      %v5739 = vadd.f32 %v4810, %v5611
      %v5740 = vadd.f32 %v4815, %v5612
      %v5741 = vadd.f32 %v4820, %v5613
      %v5742 = vadd.f32 %v4825, %v5614
      %v5743 = vadd.f32 %v4830, %v5615
      %v5744 = vadd.f32 %v4835, %v5616
      %v5745 = vadd.f32 %v4840, %v5617
      %v5746 = vld [vmem:[%s7] sm:$0x1]
      %v5748 = vlaneseq
      %v5749 = vshrl.u32 %v5748, 7
      %v5750 = vsub.s32 0, %v5749
      %v5751 = vrot.slane %v5746, %v5750
      %v5753 = vadd.f32 %v5618, %v5751
      %v5754 = vadd.f32 %v5619, %v5751
      %v5755 = vadd.f32 %v5620, %v5751
      %v5756 = vadd.f32 %v5621, %v5751
      %v5757 = vadd.f32 %v5622, %v5751
      %v5758 = vadd.f32 %v5623, %v5751
      %v5759 = vadd.f32 %v5624, %v5751
      %v5760 = vadd.f32 %v5625, %v5751
      %v5761 = vadd.f32 %v5626, %v5751
      %v5762 = vadd.f32 %v5627, %v5751
      %v5763 = vadd.f32 %v5628, %v5751
      %v5764 = vadd.f32 %v5629, %v5751
      %v5765 = vadd.f32 %v5630, %v5751
      %v5766 = vadd.f32 %v5631, %v5751
      %v5767 = vadd.f32 %v5632, %v5751
      %v5768 = vadd.f32 %v5633, %v5751
      %v5769 = vadd.f32 %v5634, %v5751
      %v5770 = vadd.f32 %v5635, %v5751
      %v5771 = vadd.f32 %v5636, %v5751
      %v5772 = vadd.f32 %v5637, %v5751
      %v5773 = vadd.f32 %v5638, %v5751
      %v5774 = vadd.f32 %v5639, %v5751
      %v5775 = vadd.f32 %v5640, %v5751
      %v5776 = vadd.f32 %v5641, %v5751
      %v5777 = vadd.f32 %v5642, %v5751
      %v5778 = vadd.f32 %v5643, %v5751
      %v5779 = vadd.f32 %v5644, %v5751
      %v5780 = vadd.f32 %v5645, %v5751
      %v5781 = vadd.f32 %v5646, %v5751
      %v5782 = vadd.f32 %v5647, %v5751
      %v5783 = vadd.f32 %v5648, %v5751
      %v5784 = vadd.f32 %v5649, %v5751
      %v5785 = vadd.f32 %v5650, %v5751
      %v5786 = vadd.f32 %v5651, %v5751
      %v5787 = vadd.f32 %v5652, %v5751
      %v5788 = vadd.f32 %v5653, %v5751
      %v5789 = vadd.f32 %v5654, %v5751
      %v5790 = vadd.f32 %v5655, %v5751
      %v5791 = vadd.f32 %v5656, %v5751
      %v5792 = vadd.f32 %v5657, %v5751
      %v5793 = vadd.f32 %v5658, %v5751
      %v5794 = vadd.f32 %v5659, %v5751
      %v5795 = vadd.f32 %v5660, %v5751
      %v5796 = vadd.f32 %v5661, %v5751
      %v5797 = vadd.f32 %v5662, %v5751
      %v5798 = vadd.f32 %v5663, %v5751
      %v5799 = vadd.f32 %v5664, %v5751
      %v5800 = vadd.f32 %v5665, %v5751
      %v5801 = vadd.f32 %v5666, %v5751
      %v5802 = vadd.f32 %v5667, %v5751
      %v5803 = vadd.f32 %v5668, %v5751
      %v5804 = vadd.f32 %v5669, %v5751
      %v5805 = vadd.f32 %v5670, %v5751
      %v5806 = vadd.f32 %v5671, %v5751
      %v5807 = vadd.f32 %v5672, %v5751
      %v5808 = vadd.f32 %v5673, %v5751
      %v5809 = vadd.f32 %v5674, %v5751
      %v5810 = vadd.f32 %v5675, %v5751
      %v5811 = vadd.f32 %v5676, %v5751
      %v5812 = vadd.f32 %v5677, %v5751
      %v5813 = vadd.f32 %v5678, %v5751
      %v5814 = vadd.f32 %v5679, %v5751
      %v5815 = vadd.f32 %v5680, %v5751
      %v5816 = vadd.f32 %v5681, %v5751
      %v5817 = vadd.f32 %v5682, %v5751
      %v5818 = vadd.f32 %v5683, %v5751
      %v5819 = vadd.f32 %v5684, %v5751
      %v5820 = vadd.f32 %v5685, %v5751
      %v5821 = vadd.f32 %v5686, %v5751
      %v5822 = vadd.f32 %v5687, %v5751
      %v5823 = vadd.f32 %v5688, %v5751
      %v5824 = vadd.f32 %v5689, %v5751
      %v5825 = vadd.f32 %v5690, %v5751
      %v5826 = vadd.f32 %v5691, %v5751
      %v5827 = vadd.f32 %v5692, %v5751
      %v5828 = vadd.f32 %v5693, %v5751
      %v5829 = vadd.f32 %v5694, %v5751
      %v5830 = vadd.f32 %v5695, %v5751
      %v5831 = vadd.f32 %v5696, %v5751
      %v5832 = vadd.f32 %v5697, %v5751
      %v5833 = vadd.f32 %v5698, %v5751
      %v5834 = vadd.f32 %v5699, %v5751
      %v5835 = vadd.f32 %v5700, %v5751
      %v5836 = vadd.f32 %v5701, %v5751
      %v5837 = vadd.f32 %v5702, %v5751
      %v5838 = vadd.f32 %v5703, %v5751
      %v5839 = vadd.f32 %v5704, %v5751
      %v5840 = vadd.f32 %v5705, %v5751
      %v5841 = vadd.f32 %v5706, %v5751
      %v5842 = vadd.f32 %v5707, %v5751
      %v5843 = vadd.f32 %v5708, %v5751
      %v5844 = vadd.f32 %v5709, %v5751
      %v5845 = vadd.f32 %v5710, %v5751
      %v5846 = vadd.f32 %v5711, %v5751
      %v5847 = vadd.f32 %v5712, %v5751
      %v5848 = vadd.f32 %v5713, %v5751
      %v5849 = vadd.f32 %v5714, %v5751
      %v5850 = vadd.f32 %v5715, %v5751
      %v5851 = vadd.f32 %v5716, %v5751
      %v5852 = vadd.f32 %v5717, %v5751
      %v5853 = vadd.f32 %v5718, %v5751
      %v5854 = vadd.f32 %v5719, %v5751
      %v5855 = vadd.f32 %v5720, %v5751
      %v5856 = vadd.f32 %v5721, %v5751
      %v5857 = vadd.f32 %v5722, %v5751
      %v5858 = vadd.f32 %v5723, %v5751
      %v5859 = vadd.f32 %v5724, %v5751
      %v5860 = vadd.f32 %v5725, %v5751
      %v5861 = vadd.f32 %v5726, %v5751
      %v5862 = vadd.f32 %v5727, %v5751
      %v5863 = vadd.f32 %v5728, %v5751
      %v5864 = vadd.f32 %v5729, %v5751
      %v5865 = vadd.f32 %v5730, %v5751
      %v5866 = vadd.f32 %v5731, %v5751
      %v5867 = vadd.f32 %v5732, %v5751
      %v5868 = vadd.f32 %v5733, %v5751
      %v5869 = vadd.f32 %v5734, %v5751
      %v5870 = vadd.f32 %v5735, %v5751
      %v5871 = vadd.f32 %v5736, %v5751
      %v5872 = vadd.f32 %v5737, %v5751
      %v5873 = vadd.f32 %v5738, %v5751
      %v5874 = vadd.f32 %v5739, %v5751
      %v5875 = vadd.f32 %v5740, %v5751
      %v5876 = vadd.f32 %v5741, %v5751
      %v5877 = vadd.f32 %v5742, %v5751
      %v5878 = vadd.f32 %v5743, %v5751
      %v5879 = vadd.f32 %v5744, %v5751
      %v5880 = vadd.f32 %v5745, %v5751
      %v5881 = vmax.f32 %v5753, 0.0
      %v5882 = vmax.f32 %v5754, 0.0
      %v5883 = vmax.f32 %v5755, 0.0
      %v5884 = vmax.f32 %v5756, 0.0
      %v5885 = vmax.f32 %v5757, 0.0
      %v5886 = vmax.f32 %v5758, 0.0
      %v5887 = vmax.f32 %v5759, 0.0
      %v5888 = vmax.f32 %v5760, 0.0
      %v5889 = vmax.f32 %v5761, 0.0
      %v5890 = vmax.f32 %v5762, 0.0
      %v5891 = vmax.f32 %v5763, 0.0
      %v5892 = vmax.f32 %v5764, 0.0
      %v5893 = vmax.f32 %v5765, 0.0
      %v5894 = vmax.f32 %v5766, 0.0
      %v5895 = vmax.f32 %v5767, 0.0
      %v5896 = vmax.f32 %v5768, 0.0
      %v5897 = vmax.f32 %v5769, 0.0
      %v5898 = vmax.f32 %v5770, 0.0
      %v5899 = vmax.f32 %v5771, 0.0
      %v5900 = vmax.f32 %v5772, 0.0
      %v5901 = vmax.f32 %v5773, 0.0
      %v5902 = vmax.f32 %v5774, 0.0
      %v5903 = vmax.f32 %v5775, 0.0
      %v5904 = vmax.f32 %v5776, 0.0
      %v5905 = vmax.f32 %v5777, 0.0
      %v5906 = vmax.f32 %v5778, 0.0
      %v5907 = vmax.f32 %v5779, 0.0
      %v5908 = vmax.f32 %v5780, 0.0
      %v5909 = vmax.f32 %v5781, 0.0
      %v5910 = vmax.f32 %v5782, 0.0
      %v5911 = vmax.f32 %v5783, 0.0
      %v5912 = vmax.f32 %v5784, 0.0
      %v5913 = vmax.f32 %v5785, 0.0
      %v5914 = vmax.f32 %v5786, 0.0
      %v5915 = vmax.f32 %v5787, 0.0
      %v5916 = vmax.f32 %v5788, 0.0
      %v5917 = vmax.f32 %v5789, 0.0
      %v5918 = vmax.f32 %v5790, 0.0
      %v5919 = vmax.f32 %v5791, 0.0
      %v5920 = vmax.f32 %v5792, 0.0
      %v5921 = vmax.f32 %v5793, 0.0
      %v5922 = vmax.f32 %v5794, 0.0
      %v5923 = vmax.f32 %v5795, 0.0
      %v5924 = vmax.f32 %v5796, 0.0
      %v5925 = vmax.f32 %v5797, 0.0
      %v5926 = vmax.f32 %v5798, 0.0
      %v5927 = vmax.f32 %v5799, 0.0
      %v5928 = vmax.f32 %v5800, 0.0
      %v5929 = vmax.f32 %v5801, 0.0
      %v5930 = vmax.f32 %v5802, 0.0
      %v5931 = vmax.f32 %v5803, 0.0
      %v5932 = vmax.f32 %v5804, 0.0
      %v5933 = vmax.f32 %v5805, 0.0
      %v5934 = vmax.f32 %v5806, 0.0
      %v5935 = vmax.f32 %v5807, 0.0
      %v5936 = vmax.f32 %v5808, 0.0
      %v5937 = vmax.f32 %v5809, 0.0
      %v5938 = vmax.f32 %v5810, 0.0
      %v5939 = vmax.f32 %v5811, 0.0
      %v5940 = vmax.f32 %v5812, 0.0
      %v5941 = vmax.f32 %v5813, 0.0
      %v5942 = vmax.f32 %v5814, 0.0
      %v5943 = vmax.f32 %v5815, 0.0
      %v5944 = vmax.f32 %v5816, 0.0
      %v5945 = vmax.f32 %v5817, 0.0
      %v5946 = vmax.f32 %v5818, 0.0
      %v5947 = vmax.f32 %v5819, 0.0
      %v5948 = vmax.f32 %v5820, 0.0
      %v5949 = vmax.f32 %v5821, 0.0
      %v5950 = vmax.f32 %v5822, 0.0
      %v5951 = vmax.f32 %v5823, 0.0
      %v5952 = vmax.f32 %v5824, 0.0
      %v5953 = vmax.f32 %v5825, 0.0
      %v5954 = vmax.f32 %v5826, 0.0
      %v5955 = vmax.f32 %v5827, 0.0
      %v5956 = vmax.f32 %v5828, 0.0
      %v5957 = vmax.f32 %v5829, 0.0
      %v5958 = vmax.f32 %v5830, 0.0
      %v5959 = vmax.f32 %v5831, 0.0
      %v5960 = vmax.f32 %v5832, 0.0
      %v5961 = vmax.f32 %v5833, 0.0
      %v5962 = vmax.f32 %v5834, 0.0
      %v5963 = vmax.f32 %v5835, 0.0
      %v5964 = vmax.f32 %v5836, 0.0
      %v5965 = vmax.f32 %v5837, 0.0
      %v5966 = vmax.f32 %v5838, 0.0
      %v5967 = vmax.f32 %v5839, 0.0
      %v5968 = vmax.f32 %v5840, 0.0
      %v5969 = vmax.f32 %v5841, 0.0
      %v5970 = vmax.f32 %v5842, 0.0
      %v5971 = vmax.f32 %v5843, 0.0
      %v5972 = vmax.f32 %v5844, 0.0
      %v5973 = vmax.f32 %v5845, 0.0
      %v5974 = vmax.f32 %v5846, 0.0
      %v5975 = vmax.f32 %v5847, 0.0
      %v5976 = vmax.f32 %v5848, 0.0
      %v5977 = vmax.f32 %v5849, 0.0
      %v5978 = vmax.f32 %v5850, 0.0
      %v5979 = vmax.f32 %v5851, 0.0
      %v5980 = vmax.f32 %v5852, 0.0
      %v5981 = vmax.f32 %v5853, 0.0
      %v5982 = vmax.f32 %v5854, 0.0
      %v5983 = vmax.f32 %v5855, 0.0
      %v5984 = vmax.f32 %v5856, 0.0
      %v5985 = vmax.f32 %v5857, 0.0
      %v5986 = vmax.f32 %v5858, 0.0
      %v5987 = vmax.f32 %v5859, 0.0
      %v5988 = vmax.f32 %v5860, 0.0
      %v5989 = vmax.f32 %v5861, 0.0
      %v5990 = vmax.f32 %v5862, 0.0
      %v5991 = vmax.f32 %v5863, 0.0
      %v5992 = vmax.f32 %v5864, 0.0
      %v5993 = vmax.f32 %v5865, 0.0
      %v5994 = vmax.f32 %v5866, 0.0
      %v5995 = vmax.f32 %v5867, 0.0
      %v5996 = vmax.f32 %v5868, 0.0
      %v5997 = vmax.f32 %v5869, 0.0
      %v5998 = vmax.f32 %v5870, 0.0
      %v5999 = vmax.f32 %v5871, 0.0
      %v6000 = vmax.f32 %v5872, 0.0
      %v6001 = vmax.f32 %v5873, 0.0
      %v6002 = vmax.f32 %v5874, 0.0
      %v6003 = vmax.f32 %v5875, 0.0
      %v6004 = vmax.f32 %v5876, 0.0
      %v6005 = vmax.f32 %v5877, 0.0
      %v6006 = vmax.f32 %v5878, 0.0
      %v6007 = vmax.f32 %v5879, 0.0
      %v6008 = vmax.f32 %v5880, 0.0
      %v6009 = vld [vmem:[%s8] sm:$0xff]
      %v6010 = vld [vmem:[%s8 + $0x8] sm:$0xff]
      %v6011 = vld [vmem:[%s8 + $0x10] sm:$0xff]
      %v6012 = vld [vmem:[%s8 + $0x18] sm:$0xff]
      %v6013 = vld [vmem:[%s9] sm:$0x1]
      %v6015 = vlaneseq
      %v6016 = vshrl.u32 %v6015, 7
      %v6017 = vsub.s32 0, %v6016
      %v6018 = vrot.slane %v6013, %v6017
      %v6021 = vsel %vm2664, %v5881, 0
      %v6024 = vsel %vm2664, %v5882, 0
      %v6027 = vsel %vm2664, %v5883, 0
      %v6030 = vsel %vm2664, %v5884, 0
      %v6033 = vsel %vm2664, %v5885, 0
      %v6036 = vsel %vm2664, %v5886, 0
      %v6039 = vsel %vm2664, %v5887, 0
      %v6042 = vsel %vm2664, %v5888, 0
      %v6045 = vsel %vm2664, %v5889, 0
      %v6048 = vsel %vm2664, %v5890, 0
      %v6051 = vsel %vm2664, %v5891, 0
      %v6054 = vsel %vm2664, %v5892, 0
      %v6057 = vsel %vm2664, %v5893, 0
      %v6060 = vsel %vm2664, %v5894, 0
      %v6063 = vsel %vm2664, %v5895, 0
      %v6066 = vsel %vm2664, %v5896, 0
      %v6069 = vsel %vm2664, %v5897, 0
      %v6072 = vsel %vm2664, %v5898, 0
      %v6075 = vsel %vm2664, %v5899, 0
      %v6078 = vsel %vm2664, %v5900, 0
      %v6081 = vsel %vm2664, %v5901, 0
      %v6084 = vsel %vm2664, %v5902, 0
      %v6087 = vsel %vm2664, %v5903, 0
      %v6090 = vsel %vm2664, %v5904, 0
      %v6093 = vsel %vm2664, %v5905, 0
      %v6096 = vsel %vm2664, %v5906, 0
      %v6099 = vsel %vm2664, %v5907, 0
      %v6102 = vsel %vm2664, %v5908, 0
      %v6105 = vsel %vm2664, %v5909, 0
      %v6108 = vsel %vm2664, %v5910, 0
      %v6111 = vsel %vm2664, %v5911, 0
      %v6114 = vsel %vm2664, %v5912, 0
      %v6117 = vsel %vm2664, %v5913, 0
      %v6120 = vsel %vm2664, %v5914, 0
      %v6123 = vsel %vm2664, %v5915, 0
      %v6126 = vsel %vm2664, %v5916, 0
      %v6129 = vsel %vm2664, %v5917, 0
      %v6132 = vsel %vm2664, %v5918, 0
      %v6135 = vsel %vm2664, %v5919, 0
      %v6138 = vsel %vm2664, %v5920, 0
      %v6141 = vsel %vm2664, %v5921, 0
      %v6144 = vsel %vm2664, %v5922, 0
      %v6147 = vsel %vm2664, %v5923, 0
      %v6150 = vsel %vm2664, %v5924, 0
      %v6153 = vsel %vm2664, %v5925, 0
      %v6156 = vsel %vm2664, %v5926, 0
      %v6159 = vsel %vm2664, %v5927, 0
      %v6162 = vsel %vm2664, %v5928, 0
      %v6165 = vsel %vm2664, %v5929, 0
      %v6168 = vsel %vm2664, %v5930, 0
      %v6171 = vsel %vm2664, %v5931, 0
      %v6174 = vsel %vm2664, %v5932, 0
      %v6177 = vsel %vm2664, %v5933, 0
      %v6180 = vsel %vm2664, %v5934, 0
      %v6183 = vsel %vm2664, %v5935, 0
      %v6186 = vsel %vm2664, %v5936, 0
      %v6189 = vsel %vm2664, %v5937, 0
      %v6192 = vsel %vm2664, %v5938, 0
      %v6195 = vsel %vm2664, %v5939, 0
      %v6198 = vsel %vm2664, %v5940, 0
      %v6201 = vsel %vm2664, %v5941, 0
      %v6204 = vsel %vm2664, %v5942, 0
      %v6207 = vsel %vm2664, %v5943, 0
      %v6210 = vsel %vm2664, %v5944, 0
      %v6213 = vsel %vm2664, %v5945, 0
      %v6216 = vsel %vm2664, %v5946, 0
      %v6219 = vsel %vm2664, %v5947, 0
      %v6222 = vsel %vm2664, %v5948, 0
      %v6225 = vsel %vm2664, %v5949, 0
      %v6228 = vsel %vm2664, %v5950, 0
      %v6231 = vsel %vm2664, %v5951, 0
      %v6234 = vsel %vm2664, %v5952, 0
      %v6237 = vsel %vm2664, %v5953, 0
      %v6240 = vsel %vm2664, %v5954, 0
      %v6243 = vsel %vm2664, %v5955, 0
      %v6246 = vsel %vm2664, %v5956, 0
      %v6249 = vsel %vm2664, %v5957, 0
      %v6252 = vsel %vm2664, %v5958, 0
      %v6255 = vsel %vm2664, %v5959, 0
      %v6258 = vsel %vm2664, %v5960, 0
      %v6261 = vsel %vm2664, %v5961, 0
      %v6264 = vsel %vm2664, %v5962, 0
      %v6267 = vsel %vm2664, %v5963, 0
      %v6270 = vsel %vm2664, %v5964, 0
      %v6273 = vsel %vm2664, %v5965, 0
      %v6276 = vsel %vm2664, %v5966, 0
      %v6279 = vsel %vm2664, %v5967, 0
      %v6282 = vsel %vm2664, %v5968, 0
      %v6285 = vsel %vm2664, %v5969, 0
      %v6288 = vsel %vm2664, %v5970, 0
      %v6291 = vsel %vm2664, %v5971, 0
      %v6294 = vsel %vm2664, %v5972, 0
      %v6297 = vsel %vm2664, %v5973, 0
      %v6300 = vsel %vm2664, %v5974, 0
      %v6303 = vsel %vm2664, %v5975, 0
      %v6306 = vsel %vm2664, %v5976, 0
      %v6309 = vsel %vm2664, %v5977, 0
      %v6312 = vsel %vm2664, %v5978, 0
      %v6315 = vsel %vm2664, %v5979, 0
      %v6318 = vsel %vm2664, %v5980, 0
      %v6321 = vsel %vm2664, %v5981, 0
      %v6324 = vsel %vm2664, %v5982, 0
      %v6327 = vsel %vm2664, %v5983, 0
      %v6330 = vsel %vm2664, %v5984, 0
      %v6333 = vsel %vm2664, %v5985, 0
      %v6336 = vsel %vm2664, %v5986, 0
      %v6339 = vsel %vm2664, %v5987, 0
      %v6342 = vsel %vm2664, %v5988, 0
      %v6345 = vsel %vm2664, %v5989, 0
      %v6348 = vsel %vm2664, %v5990, 0
      %v6351 = vsel %vm2664, %v5991, 0
      %v6354 = vsel %vm2664, %v5992, 0
      %v6357 = vsel %vm2664, %v5993, 0
      %v6360 = vsel %vm2664, %v5994, 0
      %v6363 = vsel %vm2664, %v5995, 0
      %v6366 = vsel %vm2664, %v5996, 0
      %v6369 = vsel %vm2664, %v5997, 0
      %v6372 = vsel %vm2664, %v5998, 0
      %v6375 = vsel %vm2664, %v5999, 0
      %v6378 = vsel %vm2664, %v6000, 0
      %v6381 = vsel %vm2664, %v6001, 0
      %v6384 = vsel %vm2664, %v6002, 0
      %v6387 = vsel %vm2664, %v6003, 0
      %v6390 = vsel %vm2664, %v6004, 0
      %v6393 = vsel %vm2664, %v6005, 0
      %v6396 = vsel %vm2664, %v6006, 0
      %v6399 = vsel %vm2664, %v6007, 0
      %v6402 = vsel %vm2664, %v6008, 0
      %6404 = vmatprep.subr.mxu0 0.0
      %6405 = vmatpush1.msra.mxu0 0.0
      %6406 = vmatprep.subr.mxu0 0.0
      %6407 = vmatpush1.msra.mxu0 0.0
      %6408 = vmatprep.subr.mxu0 0.0
      %6409 = vmatpush1.msra.mxu0 0.0
      %6410 = vmatprep.subr.mxu0 0.0
      %6411 = vmatpush1.msra.mxu0 0.0
      %6412 = vmatprep.subr.mxu0 0.0
      %6413 = vmatpush1.msra.mxu0 0.0
      %6414 = vmatprep.subr.mxu0 0.0
      %6415 = vmatpush1.msra.mxu0 0.0
      %6416 = vmatprep.subr.mxu0 0.0
      %6417 = vmatpush1.msra.mxu0 0.0
      %6418 = vmatprep.subr.mxu0 0.0
      %6419 = vmatpush1.msra.mxu0 0.0
      %6420 = vmatprep.subr.mxu0 0.0
      %6421 = vmatpush1.msra.mxu0 0.0
      %6422 = vmatprep.subr.mxu0 0.0
      %6423 = vmatpush1.msra.mxu0 0.0
      %6424 = vmatprep.subr.mxu0 0.0
      %6425 = vmatpush1.msra.mxu0 0.0
      %6426 = vmatprep.subr.mxu0 0.0
      %6427 = vmatpush1.msra.mxu0 0.0
      %6428 = vmatprep.subr.mxu0 0.0
      %6429 = vmatpush1.msra.mxu0 %v6012
      %6430 = vmatprep.subr.mxu0 0.0
      %6431 = vmatpush1.msra.mxu0 %v6011
      %6432 = vmatprep.subr.mxu0 0.0
      %6433 = vmatpush1.msra.mxu0 %v6010
      %6434 = vmatprep.subr.mxu0 0.0
      %6435 = vmatpush1.msra.mxu0 %v6009
      %6436 = vmatprep.subr.mxu0 0.0
      %6437 = vmatpush2.msra.mxu0 0.0
      %6438 = vmatprep.subr.mxu0 0.0
      %6439 = vmatpush2.msra.mxu0 0.0
      %6440 = vmatprep.subr.mxu0 0.0
      %6441 = vmatpush2.msra.mxu0 0.0
      %6442 = vmatprep.subr.mxu0 0.0
      %6443 = vmatpush2.msra.mxu0 0.0
      %6444 = vmatprep.subr.mxu0 0.0
      %6445 = vmatpush2.msra.mxu0 0.0
      %6446 = vmatprep.subr.mxu0 0.0
      %6447 = vmatpush2.msra.mxu0 0.0
      %6448 = vmatprep.subr.mxu0 0.0
      %6449 = vmatpush2.msra.mxu0 0.0
      %6450 = vmatprep.subr.mxu0 0.0
      %6451 = vmatpush2.msra.mxu0 0.0
      %6452 = vmatprep.subr.mxu0 0.0
      %6453 = vmatpush2.msra.mxu0 0.0
      %6454 = vmatprep.subr.mxu0 0.0
      %6455 = vmatpush2.msra.mxu0 0.0
      %6456 = vmatprep.subr.mxu0 0.0
      %6457 = vmatpush2.msra.mxu0 0.0
      %6458 = vmatprep.subr.mxu0 0.0
      %6459 = vmatpush2.msra.mxu0 0.0
      %6460 = vmatprep.subr.mxu0 0.0
      %6461 = vmatpush2.msra.mxu0 0.0
      %6462 = vmatprep.subr.mxu0 0.0
      %6463 = vmatpush2.msra.mxu0 0.0
      %6464 = vmatprep.subr.mxu0 0.0
      %6465 = vmatpush2.msra.mxu0 0.0
      %6466 = vmatprep.subr.mxu0 0.0
      %6467 = vmatpush2.msra.mxu0 0.0
      %6468 = vmatprep.mubr.f32.mxu0 0.0
      %6469 = vmatmul.mubr.f32.gmra.mxu0 %v6021
      %v6470 = vpop.f32.mrf.mxu0
      %v6471 = vadd.f32 %v6018, %v6470
      %v6472 = vpop.f32.mrf.mxu0
      %6473 = vmatprep.mubr.f32.mxu0 0.0
      %6474 = vmatmul.mubr.f32.gmra.mxu0 %v6024
      %v6475 = vpop.f32.mrf.mxu0
      %v6476 = vadd.f32 %v6018, %v6475
      %v6477 = vpop.f32.mrf.mxu0
      %6478 = vmatprep.mubr.f32.mxu0 0.0
      %6479 = vmatmul.mubr.f32.gmra.mxu0 %v6027
      %v6480 = vpop.f32.mrf.mxu0
      %v6481 = vadd.f32 %v6018, %v6480
      %v6482 = vpop.f32.mrf.mxu0
      %6483 = vmatprep.mubr.f32.mxu0 0.0
      %6484 = vmatmul.mubr.f32.gmra.mxu0 %v6030
      %v6485 = vpop.f32.mrf.mxu0
      %v6486 = vadd.f32 %v6018, %v6485
      %v6487 = vpop.f32.mrf.mxu0
      %6488 = vmatprep.mubr.f32.mxu0 0.0
      %6489 = vmatmul.mubr.f32.gmra.mxu0 %v6033
      %v6490 = vpop.f32.mrf.mxu0
      %v6491 = vadd.f32 %v6018, %v6490
      %v6492 = vpop.f32.mrf.mxu0
      %6493 = vmatprep.mubr.f32.mxu0 0.0
      %6494 = vmatmul.mubr.f32.gmra.mxu0 %v6036
      %v6495 = vpop.f32.mrf.mxu0
      %v6496 = vadd.f32 %v6018, %v6495
      %v6497 = vpop.f32.mrf.mxu0
      %6498 = vmatprep.mubr.f32.mxu0 0.0
      %6499 = vmatmul.mubr.f32.gmra.mxu0 %v6039
      %v6500 = vpop.f32.mrf.mxu0
      %v6501 = vadd.f32 %v6018, %v6500
      %v6502 = vpop.f32.mrf.mxu0
      %6503 = vmatprep.mubr.f32.mxu0 0.0
      %6504 = vmatmul.mubr.f32.gmra.mxu0 %v6042
      %v6505 = vpop.f32.mrf.mxu0
      %v6506 = vadd.f32 %v6018, %v6505
      %v6507 = vpop.f32.mrf.mxu0
      %6508 = vmatprep.mubr.f32.mxu0 0.0
      %6509 = vmatmul.mubr.f32.gmra.mxu0 %v6045
      %v6510 = vpop.f32.mrf.mxu0
      %v6511 = vadd.f32 %v6018, %v6510
      %v6512 = vpop.f32.mrf.mxu0
      %6513 = vmatprep.mubr.f32.mxu0 0.0
      %6514 = vmatmul.mubr.f32.gmra.mxu0 %v6048
      %v6515 = vpop.f32.mrf.mxu0
      %v6516 = vadd.f32 %v6018, %v6515
      %v6517 = vpop.f32.mrf.mxu0
      %6518 = vmatprep.mubr.f32.mxu0 0.0
      %6519 = vmatmul.mubr.f32.gmra.mxu0 %v6051
      %v6520 = vpop.f32.mrf.mxu0
      %v6521 = vadd.f32 %v6018, %v6520
      %v6522 = vpop.f32.mrf.mxu0
      %6523 = vmatprep.mubr.f32.mxu0 0.0
      %6524 = vmatmul.mubr.f32.gmra.mxu0 %v6054
      %v6525 = vpop.f32.mrf.mxu0
      %v6526 = vadd.f32 %v6018, %v6525
      %v6527 = vpop.f32.mrf.mxu0
      %6528 = vmatprep.mubr.f32.mxu0 0.0
      %6529 = vmatmul.mubr.f32.gmra.mxu0 %v6057
      %v6530 = vpop.f32.mrf.mxu0
      %v6531 = vadd.f32 %v6018, %v6530
      %v6532 = vpop.f32.mrf.mxu0
      %6533 = vmatprep.mubr.f32.mxu0 0.0
      %6534 = vmatmul.mubr.f32.gmra.mxu0 %v6060
      %v6535 = vpop.f32.mrf.mxu0
      %v6536 = vadd.f32 %v6018, %v6535
      %v6537 = vpop.f32.mrf.mxu0
      %6538 = vmatprep.mubr.f32.mxu0 0.0
      %6539 = vmatmul.mubr.f32.gmra.mxu0 %v6063
      %v6540 = vpop.f32.mrf.mxu0
      %v6541 = vadd.f32 %v6018, %v6540
      %v6542 = vpop.f32.mrf.mxu0
      %6543 = vmatprep.mubr.f32.mxu0 0.0
      %6544 = vmatmul.mubr.f32.gmra.mxu0 %v6066
      %v6545 = vpop.f32.mrf.mxu0
      %v6546 = vadd.f32 %v6018, %v6545
      %v6547 = vpop.f32.mrf.mxu0
      %6548 = vmatprep.mubr.f32.mxu0 0.0
      %6549 = vmatmul.mubr.f32.gmra.mxu0 %v6069
      %v6550 = vpop.f32.mrf.mxu0
      %v6551 = vadd.f32 %v6018, %v6550
      %v6552 = vpop.f32.mrf.mxu0
      %6553 = vmatprep.mubr.f32.mxu0 0.0
      %6554 = vmatmul.mubr.f32.gmra.mxu0 %v6072
      %v6555 = vpop.f32.mrf.mxu0
      %v6556 = vadd.f32 %v6018, %v6555
      %v6557 = vpop.f32.mrf.mxu0
      %6558 = vmatprep.mubr.f32.mxu0 0.0
      %6559 = vmatmul.mubr.f32.gmra.mxu0 %v6075
      %v6560 = vpop.f32.mrf.mxu0
      %v6561 = vadd.f32 %v6018, %v6560
      %v6562 = vpop.f32.mrf.mxu0
      %6563 = vmatprep.mubr.f32.mxu0 0.0
      %6564 = vmatmul.mubr.f32.gmra.mxu0 %v6078
      %v6565 = vpop.f32.mrf.mxu0
      %v6566 = vadd.f32 %v6018, %v6565
      %v6567 = vpop.f32.mrf.mxu0
      %6568 = vmatprep.mubr.f32.mxu0 0.0
      %6569 = vmatmul.mubr.f32.gmra.mxu0 %v6081
      %v6570 = vpop.f32.mrf.mxu0
      %v6571 = vadd.f32 %v6018, %v6570
      %v6572 = vpop.f32.mrf.mxu0
      %6573 = vmatprep.mubr.f32.mxu0 0.0
      %6574 = vmatmul.mubr.f32.gmra.mxu0 %v6084
      %v6575 = vpop.f32.mrf.mxu0
      %v6576 = vadd.f32 %v6018, %v6575
      %v6577 = vpop.f32.mrf.mxu0
      %6578 = vmatprep.mubr.f32.mxu0 0.0
      %6579 = vmatmul.mubr.f32.gmra.mxu0 %v6087
      %v6580 = vpop.f32.mrf.mxu0
      %v6581 = vadd.f32 %v6018, %v6580
      %v6582 = vpop.f32.mrf.mxu0
      %6583 = vmatprep.mubr.f32.mxu0 0.0
      %6584 = vmatmul.mubr.f32.gmra.mxu0 %v6090
      %v6585 = vpop.f32.mrf.mxu0
      %v6586 = vadd.f32 %v6018, %v6585
      %v6587 = vpop.f32.mrf.mxu0
      %6588 = vmatprep.mubr.f32.mxu0 0.0
      %6589 = vmatmul.mubr.f32.gmra.mxu0 %v6093
      %v6590 = vpop.f32.mrf.mxu0
      %v6591 = vadd.f32 %v6018, %v6590
      %v6592 = vpop.f32.mrf.mxu0
      %6593 = vmatprep.mubr.f32.mxu0 0.0
      %6594 = vmatmul.mubr.f32.gmra.mxu0 %v6096
      %v6595 = vpop.f32.mrf.mxu0
      %v6596 = vadd.f32 %v6018, %v6595
      %v6597 = vpop.f32.mrf.mxu0
      %6598 = vmatprep.mubr.f32.mxu0 0.0
      %6599 = vmatmul.mubr.f32.gmra.mxu0 %v6099
      %v6600 = vpop.f32.mrf.mxu0
      %v6601 = vadd.f32 %v6018, %v6600
      %v6602 = vpop.f32.mrf.mxu0
      %6603 = vmatprep.mubr.f32.mxu0 0.0
      %6604 = vmatmul.mubr.f32.gmra.mxu0 %v6102
      %v6605 = vpop.f32.mrf.mxu0
      %v6606 = vadd.f32 %v6018, %v6605
      %v6607 = vpop.f32.mrf.mxu0
      %6608 = vmatprep.mubr.f32.mxu0 0.0
      %6609 = vmatmul.mubr.f32.gmra.mxu0 %v6105
      %v6610 = vpop.f32.mrf.mxu0
      %v6611 = vadd.f32 %v6018, %v6610
      %v6612 = vpop.f32.mrf.mxu0
      %6613 = vmatprep.mubr.f32.mxu0 0.0
      %6614 = vmatmul.mubr.f32.gmra.mxu0 %v6108
      %v6615 = vpop.f32.mrf.mxu0
      %v6616 = vadd.f32 %v6018, %v6615
      %v6617 = vpop.f32.mrf.mxu0
      %6618 = vmatprep.mubr.f32.mxu0 0.0
      %6619 = vmatmul.mubr.f32.gmra.mxu0 %v6111
      %v6620 = vpop.f32.mrf.mxu0
      %v6621 = vadd.f32 %v6018, %v6620
      %v6622 = vpop.f32.mrf.mxu0
      %6623 = vmatprep.mubr.f32.mxu0 0.0
      %6624 = vmatmul.mubr.f32.gmra.mxu0 %v6114
      %v6625 = vpop.f32.mrf.mxu0
      %v6626 = vadd.f32 %v6018, %v6625
      %v6627 = vpop.f32.mrf.mxu0
      %6628 = vmatprep.mubr.f32.mxu0 0.0
      %6629 = vmatmul.mubr.f32.gmra.mxu0 %v6117
      %v6630 = vpop.f32.mrf.mxu0
      %v6631 = vadd.f32 %v6018, %v6630
      %v6632 = vpop.f32.mrf.mxu0
      %6633 = vmatprep.mubr.f32.mxu0 0.0
      %6634 = vmatmul.mubr.f32.gmra.mxu0 %v6120
      %v6635 = vpop.f32.mrf.mxu0
      %v6636 = vadd.f32 %v6018, %v6635
      %v6637 = vpop.f32.mrf.mxu0
      %6638 = vmatprep.mubr.f32.mxu0 0.0
      %6639 = vmatmul.mubr.f32.gmra.mxu0 %v6123
      %v6640 = vpop.f32.mrf.mxu0
      %v6641 = vadd.f32 %v6018, %v6640
      %v6642 = vpop.f32.mrf.mxu0
      %6643 = vmatprep.mubr.f32.mxu0 0.0
      %6644 = vmatmul.mubr.f32.gmra.mxu0 %v6126
      %v6645 = vpop.f32.mrf.mxu0
      %v6646 = vadd.f32 %v6018, %v6645
      %v6647 = vpop.f32.mrf.mxu0
      %6648 = vmatprep.mubr.f32.mxu0 0.0
      %6649 = vmatmul.mubr.f32.gmra.mxu0 %v6129
      %v6650 = vpop.f32.mrf.mxu0
      %v6651 = vadd.f32 %v6018, %v6650
      %v6652 = vpop.f32.mrf.mxu0
      %6653 = vmatprep.mubr.f32.mxu0 0.0
      %6654 = vmatmul.mubr.f32.gmra.mxu0 %v6132
      %v6655 = vpop.f32.mrf.mxu0
      %v6656 = vadd.f32 %v6018, %v6655
      %v6657 = vpop.f32.mrf.mxu0
      %6658 = vmatprep.mubr.f32.mxu0 0.0
      %6659 = vmatmul.mubr.f32.gmra.mxu0 %v6135
      %v6660 = vpop.f32.mrf.mxu0
      %v6661 = vadd.f32 %v6018, %v6660
      %v6662 = vpop.f32.mrf.mxu0
      %6663 = vmatprep.mubr.f32.mxu0 0.0
      %6664 = vmatmul.mubr.f32.gmra.mxu0 %v6138
      %v6665 = vpop.f32.mrf.mxu0
      %v6666 = vadd.f32 %v6018, %v6665
      %v6667 = vpop.f32.mrf.mxu0
      %6668 = vmatprep.mubr.f32.mxu0 0.0
      %6669 = vmatmul.mubr.f32.gmra.mxu0 %v6141
      %v6670 = vpop.f32.mrf.mxu0
      %v6671 = vadd.f32 %v6018, %v6670
      %v6672 = vpop.f32.mrf.mxu0
      %6673 = vmatprep.mubr.f32.mxu0 0.0
      %6674 = vmatmul.mubr.f32.gmra.mxu0 %v6144
      %v6675 = vpop.f32.mrf.mxu0
      %v6676 = vadd.f32 %v6018, %v6675
      %v6677 = vpop.f32.mrf.mxu0
      %6678 = vmatprep.mubr.f32.mxu0 0.0
      %6679 = vmatmul.mubr.f32.gmra.mxu0 %v6147
      %v6680 = vpop.f32.mrf.mxu0
      %v6681 = vadd.f32 %v6018, %v6680
      %v6682 = vpop.f32.mrf.mxu0
      %6683 = vmatprep.mubr.f32.mxu0 0.0
      %6684 = vmatmul.mubr.f32.gmra.mxu0 %v6150
      %v6685 = vpop.f32.mrf.mxu0
      %v6686 = vadd.f32 %v6018, %v6685
      %v6687 = vpop.f32.mrf.mxu0
      %6688 = vmatprep.mubr.f32.mxu0 0.0
      %6689 = vmatmul.mubr.f32.gmra.mxu0 %v6153
      %v6690 = vpop.f32.mrf.mxu0
      %v6691 = vadd.f32 %v6018, %v6690
      %v6692 = vpop.f32.mrf.mxu0
      %6693 = vmatprep.mubr.f32.mxu0 0.0
      %6694 = vmatmul.mubr.f32.gmra.mxu0 %v6156
      %v6695 = vpop.f32.mrf.mxu0
      %v6696 = vadd.f32 %v6018, %v6695
      %v6697 = vpop.f32.mrf.mxu0
      %6698 = vmatprep.mubr.f32.mxu0 0.0
      %6699 = vmatmul.mubr.f32.gmra.mxu0 %v6159
      %v6700 = vpop.f32.mrf.mxu0
      %v6701 = vadd.f32 %v6018, %v6700
      %v6702 = vpop.f32.mrf.mxu0
      %6703 = vmatprep.mubr.f32.mxu0 0.0
      %6704 = vmatmul.mubr.f32.gmra.mxu0 %v6162
      %v6705 = vpop.f32.mrf.mxu0
      %v6706 = vadd.f32 %v6018, %v6705
      %v6707 = vpop.f32.mrf.mxu0
      %6708 = vmatprep.mubr.f32.mxu0 0.0
      %6709 = vmatmul.mubr.f32.gmra.mxu0 %v6165
      %v6710 = vpop.f32.mrf.mxu0
      %v6711 = vadd.f32 %v6018, %v6710
      %v6712 = vpop.f32.mrf.mxu0
      %6713 = vmatprep.mubr.f32.mxu0 0.0
      %6714 = vmatmul.mubr.f32.gmra.mxu0 %v6168
      %v6715 = vpop.f32.mrf.mxu0
      %v6716 = vadd.f32 %v6018, %v6715
      %v6717 = vpop.f32.mrf.mxu0
      %6718 = vmatprep.mubr.f32.mxu0 0.0
      %6719 = vmatmul.mubr.f32.gmra.mxu0 %v6171
      %v6720 = vpop.f32.mrf.mxu0
      %v6721 = vadd.f32 %v6018, %v6720
      %v6722 = vpop.f32.mrf.mxu0
      %6723 = vmatprep.mubr.f32.mxu0 0.0
      %6724 = vmatmul.mubr.f32.gmra.mxu0 %v6174
      %v6725 = vpop.f32.mrf.mxu0
      %v6726 = vadd.f32 %v6018, %v6725
      %v6727 = vpop.f32.mrf.mxu0
      %6728 = vmatprep.mubr.f32.mxu0 0.0
      %6729 = vmatmul.mubr.f32.gmra.mxu0 %v6177
      %v6730 = vpop.f32.mrf.mxu0
      %v6731 = vadd.f32 %v6018, %v6730
      %v6732 = vpop.f32.mrf.mxu0
      %6733 = vmatprep.mubr.f32.mxu0 0.0
      %6734 = vmatmul.mubr.f32.gmra.mxu0 %v6180
      %v6735 = vpop.f32.mrf.mxu0
      %v6736 = vadd.f32 %v6018, %v6735
      %v6737 = vpop.f32.mrf.mxu0
      %6738 = vmatprep.mubr.f32.mxu0 0.0
      %6739 = vmatmul.mubr.f32.gmra.mxu0 %v6183
      %v6740 = vpop.f32.mrf.mxu0
      %v6741 = vadd.f32 %v6018, %v6740
      %v6742 = vpop.f32.mrf.mxu0
      %6743 = vmatprep.mubr.f32.mxu0 0.0
      %6744 = vmatmul.mubr.f32.gmra.mxu0 %v6186
      %v6745 = vpop.f32.mrf.mxu0
      %v6746 = vadd.f32 %v6018, %v6745
      %v6747 = vpop.f32.mrf.mxu0
      %6748 = vmatprep.mubr.f32.mxu0 0.0
      %6749 = vmatmul.mubr.f32.gmra.mxu0 %v6189
      %v6750 = vpop.f32.mrf.mxu0
      %v6751 = vadd.f32 %v6018, %v6750
      %v6752 = vpop.f32.mrf.mxu0
      %6753 = vmatprep.mubr.f32.mxu0 0.0
      %6754 = vmatmul.mubr.f32.gmra.mxu0 %v6192
      %v6755 = vpop.f32.mrf.mxu0
      %v6756 = vadd.f32 %v6018, %v6755
      %v6757 = vpop.f32.mrf.mxu0
      %6758 = vmatprep.mubr.f32.mxu0 0.0
      %6759 = vmatmul.mubr.f32.gmra.mxu0 %v6195
      %v6760 = vpop.f32.mrf.mxu0
      %v6761 = vadd.f32 %v6018, %v6760
      %v6762 = vpop.f32.mrf.mxu0
      %6763 = vmatprep.mubr.f32.mxu0 0.0
      %6764 = vmatmul.mubr.f32.gmra.mxu0 %v6198
      %v6765 = vpop.f32.mrf.mxu0
      %v6766 = vadd.f32 %v6018, %v6765
      %v6767 = vpop.f32.mrf.mxu0
      %6768 = vmatprep.mubr.f32.mxu0 0.0
      %6769 = vmatmul.mubr.f32.gmra.mxu0 %v6201
      %v6770 = vpop.f32.mrf.mxu0
      %v6771 = vadd.f32 %v6018, %v6770
      %v6772 = vpop.f32.mrf.mxu0
      %6773 = vmatprep.mubr.f32.mxu0 0.0
      %6774 = vmatmul.mubr.f32.gmra.mxu0 %v6204
      %v6775 = vpop.f32.mrf.mxu0
      %v6776 = vadd.f32 %v6018, %v6775
      %v6777 = vpop.f32.mrf.mxu0
      %6778 = vmatprep.mubr.f32.mxu0 0.0
      %6779 = vmatmul.mubr.f32.gmra.mxu0 %v6207
      %v6780 = vpop.f32.mrf.mxu0
      %v6781 = vadd.f32 %v6018, %v6780
      %v6782 = vpop.f32.mrf.mxu0
      %6783 = vmatprep.mubr.f32.mxu0 0.0
      %6784 = vmatmul.mubr.f32.gmra.mxu0 %v6210
      %v6785 = vpop.f32.mrf.mxu0
      %v6786 = vadd.f32 %v6018, %v6785
      %v6787 = vpop.f32.mrf.mxu0
      %6788 = vmatprep.mubr.f32.mxu0 0.0
      %6789 = vmatmul.mubr.f32.gmra.mxu0 %v6213
      %v6790 = vpop.f32.mrf.mxu0
      %v6791 = vadd.f32 %v6018, %v6790
      %v6792 = vpop.f32.mrf.mxu0
      %6793 = vmatprep.mubr.f32.mxu0 0.0
      %6794 = vmatmul.mubr.f32.gmra.mxu0 %v6216
      %v6795 = vpop.f32.mrf.mxu0
      %v6796 = vadd.f32 %v6018, %v6795
      %v6797 = vpop.f32.mrf.mxu0
      %6798 = vmatprep.mubr.f32.mxu0 0.0
      %6799 = vmatmul.mubr.f32.gmra.mxu0 %v6219
      %v6800 = vpop.f32.mrf.mxu0
      %v6801 = vadd.f32 %v6018, %v6800
      %v6802 = vpop.f32.mrf.mxu0
      %6803 = vmatprep.mubr.f32.mxu0 0.0
      %6804 = vmatmul.mubr.f32.gmra.mxu0 %v6222
      %v6805 = vpop.f32.mrf.mxu0
      %v6806 = vadd.f32 %v6018, %v6805
      %v6807 = vpop.f32.mrf.mxu0
      %6808 = vmatprep.mubr.f32.mxu0 0.0
      %6809 = vmatmul.mubr.f32.gmra.mxu0 %v6225
      %v6810 = vpop.f32.mrf.mxu0
      %v6811 = vadd.f32 %v6018, %v6810
      %v6812 = vpop.f32.mrf.mxu0
      %6813 = vmatprep.mubr.f32.mxu0 0.0
      %6814 = vmatmul.mubr.f32.gmra.mxu0 %v6228
      %v6815 = vpop.f32.mrf.mxu0
      %v6816 = vadd.f32 %v6018, %v6815
      %v6817 = vpop.f32.mrf.mxu0
      %6818 = vmatprep.mubr.f32.mxu0 0.0
      %6819 = vmatmul.mubr.f32.gmra.mxu0 %v6231
      %v6820 = vpop.f32.mrf.mxu0
      %v6821 = vadd.f32 %v6018, %v6820
      %v6822 = vpop.f32.mrf.mxu0
      %6823 = vmatprep.mubr.f32.mxu0 0.0
      %6824 = vmatmul.mubr.f32.gmra.mxu0 %v6234
      %v6825 = vpop.f32.mrf.mxu0
      %v6826 = vadd.f32 %v6018, %v6825
      %v6827 = vpop.f32.mrf.mxu0
      %6828 = vmatprep.mubr.f32.mxu0 0.0
      %6829 = vmatmul.mubr.f32.gmra.mxu0 %v6237
      %v6830 = vpop.f32.mrf.mxu0
      %v6831 = vadd.f32 %v6018, %v6830
      %v6832 = vpop.f32.mrf.mxu0
      %6833 = vmatprep.mubr.f32.mxu0 0.0
      %6834 = vmatmul.mubr.f32.gmra.mxu0 %v6240
      %v6835 = vpop.f32.mrf.mxu0
      %v6836 = vadd.f32 %v6018, %v6835
      %v6837 = vpop.f32.mrf.mxu0
      %6838 = vmatprep.mubr.f32.mxu0 0.0
      %6839 = vmatmul.mubr.f32.gmra.mxu0 %v6243
      %v6840 = vpop.f32.mrf.mxu0
      %v6841 = vadd.f32 %v6018, %v6840
      %v6842 = vpop.f32.mrf.mxu0
      %6843 = vmatprep.mubr.f32.mxu0 0.0
      %6844 = vmatmul.mubr.f32.gmra.mxu0 %v6246
      %v6845 = vpop.f32.mrf.mxu0
      %v6846 = vadd.f32 %v6018, %v6845
      %v6847 = vpop.f32.mrf.mxu0
      %6848 = vmatprep.mubr.f32.mxu0 0.0
      %6849 = vmatmul.mubr.f32.gmra.mxu0 %v6249
      %v6850 = vpop.f32.mrf.mxu0
      %v6851 = vadd.f32 %v6018, %v6850
      %v6852 = vpop.f32.mrf.mxu0
      %6853 = vmatprep.mubr.f32.mxu0 0.0
      %6854 = vmatmul.mubr.f32.gmra.mxu0 %v6252
      %v6855 = vpop.f32.mrf.mxu0
      %v6856 = vadd.f32 %v6018, %v6855
      %v6857 = vpop.f32.mrf.mxu0
      %6858 = vmatprep.mubr.f32.mxu0 0.0
      %6859 = vmatmul.mubr.f32.gmra.mxu0 %v6255
      %v6860 = vpop.f32.mrf.mxu0
      %v6861 = vadd.f32 %v6018, %v6860
      %v6862 = vpop.f32.mrf.mxu0
      %6863 = vmatprep.mubr.f32.mxu0 0.0
      %6864 = vmatmul.mubr.f32.gmra.mxu0 %v6258
      %v6865 = vpop.f32.mrf.mxu0
      %v6866 = vadd.f32 %v6018, %v6865
      %v6867 = vpop.f32.mrf.mxu0
      %6868 = vmatprep.mubr.f32.mxu0 0.0
      %6869 = vmatmul.mubr.f32.gmra.mxu0 %v6261
      %v6870 = vpop.f32.mrf.mxu0
      %v6871 = vadd.f32 %v6018, %v6870
      %v6872 = vpop.f32.mrf.mxu0
      %6873 = vmatprep.mubr.f32.mxu0 0.0
      %6874 = vmatmul.mubr.f32.gmra.mxu0 %v6264
      %v6875 = vpop.f32.mrf.mxu0
      %v6876 = vadd.f32 %v6018, %v6875
      %v6877 = vpop.f32.mrf.mxu0
      %6878 = vmatprep.mubr.f32.mxu0 0.0
      %6879 = vmatmul.mubr.f32.gmra.mxu0 %v6267
      %v6880 = vpop.f32.mrf.mxu0
      %v6881 = vadd.f32 %v6018, %v6880
      %v6882 = vpop.f32.mrf.mxu0
      %6883 = vmatprep.mubr.f32.mxu0 0.0
      %6884 = vmatmul.mubr.f32.gmra.mxu0 %v6270
      %v6885 = vpop.f32.mrf.mxu0
      %v6886 = vadd.f32 %v6018, %v6885
      %v6887 = vpop.f32.mrf.mxu0
      %6888 = vmatprep.mubr.f32.mxu0 0.0
      %6889 = vmatmul.mubr.f32.gmra.mxu0 %v6273
      %v6890 = vpop.f32.mrf.mxu0
      %v6891 = vadd.f32 %v6018, %v6890
      %v6892 = vpop.f32.mrf.mxu0
      %6893 = vmatprep.mubr.f32.mxu0 0.0
      %6894 = vmatmul.mubr.f32.gmra.mxu0 %v6276
      %v6895 = vpop.f32.mrf.mxu0
      %v6896 = vadd.f32 %v6018, %v6895
      %v6897 = vpop.f32.mrf.mxu0
      %6898 = vmatprep.mubr.f32.mxu0 0.0
      %6899 = vmatmul.mubr.f32.gmra.mxu0 %v6279
      %v6900 = vpop.f32.mrf.mxu0
      %v6901 = vadd.f32 %v6018, %v6900
      %v6902 = vpop.f32.mrf.mxu0
      %6903 = vmatprep.mubr.f32.mxu0 0.0
      %6904 = vmatmul.mubr.f32.gmra.mxu0 %v6282
      %v6905 = vpop.f32.mrf.mxu0
      %v6906 = vadd.f32 %v6018, %v6905
      %v6907 = vpop.f32.mrf.mxu0
      %6908 = vmatprep.mubr.f32.mxu0 0.0
      %6909 = vmatmul.mubr.f32.gmra.mxu0 %v6285
      %v6910 = vpop.f32.mrf.mxu0
      %v6911 = vadd.f32 %v6018, %v6910
      %v6912 = vpop.f32.mrf.mxu0
      %6913 = vmatprep.mubr.f32.mxu0 0.0
      %6914 = vmatmul.mubr.f32.gmra.mxu0 %v6288
      %v6915 = vpop.f32.mrf.mxu0
      %v6916 = vadd.f32 %v6018, %v6915
      %v6917 = vpop.f32.mrf.mxu0
      %6918 = vmatprep.mubr.f32.mxu0 0.0
      %6919 = vmatmul.mubr.f32.gmra.mxu0 %v6291
      %v6920 = vpop.f32.mrf.mxu0
      %v6921 = vadd.f32 %v6018, %v6920
      %v6922 = vpop.f32.mrf.mxu0
      %6923 = vmatprep.mubr.f32.mxu0 0.0
      %6924 = vmatmul.mubr.f32.gmra.mxu0 %v6294
      %v6925 = vpop.f32.mrf.mxu0
      %v6926 = vadd.f32 %v6018, %v6925
      %v6927 = vpop.f32.mrf.mxu0
      %6928 = vmatprep.mubr.f32.mxu0 0.0
      %6929 = vmatmul.mubr.f32.gmra.mxu0 %v6297
      %v6930 = vpop.f32.mrf.mxu0
      %v6931 = vadd.f32 %v6018, %v6930
      %v6932 = vpop.f32.mrf.mxu0
      %6933 = vmatprep.mubr.f32.mxu0 0.0
      %6934 = vmatmul.mubr.f32.gmra.mxu0 %v6300
      %v6935 = vpop.f32.mrf.mxu0
      %v6936 = vadd.f32 %v6018, %v6935
      %v6937 = vpop.f32.mrf.mxu0
      %6938 = vmatprep.mubr.f32.mxu0 0.0
      %6939 = vmatmul.mubr.f32.gmra.mxu0 %v6303
      %v6940 = vpop.f32.mrf.mxu0
      %v6941 = vadd.f32 %v6018, %v6940
      %v6942 = vpop.f32.mrf.mxu0
      %6943 = vmatprep.mubr.f32.mxu0 0.0
      %6944 = vmatmul.mubr.f32.gmra.mxu0 %v6306
      %v6945 = vpop.f32.mrf.mxu0
      %v6946 = vadd.f32 %v6018, %v6945
      %v6947 = vpop.f32.mrf.mxu0
      %6948 = vmatprep.mubr.f32.mxu0 0.0
      %6949 = vmatmul.mubr.f32.gmra.mxu0 %v6309
      %v6950 = vpop.f32.mrf.mxu0
      %v6951 = vadd.f32 %v6018, %v6950
      %v6952 = vpop.f32.mrf.mxu0
      %6953 = vmatprep.mubr.f32.mxu0 0.0
      %6954 = vmatmul.mubr.f32.gmra.mxu0 %v6312
      %v6955 = vpop.f32.mrf.mxu0
      %v6956 = vadd.f32 %v6018, %v6955
      %v6957 = vpop.f32.mrf.mxu0
      %6958 = vmatprep.mubr.f32.mxu0 0.0
      %6959 = vmatmul.mubr.f32.gmra.mxu0 %v6315
      %v6960 = vpop.f32.mrf.mxu0
      %v6961 = vadd.f32 %v6018, %v6960
      %v6962 = vpop.f32.mrf.mxu0
      %6963 = vmatprep.mubr.f32.mxu0 0.0
      %6964 = vmatmul.mubr.f32.gmra.mxu0 %v6318
      %v6965 = vpop.f32.mrf.mxu0
      %v6966 = vadd.f32 %v6018, %v6965
      %v6967 = vpop.f32.mrf.mxu0
      %6968 = vmatprep.mubr.f32.mxu0 0.0
      %6969 = vmatmul.mubr.f32.gmra.mxu0 %v6321
      %v6970 = vpop.f32.mrf.mxu0
      %v6971 = vadd.f32 %v6018, %v6970
      %v6972 = vpop.f32.mrf.mxu0
      %6973 = vmatprep.mubr.f32.mxu0 0.0
      %6974 = vmatmul.mubr.f32.gmra.mxu0 %v6324
      %v6975 = vpop.f32.mrf.mxu0
      %v6976 = vadd.f32 %v6018, %v6975
      %v6977 = vpop.f32.mrf.mxu0
      %6978 = vmatprep.mubr.f32.mxu0 0.0
      %6979 = vmatmul.mubr.f32.gmra.mxu0 %v6327
      %v6980 = vpop.f32.mrf.mxu0
      %v6981 = vadd.f32 %v6018, %v6980
      %v6982 = vpop.f32.mrf.mxu0
      %6983 = vmatprep.mubr.f32.mxu0 0.0
      %6984 = vmatmul.mubr.f32.gmra.mxu0 %v6330
      %v6985 = vpop.f32.mrf.mxu0
      %v6986 = vadd.f32 %v6018, %v6985
      %v6987 = vpop.f32.mrf.mxu0
      %6988 = vmatprep.mubr.f32.mxu0 0.0
      %6989 = vmatmul.mubr.f32.gmra.mxu0 %v6333
      %v6990 = vpop.f32.mrf.mxu0
      %v6991 = vadd.f32 %v6018, %v6990
      %v6992 = vpop.f32.mrf.mxu0
      %6993 = vmatprep.mubr.f32.mxu0 0.0
      %6994 = vmatmul.mubr.f32.gmra.mxu0 %v6336
      %v6995 = vpop.f32.mrf.mxu0
      %v6996 = vadd.f32 %v6018, %v6995
      %v6997 = vpop.f32.mrf.mxu0
      %6998 = vmatprep.mubr.f32.mxu0 0.0
      %6999 = vmatmul.mubr.f32.gmra.mxu0 %v6339
      %v7000 = vpop.f32.mrf.mxu0
      %v7001 = vadd.f32 %v6018, %v7000
      %v7002 = vpop.f32.mrf.mxu0
      %7003 = vmatprep.mubr.f32.mxu0 0.0
      %7004 = vmatmul.mubr.f32.gmra.mxu0 %v6342
      %v7005 = vpop.f32.mrf.mxu0
      %v7006 = vadd.f32 %v6018, %v7005
      %v7007 = vpop.f32.mrf.mxu0
      %7008 = vmatprep.mubr.f32.mxu0 0.0
      %7009 = vmatmul.mubr.f32.gmra.mxu0 %v6345
      %v7010 = vpop.f32.mrf.mxu0
      %v7011 = vadd.f32 %v6018, %v7010
      %v7012 = vpop.f32.mrf.mxu0
      %7013 = vmatprep.mubr.f32.mxu0 0.0
      %7014 = vmatmul.mubr.f32.gmra.mxu0 %v6348
      %v7015 = vpop.f32.mrf.mxu0
      %v7016 = vadd.f32 %v6018, %v7015
      %v7017 = vpop.f32.mrf.mxu0
      %7018 = vmatprep.mubr.f32.mxu0 0.0
      %7019 = vmatmul.mubr.f32.gmra.mxu0 %v6351
      %v7020 = vpop.f32.mrf.mxu0
      %v7021 = vadd.f32 %v6018, %v7020
      %v7022 = vpop.f32.mrf.mxu0
      %7023 = vmatprep.mubr.f32.mxu0 0.0
      %7024 = vmatmul.mubr.f32.gmra.mxu0 %v6354
      %v7025 = vpop.f32.mrf.mxu0
      %v7026 = vadd.f32 %v6018, %v7025
      %v7027 = vpop.f32.mrf.mxu0
      %7028 = vmatprep.mubr.f32.mxu0 0.0
      %7029 = vmatmul.mubr.f32.gmra.mxu0 %v6357
      %v7030 = vpop.f32.mrf.mxu0
      %v7031 = vadd.f32 %v6018, %v7030
      %v7032 = vpop.f32.mrf.mxu0
      %7033 = vmatprep.mubr.f32.mxu0 0.0
      %7034 = vmatmul.mubr.f32.gmra.mxu0 %v6360
      %v7035 = vpop.f32.mrf.mxu0
      %v7036 = vadd.f32 %v6018, %v7035
      %v7037 = vpop.f32.mrf.mxu0
      %7038 = vmatprep.mubr.f32.mxu0 0.0
      %7039 = vmatmul.mubr.f32.gmra.mxu0 %v6363
      %v7040 = vpop.f32.mrf.mxu0
      %v7041 = vadd.f32 %v6018, %v7040
      %v7042 = vpop.f32.mrf.mxu0
      %7043 = vmatprep.mubr.f32.mxu0 0.0
      %7044 = vmatmul.mubr.f32.gmra.mxu0 %v6366
      %v7045 = vpop.f32.mrf.mxu0
      %v7046 = vadd.f32 %v6018, %v7045
      %v7047 = vpop.f32.mrf.mxu0
      %7048 = vmatprep.mubr.f32.mxu0 0.0
      %7049 = vmatmul.mubr.f32.gmra.mxu0 %v6369
      %v7050 = vpop.f32.mrf.mxu0
      %v7051 = vadd.f32 %v6018, %v7050
      %v7052 = vpop.f32.mrf.mxu0
      %7053 = vmatprep.mubr.f32.mxu0 0.0
      %7054 = vmatmul.mubr.f32.gmra.mxu0 %v6372
      %v7055 = vpop.f32.mrf.mxu0
      %v7056 = vadd.f32 %v6018, %v7055
      %v7057 = vpop.f32.mrf.mxu0
      %7058 = vmatprep.mubr.f32.mxu0 0.0
      %7059 = vmatmul.mubr.f32.gmra.mxu0 %v6375
      %v7060 = vpop.f32.mrf.mxu0
      %v7061 = vadd.f32 %v6018, %v7060
      %v7062 = vpop.f32.mrf.mxu0
      %7063 = vmatprep.mubr.f32.mxu0 0.0
      %7064 = vmatmul.mubr.f32.gmra.mxu0 %v6378
      %v7065 = vpop.f32.mrf.mxu0
      %v7066 = vadd.f32 %v6018, %v7065
      %v7067 = vpop.f32.mrf.mxu0
      %7068 = vmatprep.mubr.f32.mxu0 0.0
      %7069 = vmatmul.mubr.f32.gmra.mxu0 %v6381
      %v7070 = vpop.f32.mrf.mxu0
      %v7071 = vadd.f32 %v6018, %v7070
      %v7072 = vpop.f32.mrf.mxu0
      %7073 = vmatprep.mubr.f32.mxu0 0.0
      %7074 = vmatmul.mubr.f32.gmra.mxu0 %v6384
      %v7075 = vpop.f32.mrf.mxu0
      %v7076 = vadd.f32 %v6018, %v7075
      %v7077 = vpop.f32.mrf.mxu0
      %7078 = vmatprep.mubr.f32.mxu0 0.0
      %7079 = vmatmul.mubr.f32.gmra.mxu0 %v6387
      %v7080 = vpop.f32.mrf.mxu0
      %v7081 = vadd.f32 %v6018, %v7080
      %v7082 = vpop.f32.mrf.mxu0
      %7083 = vmatprep.mubr.f32.mxu0 0.0
      %7084 = vmatmul.mubr.f32.gmra.mxu0 %v6390
      %v7085 = vpop.f32.mrf.mxu0
      %v7086 = vadd.f32 %v6018, %v7085
      %v7087 = vpop.f32.mrf.mxu0
      %7088 = vmatprep.mubr.f32.mxu0 0.0
      %7089 = vmatmul.mubr.f32.gmra.mxu0 %v6393
      %v7090 = vpop.f32.mrf.mxu0
      %v7091 = vadd.f32 %v6018, %v7090
      %v7092 = vpop.f32.mrf.mxu0
      %7093 = vmatprep.mubr.f32.mxu0 0.0
      %7094 = vmatmul.mubr.f32.gmra.mxu0 %v6396
      %v7095 = vpop.f32.mrf.mxu0
      %v7096 = vadd.f32 %v6018, %v7095
      %v7097 = vpop.f32.mrf.mxu0
      %7098 = vmatprep.mubr.f32.mxu0 0.0
      %7099 = vmatmul.mubr.f32.gmra.mxu0 %v6399
      %v7100 = vpop.f32.mrf.mxu0
      %v7101 = vadd.f32 %v6018, %v7100
      %v7102 = vpop.f32.mrf.mxu0
      %7103 = vmatprep.mubr.f32.mxu0 0.0
      %7104 = vmatmul.mubr.f32.gmra.mxu0 %v6402
      %v7105 = vpop.f32.mrf.mxu0
      %v7106 = vadd.f32 %v6018, %v7105
      %v7107 = vpop.f32.mrf.mxu0
      %7108 = vdwg.mxu0
      %v7109 = vadd.f32 %v407, %v6471
      %v7110 = vadd.f32 %v408, %v6476
      %v7111 = vadd.f32 %v409, %v6481
      %v7112 = vadd.f32 %v410, %v6486
      %v7113 = vadd.f32 %v411, %v6491
      %v7114 = vadd.f32 %v412, %v6496
      %v7115 = vadd.f32 %v413, %v6501
      %v7116 = vadd.f32 %v414, %v6506
      %v7117 = vadd.f32 %v415, %v6511
      %v7118 = vadd.f32 %v416, %v6516
      %v7119 = vadd.f32 %v417, %v6521
      %v7120 = vadd.f32 %v418, %v6526
      %v7121 = vadd.f32 %v419, %v6531
      %v7122 = vadd.f32 %v420, %v6536
      %v7123 = vadd.f32 %v421, %v6541
      %v7124 = vadd.f32 %v422, %v6546
      %v7125 = vadd.f32 %v423, %v6551
      %v7126 = vadd.f32 %v424, %v6556
      %v7127 = vadd.f32 %v425, %v6561
      %v7128 = vadd.f32 %v426, %v6566
      %v7129 = vadd.f32 %v427, %v6571
      %v7130 = vadd.f32 %v428, %v6576
      %v7131 = vadd.f32 %v429, %v6581
      %v7132 = vadd.f32 %v430, %v6586
      %v7133 = vadd.f32 %v431, %v6591
      %v7134 = vadd.f32 %v432, %v6596
      %v7135 = vadd.f32 %v433, %v6601
      %v7136 = vadd.f32 %v434, %v6606
      %v7137 = vadd.f32 %v435, %v6611
      %v7138 = vadd.f32 %v436, %v6616
      %v7139 = vadd.f32 %v437, %v6621
      %v7140 = vadd.f32 %v438, %v6626
      %v7141 = vadd.f32 %v439, %v6631
      %v7142 = vadd.f32 %v440, %v6636
      %v7143 = vadd.f32 %v441, %v6641
      %v7144 = vadd.f32 %v442, %v6646
      %v7145 = vadd.f32 %v443, %v6651
      %v7146 = vadd.f32 %v444, %v6656
      %v7147 = vadd.f32 %v445, %v6661
      %v7148 = vadd.f32 %v446, %v6666
      %v7149 = vadd.f32 %v447, %v6671
      %v7150 = vadd.f32 %v448, %v6676
      %v7151 = vadd.f32 %v449, %v6681
      %v7152 = vadd.f32 %v450, %v6686
      %v7153 = vadd.f32 %v451, %v6691
      %v7154 = vadd.f32 %v452, %v6696
      %v7155 = vadd.f32 %v453, %v6701
      %v7156 = vadd.f32 %v454, %v6706
      %v7157 = vadd.f32 %v455, %v6711
      %v7158 = vadd.f32 %v456, %v6716
      %v7159 = vadd.f32 %v457, %v6721
      %v7160 = vadd.f32 %v458, %v6726
      %v7161 = vadd.f32 %v459, %v6731
      %v7162 = vadd.f32 %v460, %v6736
      %v7163 = vadd.f32 %v461, %v6741
      %v7164 = vadd.f32 %v462, %v6746
      %v7165 = vadd.f32 %v463, %v6751
      %v7166 = vadd.f32 %v464, %v6756
      %v7167 = vadd.f32 %v465, %v6761
      %v7168 = vadd.f32 %v466, %v6766
      %v7169 = vadd.f32 %v467, %v6771
      %v7170 = vadd.f32 %v468, %v6776
      %v7171 = vadd.f32 %v469, %v6781
      %v7172 = vadd.f32 %v470, %v6786
      %v7173 = vadd.f32 %v471, %v6791
      %v7174 = vadd.f32 %v472, %v6796
      %v7175 = vadd.f32 %v473, %v6801
      %v7176 = vadd.f32 %v474, %v6806
      %v7177 = vadd.f32 %v475, %v6811
      %v7178 = vadd.f32 %v476, %v6816
      %v7179 = vadd.f32 %v477, %v6821
      %v7180 = vadd.f32 %v478, %v6826
      %v7181 = vadd.f32 %v479, %v6831
      %v7182 = vadd.f32 %v480, %v6836
      %v7183 = vadd.f32 %v481, %v6841
      %v7184 = vadd.f32 %v482, %v6846
      %v7185 = vadd.f32 %v483, %v6851
      %v7186 = vadd.f32 %v484, %v6856
      %v7187 = vadd.f32 %v485, %v6861
      %v7188 = vadd.f32 %v486, %v6866
      %v7189 = vadd.f32 %v487, %v6871
      %v7190 = vadd.f32 %v488, %v6876
      %v7191 = vadd.f32 %v489, %v6881
      %v7192 = vadd.f32 %v490, %v6886
      %v7193 = vadd.f32 %v491, %v6891
      %v7194 = vadd.f32 %v492, %v6896
      %v7195 = vadd.f32 %v493, %v6901
      %v7196 = vadd.f32 %v494, %v6906
      %v7197 = vadd.f32 %v495, %v6911
      %v7198 = vadd.f32 %v496, %v6916
      %v7199 = vadd.f32 %v497, %v6921
      %v7200 = vadd.f32 %v498, %v6926
      %v7201 = vadd.f32 %v499, %v6931
      %v7202 = vadd.f32 %v500, %v6936
      %v7203 = vadd.f32 %v501, %v6941
      %v7204 = vadd.f32 %v502, %v6946
      %v7205 = vadd.f32 %v503, %v6951
      %v7206 = vadd.f32 %v504, %v6956
      %v7207 = vadd.f32 %v505, %v6961
      %v7208 = vadd.f32 %v506, %v6966
      %v7209 = vadd.f32 %v507, %v6971
      %v7210 = vadd.f32 %v508, %v6976
      %v7211 = vadd.f32 %v509, %v6981
      %v7212 = vadd.f32 %v510, %v6986
      %v7213 = vadd.f32 %v511, %v6991
      %v7214 = vadd.f32 %v512, %v6996
      %v7215 = vadd.f32 %v513, %v7001
      %v7216 = vadd.f32 %v514, %v7006
      %v7217 = vadd.f32 %v515, %v7011
      %v7218 = vadd.f32 %v516, %v7016
      %v7219 = vadd.f32 %v517, %v7021
      %v7220 = vadd.f32 %v518, %v7026
      %v7221 = vadd.f32 %v519, %v7031
      %v7222 = vadd.f32 %v520, %v7036
      %v7223 = vadd.f32 %v521, %v7041
      %v7224 = vadd.f32 %v522, %v7046
      %v7225 = vadd.f32 %v523, %v7051
      %v7226 = vadd.f32 %v524, %v7056
      %v7227 = vadd.f32 %v525, %v7061
      %v7228 = vadd.f32 %v526, %v7066
      %v7229 = vadd.f32 %v527, %v7071
      %v7230 = vadd.f32 %v528, %v7076
      %v7231 = vadd.f32 %v529, %v7081
      %v7232 = vadd.f32 %v530, %v7086
      %v7233 = vadd.f32 %v531, %v7091
      %v7234 = vadd.f32 %v532, %v7096
      %v7235 = vadd.f32 %v533, %v7101
      %v7236 = vadd.f32 %v534, %v7106
      %7237 = vst.msk [vmem:[%s405] sm:$0xff] %vm2664, %v7109
      %7238 = vst.msk [vmem:[%s405 + $0x8] sm:$0xff] %vm2664, %v7110
      %7239 = vst.msk [vmem:[%s405 + $0x10] sm:$0xff] %vm2664, %v7111
      %7240 = vst.msk [vmem:[%s405 + $0x18] sm:$0xff] %vm2664, %v7112
      %7241 = vst.msk [vmem:[%s405 + $0x20] sm:$0xff] %vm2664, %v7113
      %7242 = vst.msk [vmem:[%s405 + $0x28] sm:$0xff] %vm2664, %v7114
      %7243 = vst.msk [vmem:[%s405 + $0x30] sm:$0xff] %vm2664, %v7115
      %7244 = vst.msk [vmem:[%s405 + $0x38] sm:$0xff] %vm2664, %v7116
      %7245 = vst.msk [vmem:[%s405 + $0x40] sm:$0xff] %vm2664, %v7117
      %7246 = vst.msk [vmem:[%s405 + $0x48] sm:$0xff] %vm2664, %v7118
      %7247 = vst.msk [vmem:[%s405 + $0x50] sm:$0xff] %vm2664, %v7119
      %7248 = vst.msk [vmem:[%s405 + $0x58] sm:$0xff] %vm2664, %v7120
      %7249 = vst.msk [vmem:[%s405 + $0x60] sm:$0xff] %vm2664, %v7121
      %7250 = vst.msk [vmem:[%s405 + $0x68] sm:$0xff] %vm2664, %v7122
      %7251 = vst.msk [vmem:[%s405 + $0x70] sm:$0xff] %vm2664, %v7123
      %7252 = vst.msk [vmem:[%s405 + $0x78] sm:$0xff] %vm2664, %v7124
      %7253 = vst.msk [vmem:[%s405 + $0x80] sm:$0xff] %vm2664, %v7125
      %7254 = vst.msk [vmem:[%s405 + $0x88] sm:$0xff] %vm2664, %v7126
      %7255 = vst.msk [vmem:[%s405 + $0x90] sm:$0xff] %vm2664, %v7127
      %7256 = vst.msk [vmem:[%s405 + $0x98] sm:$0xff] %vm2664, %v7128
      %7257 = vst.msk [vmem:[%s405 + $0xa0] sm:$0xff] %vm2664, %v7129
      %7258 = vst.msk [vmem:[%s405 + $0xa8] sm:$0xff] %vm2664, %v7130
      %7259 = vst.msk [vmem:[%s405 + $0xb0] sm:$0xff] %vm2664, %v7131
      %7260 = vst.msk [vmem:[%s405 + $0xb8] sm:$0xff] %vm2664, %v7132
      %7261 = vst.msk [vmem:[%s405 + $0xc0] sm:$0xff] %vm2664, %v7133
      %7262 = vst.msk [vmem:[%s405 + $0xc8] sm:$0xff] %vm2664, %v7134
      %7263 = vst.msk [vmem:[%s405 + $0xd0] sm:$0xff] %vm2664, %v7135
      %7264 = vst.msk [vmem:[%s405 + $0xd8] sm:$0xff] %vm2664, %v7136
      %7265 = vst.msk [vmem:[%s405 + $0xe0] sm:$0xff] %vm2664, %v7137
      %7266 = vst.msk [vmem:[%s405 + $0xe8] sm:$0xff] %vm2664, %v7138
      %7267 = vst.msk [vmem:[%s405 + $0xf0] sm:$0xff] %vm2664, %v7139
      %7268 = vst.msk [vmem:[%s405 + $0xf8] sm:$0xff] %vm2664, %v7140
      %7269 = vst.msk [vmem:[%s405 + $0x100] sm:$0xff] %vm2664, %v7141
      %7270 = vst.msk [vmem:[%s405 + $0x108] sm:$0xff] %vm2664, %v7142
      %7271 = vst.msk [vmem:[%s405 + $0x110] sm:$0xff] %vm2664, %v7143
      %7272 = vst.msk [vmem:[%s405 + $0x118] sm:$0xff] %vm2664, %v7144
      %7273 = vst.msk [vmem:[%s405 + $0x120] sm:$0xff] %vm2664, %v7145
      %7274 = vst.msk [vmem:[%s405 + $0x128] sm:$0xff] %vm2664, %v7146
      %7275 = vst.msk [vmem:[%s405 + $0x130] sm:$0xff] %vm2664, %v7147
      %7276 = vst.msk [vmem:[%s405 + $0x138] sm:$0xff] %vm2664, %v7148
      %7277 = vst.msk [vmem:[%s405 + $0x140] sm:$0xff] %vm2664, %v7149
      %7278 = vst.msk [vmem:[%s405 + $0x148] sm:$0xff] %vm2664, %v7150
      %7279 = vst.msk [vmem:[%s405 + $0x150] sm:$0xff] %vm2664, %v7151
      %7280 = vst.msk [vmem:[%s405 + $0x158] sm:$0xff] %vm2664, %v7152
      %7281 = vst.msk [vmem:[%s405 + $0x160] sm:$0xff] %vm2664, %v7153
      %7282 = vst.msk [vmem:[%s405 + $0x168] sm:$0xff] %vm2664, %v7154
      %7283 = vst.msk [vmem:[%s405 + $0x170] sm:$0xff] %vm2664, %v7155
      %7284 = vst.msk [vmem:[%s405 + $0x178] sm:$0xff] %vm2664, %v7156
      %7285 = vst.msk [vmem:[%s405 + $0x180] sm:$0xff] %vm2664, %v7157
      %7286 = vst.msk [vmem:[%s405 + $0x188] sm:$0xff] %vm2664, %v7158
      %7287 = vst.msk [vmem:[%s405 + $0x190] sm:$0xff] %vm2664, %v7159
      %7288 = vst.msk [vmem:[%s405 + $0x198] sm:$0xff] %vm2664, %v7160
      %7289 = vst.msk [vmem:[%s405 + $0x1a0] sm:$0xff] %vm2664, %v7161
      %7290 = vst.msk [vmem:[%s405 + $0x1a8] sm:$0xff] %vm2664, %v7162
      %7291 = vst.msk [vmem:[%s405 + $0x1b0] sm:$0xff] %vm2664, %v7163
      %7292 = vst.msk [vmem:[%s405 + $0x1b8] sm:$0xff] %vm2664, %v7164
      %7293 = vst.msk [vmem:[%s405 + $0x1c0] sm:$0xff] %vm2664, %v7165
      %7294 = vst.msk [vmem:[%s405 + $0x1c8] sm:$0xff] %vm2664, %v7166
      %7295 = vst.msk [vmem:[%s405 + $0x1d0] sm:$0xff] %vm2664, %v7167
      %7296 = vst.msk [vmem:[%s405 + $0x1d8] sm:$0xff] %vm2664, %v7168
      %7297 = vst.msk [vmem:[%s405 + $0x1e0] sm:$0xff] %vm2664, %v7169
      %7298 = vst.msk [vmem:[%s405 + $0x1e8] sm:$0xff] %vm2664, %v7170
      %7299 = vst.msk [vmem:[%s405 + $0x1f0] sm:$0xff] %vm2664, %v7171
      %7300 = vst.msk [vmem:[%s405 + $0x1f8] sm:$0xff] %vm2664, %v7172
      %7301 = vst.msk [vmem:[%s405 + $0x200] sm:$0xff] %vm2664, %v7173
      %7302 = vst.msk [vmem:[%s405 + $0x208] sm:$0xff] %vm2664, %v7174
      %7303 = vst.msk [vmem:[%s405 + $0x210] sm:$0xff] %vm2664, %v7175
      %7304 = vst.msk [vmem:[%s405 + $0x218] sm:$0xff] %vm2664, %v7176
      %7305 = vst.msk [vmem:[%s405 + $0x220] sm:$0xff] %vm2664, %v7177
      %7306 = vst.msk [vmem:[%s405 + $0x228] sm:$0xff] %vm2664, %v7178
      %7307 = vst.msk [vmem:[%s405 + $0x230] sm:$0xff] %vm2664, %v7179
      %7308 = vst.msk [vmem:[%s405 + $0x238] sm:$0xff] %vm2664, %v7180
      %7309 = vst.msk [vmem:[%s405 + $0x240] sm:$0xff] %vm2664, %v7181
      %7310 = vst.msk [vmem:[%s405 + $0x248] sm:$0xff] %vm2664, %v7182
      %7311 = vst.msk [vmem:[%s405 + $0x250] sm:$0xff] %vm2664, %v7183
      %7312 = vst.msk [vmem:[%s405 + $0x258] sm:$0xff] %vm2664, %v7184
      %7313 = vst.msk [vmem:[%s405 + $0x260] sm:$0xff] %vm2664, %v7185
      %7314 = vst.msk [vmem:[%s405 + $0x268] sm:$0xff] %vm2664, %v7186
      %7315 = vst.msk [vmem:[%s405 + $0x270] sm:$0xff] %vm2664, %v7187
      %7316 = vst.msk [vmem:[%s405 + $0x278] sm:$0xff] %vm2664, %v7188
      %7317 = vst.msk [vmem:[%s405 + $0x280] sm:$0xff] %vm2664, %v7189
      %7318 = vst.msk [vmem:[%s405 + $0x288] sm:$0xff] %vm2664, %v7190
      %7319 = vst.msk [vmem:[%s405 + $0x290] sm:$0xff] %vm2664, %v7191
      %7320 = vst.msk [vmem:[%s405 + $0x298] sm:$0xff] %vm2664, %v7192
      %7321 = vst.msk [vmem:[%s405 + $0x2a0] sm:$0xff] %vm2664, %v7193
      %7322 = vst.msk [vmem:[%s405 + $0x2a8] sm:$0xff] %vm2664, %v7194
      %7323 = vst.msk [vmem:[%s405 + $0x2b0] sm:$0xff] %vm2664, %v7195
      %7324 = vst.msk [vmem:[%s405 + $0x2b8] sm:$0xff] %vm2664, %v7196
      %7325 = vst.msk [vmem:[%s405 + $0x2c0] sm:$0xff] %vm2664, %v7197
      %7326 = vst.msk [vmem:[%s405 + $0x2c8] sm:$0xff] %vm2664, %v7198
      %7327 = vst.msk [vmem:[%s405 + $0x2d0] sm:$0xff] %vm2664, %v7199
      %7328 = vst.msk [vmem:[%s405 + $0x2d8] sm:$0xff] %vm2664, %v7200
      %7329 = vst.msk [vmem:[%s405 + $0x2e0] sm:$0xff] %vm2664, %v7201
      %7330 = vst.msk [vmem:[%s405 + $0x2e8] sm:$0xff] %vm2664, %v7202
      %7331 = vst.msk [vmem:[%s405 + $0x2f0] sm:$0xff] %vm2664, %v7203
      %7332 = vst.msk [vmem:[%s405 + $0x2f8] sm:$0xff] %vm2664, %v7204
      %7333 = vst.msk [vmem:[%s405 + $0x300] sm:$0xff] %vm2664, %v7205
      %7334 = vst.msk [vmem:[%s405 + $0x308] sm:$0xff] %vm2664, %v7206
      %7335 = vst.msk [vmem:[%s405 + $0x310] sm:$0xff] %vm2664, %v7207
      %7336 = vst.msk [vmem:[%s405 + $0x318] sm:$0xff] %vm2664, %v7208
      %7337 = vst.msk [vmem:[%s405 + $0x320] sm:$0xff] %vm2664, %v7209
      %7338 = vst.msk [vmem:[%s405 + $0x328] sm:$0xff] %vm2664, %v7210
      %7339 = vst.msk [vmem:[%s405 + $0x330] sm:$0xff] %vm2664, %v7211
      %7340 = vst.msk [vmem:[%s405 + $0x338] sm:$0xff] %vm2664, %v7212
      %7341 = vst.msk [vmem:[%s405 + $0x340] sm:$0xff] %vm2664, %v7213
      %7342 = vst.msk [vmem:[%s405 + $0x348] sm:$0xff] %vm2664, %v7214
      %7343 = vst.msk [vmem:[%s405 + $0x350] sm:$0xff] %vm2664, %v7215
      %7344 = vst.msk [vmem:[%s405 + $0x358] sm:$0xff] %vm2664, %v7216
      %7345 = vst.msk [vmem:[%s405 + $0x360] sm:$0xff] %vm2664, %v7217
      %7346 = vst.msk [vmem:[%s405 + $0x368] sm:$0xff] %vm2664, %v7218
      %7347 = vst.msk [vmem:[%s405 + $0x370] sm:$0xff] %vm2664, %v7219
      %7348 = vst.msk [vmem:[%s405 + $0x378] sm:$0xff] %vm2664, %v7220
      %7349 = vst.msk [vmem:[%s405 + $0x380] sm:$0xff] %vm2664, %v7221
      %7350 = vst.msk [vmem:[%s405 + $0x388] sm:$0xff] %vm2664, %v7222
      %7351 = vst.msk [vmem:[%s405 + $0x390] sm:$0xff] %vm2664, %v7223
      %7352 = vst.msk [vmem:[%s405 + $0x398] sm:$0xff] %vm2664, %v7224
      %7353 = vst.msk [vmem:[%s405 + $0x3a0] sm:$0xff] %vm2664, %v7225
      %7354 = vst.msk [vmem:[%s405 + $0x3a8] sm:$0xff] %vm2664, %v7226
      %7355 = vst.msk [vmem:[%s405 + $0x3b0] sm:$0xff] %vm2664, %v7227
      %7356 = vst.msk [vmem:[%s405 + $0x3b8] sm:$0xff] %vm2664, %v7228
      %7357 = vst.msk [vmem:[%s405 + $0x3c0] sm:$0xff] %vm2664, %v7229
      %7358 = vst.msk [vmem:[%s405 + $0x3c8] sm:$0xff] %vm2664, %v7230
      %7359 = vst.msk [vmem:[%s405 + $0x3d0] sm:$0xff] %vm2664, %v7231
      %7360 = vst.msk [vmem:[%s405 + $0x3d8] sm:$0xff] %vm2664, %v7232
      %7361 = vst.msk [vmem:[%s405 + $0x3e0] sm:$0xff] %vm2664, %v7233
      %7362 = vst.msk [vmem:[%s405 + $0x3e8] sm:$0xff] %vm2664, %v7234
      %7363 = vst.msk [vmem:[%s405 + $0x3f0] sm:$0xff] %vm2664, %v7235
      %7364 = vst.msk [vmem:[%s405 + $0x3f8] sm:$0xff] %vm2664, %v7236
      %s7365 = smul.u32 128, %s21
      %p7366 = scmp.lt.s32.totalorder %s7365, 383
      %s7367 = scalar_select %p7366, %s7365, 383
      %s7368 = smul.addr %s7367, 8
      %s7369 = scalar_lea.vmem %s10, %s7368
      // Predicated region
      $region61: #{tpu_custom_call.1} parent=59 // pred_check
        %p7370 = pneg %p264
      $region62: #{tpu_custom_call.1} parent=59 // pred_check_branch
        %7372 = sbr.rel (%p7370) target = $region64
      $region63: #{tpu_custom_call.1} parent=59 // pred_region
        %s7373 = smul.u32 128, %s21
      $region64: #{tpu_custom_call.1} parent=59 // pred_fallthru
        _
    $region60: #{tpu_custom_call.1} parent=5 // pred_fallthru
      _
    %p7374 = scmp.le.s32.totalorder 2, %s16
    // Predicated region
    $region65: #{tpu_custom_call.1} parent=5 // pred_check
      %p7375 = pneg %p7374
    $region66: #{tpu_custom_call.1} parent=5 // pred_check_branch
      %7377 = sbr.rel (%p7375) target = $region68
    $region67: #{tpu_custom_call.1} parent=5 // pred_region
      %s7378 = ssub.s32 %s16, 2
      // Predicated region
      $region69: #{tpu_custom_call.1} parent=67 // pred_check
        %p7379 = pneg %p270
      $region70: #{tpu_custom_call.1} parent=67 // pred_check_branch
        %7381 = sbr.rel (%p7379) target = $region72
      $region71: #{tpu_custom_call.1} parent=67 // pred_region
        %s7382 = smul.u32 128, %s22
        %p7383 = scmp.lt.s32.totalorder %s7382, 383
        %s7384 = scalar_select %p7383, %s7382, 383
        %s7385 = smul.addr %s7384, 8
        %s7386 = scalar_lea.vmem %s10, %s7385
      $region72: #{tpu_custom_call.1} parent=67 // pred_fallthru
        _
    $region68: #{tpu_custom_call.1} parent=5 // pred_fallthru
      _
  $region6: #{tpu_custom_call.1} parent=0 // loop_footer
    %s20 = sadd.s32 1, %s16
  $region7: #{tpu_custom_call.1} parent=0 // loop_footer_branch
    %15 = sbr.rel target = $region3
  $region8: #{tpu_custom_call.1} parent=0 // loop_exit
    _

</llo_original>
